<compile_context>
chip_gen: v6e
topology: v6e:2x2x1
jax: 0.10.0
libtpu: 0.0.40
codegen_flags: <defaults>
</compile_context>

<pallas_src>
import functools
import math

import jax
import jax.numpy as jnp
from jax.experimental import pallas as pl
from jax.experimental.pallas import tpu as pltpu


# ----------------------------------------------------------------------------
# helpers
# ----------------------------------------------------------------------------
def _full_spec(shape):
    """BlockSpec covering the whole array; block index constant over the grid."""
    zeros = (0,) * len(shape)
    return pl.BlockSpec(tuple(shape), lambda *_: zeros)


def _depth_spec(shape):
    """BlockSpec selecting one depth-slice of a (DEPTH, ...) stacked weight."""
    tail = (0,) * (len(shape) - 1)
    return pl.BlockSpec((1,) + tuple(shape[1:]), lambda d: (d,) + tail)


def _layer_norm(x, gamma, beta, eps=1e-5):
    mu = jnp.mean(x, axis=-1, keepdims=True)
    var = jnp.mean((x - mu) ** 2, axis=-1, keepdims=True)
    return (x - mu) * jax.lax.rsqrt(var + eps) * gamma + beta


def extract_patches(images, patch_size):
    """images: (B, C, H, W) -> (B, P, C*ps*ps), matching torch unfold order."""
    B, C, H, W = images.shape
    hh, ww = H // patch_size, W // patch_size
    p = images.reshape(B, C, hh, patch_size, ww, patch_size)
    p = jnp.transpose(p, (0, 2, 4, 1, 3, 5))          # (B, hh, ww, C, ps, ps)
    return p.reshape(B, hh * ww, C * patch_size * patch_size)


# ----------------------------------------------------------------------------
# fused ViT kernel: tokenizer + DEPTH transformer blocks + classifier head
# ----------------------------------------------------------------------------
def vit_fused_kernel(patch_ref, tw_ref, tb_ref, cls_ref, pos_ref,
                     wqkv_ref, bqkv_ref, wo_ref, bo_ref, g1_ref, be1_ref,
                     w1_ref, b1_ref, w2_ref, b2_ref, g2_ref, be2_ref,
                     hw_ref, hb_ref, o_ref, act_ref,
                     *, seq_len, seq_pad, batch, num_heads):
    d = pl.program_id(0)
    rows, E = act_ref.shape                       # rows = seq_pad * batch
    hd = E // num_heads

    # ---- tokenizer (d == 0 only): patch projection + cls token + positions --
    @pl.when(d == 0)
    def _():
        proj = jnp.dot(patch_ref[...], tw_ref[...],
                       preferred_element_type=jnp.float32) + tb_ref[...]   # (P*B, E)
        cls_rows = jnp.broadcast_to(cls_ref[...], (batch, E))              # (B, E)
        pieces = [cls_rows, proj]
        n_pad = (seq_pad - seq_len) * batch
        if n_pad:                                  # sublane-alignment padding rows
            pieces.append(jnp.zeros((n_pad, E), jnp.float32))
        tokens = jnp.concatenate(pieces, axis=0)                           # (rows, E)
        # position embedding, broadcast over the B rows of each s-block
        tokens = (tokens.reshape(seq_pad, batch, E)
                  + pos_ref[...][:, None, :]).reshape(rows, E)
        act_ref[...] = tokens                      # nn.Dropout: identity (eval mode)

    # ---- transformer block d -------------------------------------------------
    x = act_ref[...]                               # (rows, E) f32, row = s*B + b
    xb = x.astype(jnp.bfloat16)

    # fused QKV projection; 1/sqrt(hd) already folded into the q columns/bias
    qkv = jnp.dot(xb, wqkv_ref[0], preferred_element_type=jnp.float32) + bqkv_ref[0]

    # marshal heads onto a leading batch axis: (H*S_pad, B, hd)
    def heads(col0):
        return jnp.concatenate(
            [qkv[:, col0 + h * hd: col0 + (h + 1) * hd].reshape(seq_pad, batch, hd)
             for h in range(num_heads)], axis=0)

    qs, ks, vs = heads(0), heads(E), heads(2 * E)

    # ONE batched score matmul + softmax + ONE batched AV matmul for all heads.
    # Attention mixes over the B rows of each s-block, reproducing the
    # reference's nn.MultiheadAttention(batch_first=False) fed a (B, S, E) tensor.
    sc = jnp.einsum('nbd,ncd->nbc',
                    qs.astype(jnp.bfloat16), ks.astype(jnp.bfloat16),
                    preferred_element_type=jnp.float32)              # (H*S_pad, B, B)
    sc = sc - jnp.max(sc, axis=-1, keepdims=True)
    p = jnp.exp(sc)
    attn = p * pl.reciprocal(jnp.sum(p, axis=-1, keepdims=True), approx=True)
    ov = jnp.einsum('nbc,ncd->nbd',
                    attn.astype(jnp.bfloat16), vs.astype(jnp.bfloat16),
                    preferred_element_type=jnp.float32)              # (H*S_pad, B, hd)
    attn_out = jnp.concatenate(
        [ov[h * seq_pad:(h + 1) * seq_pad].reshape(rows, hd)
         for h in range(num_heads)], axis=-1)                        # (rows, E)

    attn_proj = jnp.dot(attn_out.astype(jnp.bfloat16), wo_ref[0],
                        preferred_element_type=jnp.float32) + bo_ref[0]

    # residual + LayerNorm 1 (f32)
    x1 = _layer_norm(attn_proj + x, g1_ref[0], be1_ref[0])

    # feed-forward (Linear -> ReLU -> Linear), bf16 MXU inputs / f32 accumulate
    hmid = jnp.maximum(
        jnp.dot(x1.astype(jnp.bfloat16), w1_ref[0],
                preferred_element_type=jnp.float32) + b1_ref[0], 0.0)
    ff = jnp.dot(hmid.astype(jnp.bfloat16), w2_ref[0],
                 preferred_element_type=jnp.float32) + b2_ref[0]

    # residual + LayerNorm 2 (f32); carry stays resident in VMEM across depth
    out = _layer_norm(ff + x1, g2_ref[0], be2_ref[0])
    act_ref[...] = out

    # ---- classifier head (d == last only): logits from the cls rows ----------
    @pl.when(d == pl.num_programs(0) - 1)
    def _():
        cls_tok = out[0:batch, :].astype(jnp.bfloat16)   # rows 0..B-1 are s == 0
        o_ref[...] = jnp.dot(cls_tok, hw_ref[...],
                             preferred_element_type=jnp.float32) + hb_ref[...]


# ----------------------------------------------------------------------------
# parameter stacking (depth-stacked, QKV fused, scale folded into q)
# ----------------------------------------------------------------------------
def stack_block_params(blocks, *, num_heads):
    E = blocks[0]['wq'].shape[0]
    scale = 1.0 / float(E // num_heads) ** 0.5
    bf, f32 = jnp.bfloat16, jnp.float32

    def cat(name, dtype):
        return jnp.stack([blk[name] for blk in blocks]).astype(dtype)

    wqkv = jnp.stack([jnp.concatenate([blk['wq'] * scale, blk['wk'], blk['wv']],
                                      axis=1) for blk in blocks]).astype(bf)
    bqkv = jnp.stack([jnp.concatenate([blk['bq'] * scale, blk['bk'], blk['bv']],
                                      axis=1) for blk in blocks]).astype(f32)
    return {
        'wqkv': wqkv, 'bqkv': bqkv,
        'wo': cat('wo', bf), 'bo': cat('bo', f32),
        'g1': cat('g1', f32), 'be1': cat('be1', f32),
        'w1': cat('w1', bf), 'b1': cat('b1', f32),
        'w2': cat('w2', bf), 'b2': cat('b2', f32),
        'g2': cat('g2', f32), 'be2': cat('be2', f32),
    }


# ----------------------------------------------------------------------------
# full forward pass (one pallas_call)
# ----------------------------------------------------------------------------
def vit_forward(images, params, *, patch_size, num_heads):
    B = images.shape[0]
    patches = extract_patches(images, patch_size)                # (B, P, Dp)
    P, Dp = patches.shape[1], patches.shape[2]
    S = P + 1
    # pad the sequence so S_pad * B is a multiple of 8 (sublane-aligned rows)
    step = 8 // math.gcd(B, 8)
    S_pad = -(-S // step) * step
    rows = S_pad * B

    t = params['tok']
    E = t['w'].shape[1]
    C = params['head']['w'].shape[1]
    depth = len(params['blocks'])

    # seq-major patch rows (row = p*B + b); activations never leave VMEM after this.
    patches_sm = jnp.transpose(patches, (1, 0, 2)).reshape(P * B, Dp).astype(jnp.bfloat16)
    pos_pad = jnp.zeros((S_pad, E), jnp.float32).at[:S, :].set(t['pos'])

    sp = stack_block_params(params['blocks'], num_heads=num_heads)

    kern = functools.partial(vit_fused_kernel, seq_len=S, seq_pad=S_pad,
                             batch=B, num_heads=num_heads)
    in_specs = [
        _full_spec((P * B, Dp)),                                   # patches
        _full_spec((Dp, E)), _full_spec((1, E)),                   # tokenizer w / b
        _full_spec((1, E)), _full_spec((S_pad, E)),                # cls / positions
        _depth_spec(sp['wqkv'].shape), _depth_spec(sp['bqkv'].shape),
        _depth_spec(sp['wo'].shape), _depth_spec(sp['bo'].shape),
        _depth_spec(sp['g1'].shape), _depth_spec(sp['be1'].shape),
        _depth_spec(sp['w1'].shape), _depth_spec(sp['b1'].shape),
        _depth_spec(sp['w2'].shape), _depth_spec(sp['b2'].shape),
        _depth_spec(sp['g2'].shape), _depth_spec(sp['be2'].shape),
        _full_spec((E, C)), _full_spec((1, C)),                    # classifier head
    ]
    # TODO(synk): at production sizes (E=768, hid=3072) stream w1/w2 over a K
    # grid axis, add a "parallel" row-tile axis for v7x's second TensorCore,
    # raise weight buffering (pl.Buffered(3)) on v5e/v6e, and set
    # vmem_limit_bytes explicitly for v7x's 64 MiB VMEM.
    return pl.pallas_call(
        kern,
        out_shape=jax.ShapeDtypeStruct((B, C), jnp.float32),
        grid=(depth,),
        in_specs=in_specs,
        out_specs=_full_spec((B, C)),
        scratch_shapes=[pltpu.VMEM((rows, E), jnp.float32)],       # resident activations
        compiler_params=pltpu.CompilerParams(dimension_semantics=("arbitrary",)),
    )(patches_sm, t['w'].astype(jnp.bfloat16), t['b'], t['cls'], pos_pad,
      sp['wqkv'], sp['bqkv'], sp['wo'], sp['bo'], sp['g1'], sp['be1'],
      sp['w1'], sp['b1'], sp['w2'], sp['b2'], sp['g2'], sp['be2'],
      params['head']['w'].astype(jnp.bfloat16), params['head']['b'])


# ----------------------------------------------------------------------------
# pure-JAX f32 reference (numerical sanity check)
# ----------------------------------------------------------------------------
def vit_reference(images, params, *, patch_size, num_heads):
    B = images.shape[0]
    patches = extract_patches(images, patch_size)
    t = params['tok']
    proj = patches @ t['w'] + t['b']
    E = proj.shape[-1]
    cls = jnp.broadcast_to(t['cls'][None], (B, 1, E))
    x = jnp.concatenate([cls, proj], axis=1) + t['pos'][None]      # (B, S, E)
    H = num_heads
    hd = E // H
    for p in params['blocks']:
        L, N = x.shape[0], x.shape[1]      # MHA (batch_first=False): L = B, N = S
        xf = x.reshape(L * N, E)
        q = (xf @ p['wq'] + p['bq']).reshape(L, N, H, hd)
        k = (xf @ p['wk'] + p['bk']).reshape(L, N, H, hd)
        v = (xf @ p['wv'] + p['bv']).reshape(L, N, H, hd)
        scores = jnp.einsum('lnhd,mnhd->nhlm', q, k) / jnp.sqrt(jnp.float32(hd))
        attn = jax.nn.softmax(scores, axis=-1)
        o = jnp.einsum('nhlm,mnhd->lnhd', attn, v).reshape(L * N, E)
        o = o @ p['wo'] + p['bo']
        x1 = _layer_norm(o + xf, p['g1'], p['be1'])
        ff = jnp.maximum(x1 @ p['w1'] + p['b1'], 0.0) @ p['w2'] + p['b2']
        x = _layer_norm(ff + x1, p['g2'], p['be2']).reshape(L, N, E)
    cls_final = x[:, 0]
    return cls_final @ params['head']['w'] + params['head']['b']


# ----------------------------------------------------------------------------
# deterministic parameter initialization
# ----------------------------------------------------------------------------
def init_params(key, *, patch_dim, embed, depth, expansion, num_classes, num_patches):
    counter = [0]

    def nk():
        counter[0] += 1
        return jax.random.fold_in(key, counter[0])

    def w(fan_in, fan_out):
        # stored pre-transposed as (in, out) for direct use in kernels
        return (jax.random.normal(nk(), (fan_in, fan_out), jnp.float32)
                / jnp.sqrt(jnp.float32(fan_in)))

    def b(n):
        return 0.01 * jax.random.normal(nk(), (1, n), jnp.float32)

    params = {
        'tok': {
            'w': w(patch_dim, embed),
            'b': b(embed),
            'cls': 0.02 * jax.random.normal(nk(), (1, embed), jnp.float32),
            'pos': 0.02 * jax.random.normal(nk(), (num_patches + 1, embed), jnp.float32),
        },
        'blocks': [],
        'head': {'w': w(embed, num_classes), 'b': b(num_classes)},
    }
    hid = expansion * embed
    for _ in range(depth):
        params['blocks'].append({
            'wq': w(embed, embed), 'wk': w(embed, embed), 'wv': w(embed, embed),
            'bq': b(embed), 'bk': b(embed), 'bv': b(embed),
            'wo': w(embed, embed), 'bo': b(embed),
            'g1': jnp.ones((1, embed), jnp.float32),
            'be1': jnp.zeros((1, embed), jnp.float32),
            'w1': w(embed, hid), 'b1': b(hid),
            'w2': w(hid, embed), 'b2': b(embed),
            'g2': jnp.ones((1, embed), jnp.float32),
            'be2': jnp.zeros((1, embed), jnp.float32),
        })
    return params


# ----------------------------------------------------------------------------
if __name__ == "__main__":
    B, C_IN, IMG, PS = 2, 4, 16, 8
    EMBED, HEADS, DEPTH, EXPANSION, NUM_CLASSES = 32, 4, 2, 4, 10
    num_patches = (IMG // PS) ** 2
    patch_dim = PS * PS * C_IN

    key = jax.random.PRNGKey(0)
    k_img, k_par = jax.random.split(key)
    images = jax.random.normal(k_img, (B, C_IN, IMG, IMG), jnp.float32)
    params = init_params(k_par, patch_dim=patch_dim, embed=EMBED, depth=DEPTH,
                         expansion=EXPANSION, num_classes=NUM_CLASSES,
                         num_patches=num_patches)

    fwd = jax.jit(functools.partial(vit_forward, patch_size=PS, num_heads=HEADS))
    out = jax.block_until_ready(fwd(images, params))
    assert out.shape == (B, NUM_CLASSES)

    ref = vit_reference(images, params, patch_size=PS, num_heads=HEADS)
    max_diff = float(jnp.max(jnp.abs(out - ref)))
    # Tightened vs the previous 1e-1: remaining error is bf16 weight/activation
    # rounding at the MXU (f32 accumulation) plus the EUP approx reciprocal in
    # the softmax; logits are O(1), so 5e-2 absolute still catches layout bugs.
    assert max_diff < 5e-2, f"kernel/reference mismatch, max diff = {max_diff}"

    print("KERNEL_OK")
</pallas_src>

<mosaic_0001>
module attributes {stable_mosaic.version = 11 : i64} {
  func.func @vit_fused_kernel(%arg0: i32, %arg1: memref<8x256xbf16, #tpu.memory_space<vmem>>, %arg2: memref<256x32xbf16, #tpu.memory_space<vmem>>, %arg3: memref<1x32xf32, #tpu.memory_space<vmem>>, %arg4: memref<1x32xf32, #tpu.memory_space<vmem>>, %arg5: memref<8x32xf32, #tpu.memory_space<vmem>>, %arg6: memref<1x32x96xbf16, #tpu.memory_space<vmem>>, %arg7: memref<1x1x96xf32, #tpu.memory_space<vmem>>, %arg8: memref<1x32x32xbf16, #tpu.memory_space<vmem>>, %arg9: memref<1x1x32xf32, #tpu.memory_space<vmem>>, %arg10: memref<1x1x32xf32, #tpu.memory_space<vmem>>, %arg11: memref<1x1x32xf32, #tpu.memory_space<vmem>>, %arg12: memref<1x32x128xbf16, #tpu.memory_space<vmem>>, %arg13: memref<1x1x128xf32, #tpu.memory_space<vmem>>, %arg14: memref<1x128x32xbf16, #tpu.memory_space<vmem>>, %arg15: memref<1x1x32xf32, #tpu.memory_space<vmem>>, %arg16: memref<1x1x32xf32, #tpu.memory_space<vmem>>, %arg17: memref<1x1x32xf32, #tpu.memory_space<vmem>>, %arg18: memref<32x10xbf16, #tpu.memory_space<vmem>>, %arg19: memref<1x10xf32, #tpu.memory_space<vmem>>, %arg20: memref<2x10xf32, #tpu.memory_space<vmem>>, %arg21: memref<16x32xf32, #tpu.memory_space<vmem>>) attributes {dimension_semantics = [#tpu.dimension_semantics<arbitrary>], iteration_bounds = array<i64: 2>, scalar_prefetch = 0 : i64, scratch_operands = 1 : i64, tpu.core_type = #tpu.core_type<tc>, window_params = [{pipeline_mode = #tpu.pipeline_mode<synchronous>, transform_indices = @transform_0, window_bounds = array<i64: 8, 256>}, {pipeline_mode = #tpu.pipeline_mode<synchronous>, transform_indices = @transform_1, window_bounds = array<i64: 256, 32>}, {pipeline_mode = #tpu.pipeline_mode<synchronous>, transform_indices = @transform_2, window_bounds = array<i64: 1, 32>}, {pipeline_mode = #tpu.pipeline_mode<synchronous>, transform_indices = @transform_3, window_bounds = array<i64: 1, 32>}, {pipeline_mode = #tpu.pipeline_mode<synchronous>, transform_indices = @transform_4, window_bounds = array<i64: 8, 32>}, {transform_indices = @transform_5, window_bounds = array<i64: 1, 32, 96>}, {transform_indices = @transform_6, window_bounds = array<i64: 1, 1, 96>}, {transform_indices = @transform_7, window_bounds = array<i64: 1, 32, 32>}, {transform_indices = @transform_8, window_bounds = array<i64: 1, 1, 32>}, {transform_indices = @transform_9, window_bounds = array<i64: 1, 1, 32>}, {transform_indices = @transform_10, window_bounds = array<i64: 1, 1, 32>}, {transform_indices = @transform_11, window_bounds = array<i64: 1, 32, 128>}, {transform_indices = @transform_12, window_bounds = array<i64: 1, 1, 128>}, {transform_indices = @transform_13, window_bounds = array<i64: 1, 128, 32>}, {transform_indices = @transform_14, window_bounds = array<i64: 1, 1, 32>}, {transform_indices = @transform_15, window_bounds = array<i64: 1, 1, 32>}, {transform_indices = @transform_16, window_bounds = array<i64: 1, 1, 32>}, {pipeline_mode = #tpu.pipeline_mode<synchronous>, transform_indices = @transform_17, window_bounds = array<i64: 32, 10>}, {pipeline_mode = #tpu.pipeline_mode<synchronous>, transform_indices = @transform_18, window_bounds = array<i64: 1, 10>}, {pipeline_mode = #tpu.pipeline_mode<synchronous>, transform_indices = @transform_19, window_bounds = array<i64: 2, 10>}]} {
    %c0_i32 = arith.constant 0 : i32
    %0 = arith.cmpi eq, %arg0, %c0_i32 : i32
    %1 = arith.extui %0 : i1 to i32
    %c0_i32_0 = arith.constant 0 : i32
    %2 = arith.cmpi ne, %1, %c0_i32_0 : i32
    scf.if %2 {
      %c0_59 = arith.constant 0 : index
      %c0_60 = arith.constant 0 : index
      %148 = vector.load %arg1[%c0_59, %c0_60] : memref<8x256xbf16, #tpu.memory_space<vmem>>, vector<8x256xbf16>
      %c0_61 = arith.constant 0 : index
      %c0_62 = arith.constant 0 : index
      %149 = vector.load %arg2[%c0_61, %c0_62] : memref<256x32xbf16, #tpu.memory_space<vmem>>, vector<256x32xbf16>
      %cst_63 = arith.constant dense<0.000000e+00> : vector<8x32xf32>
      %150 = tpu.matmul %148, %149, %cst_63 {dimension_numbers = #tpu.dot_dimension_numbers<[1], [0], [0], [1], [0, 0, 1, 1], [], []>} : vector<8x256xbf16>, vector<256x32xbf16>, vector<8x32xf32> -> vector<8x32xf32>
      %c0_64 = arith.constant 0 : index
      %c0_65 = arith.constant 0 : index
      %151 = vector.load %arg3[%c0_64, %c0_65] : memref<1x32xf32, #tpu.memory_space<vmem>>, vector<1x32xf32>
      %152 = vector.broadcast %151 : vector<1x32xf32> to vector<8x32xf32>
      %153 = arith.addf %150, %152 : vector<8x32xf32>
      %c0_66 = arith.constant 0 : index
      %c0_67 = arith.constant 0 : index
      %154 = vector.load %arg4[%c0_66, %c0_67] : memref<1x32xf32, #tpu.memory_space<vmem>>, vector<1x32xf32>
      %155 = vector.shape_cast %154 : vector<1x32xf32> to vector<1x32xf32>
      %156 = vector.broadcast %155 : vector<1x32xf32> to vector<2x32xf32>
      %cst_68 = arith.constant 0.000000e+00 : f32
      %157 = vector.broadcast %cst_68 : f32 to vector<6x32xf32>
      %158 = tpu.concatenate %156, %153, %157 in 0 : vector<2x32xf32>, vector<8x32xf32>, vector<6x32xf32> -> vector<16x32xf32>
      %159 = vector.shape_cast %158 : vector<16x32xf32> to vector<8x2x32xf32>
      %c0_69 = arith.constant 0 : index
      %c0_70 = arith.constant 0 : index
      %160 = vector.load %arg5[%c0_69, %c0_70] : memref<8x32xf32, #tpu.memory_space<vmem>>, vector<8x32xf32>
      %161 = vector.shape_cast %160 : vector<8x32xf32> to vector<8x1x32xf32>
      %162 = vector.broadcast %161 : vector<8x1x32xf32> to vector<8x2x32xf32>
      %163 = arith.addf %159, %162 : vector<8x2x32xf32>
      %164 = vector.shape_cast %163 : vector<8x2x32xf32> to vector<16x32xf32>
      %c0_71 = arith.constant 0 : index
      %c0_72 = arith.constant 0 : index
      %165 = vector.load %arg21[%c0_71, %c0_72] : memref<16x32xf32, #tpu.memory_space<vmem>>, vector<16x32xf32>
      tpu.vector_store %arg21[%c0_71, %c0_72], %164 {strides = array<i32>} : memref<16x32xf32, #tpu.memory_space<vmem>>, vector<16x32xf32>,
    } else {
    }
    %c0 = arith.constant 0 : index
    %c0_1 = arith.constant 0 : index
    %3 = vector.load %arg21[%c0, %c0_1] : memref<16x32xf32, #tpu.memory_space<vmem>>, vector<16x32xf32>
    %4 = arith.truncf %3 : vector<16x32xf32> to vector<16x32xbf16>
    %c0_2 = arith.constant 0 : index
    %c0_3 = arith.constant 0 : index
    %c0_4 = arith.constant 0 : index
    %5 = vector.load %arg6[%c0_2, %c0_3, %c0_4] : memref<1x32x96xbf16, #tpu.memory_space<vmem>>, vector<1x32x96xbf16>
    %6 = vector.shape_cast %5 : vector<1x32x96xbf16> to vector<32x96xbf16>
    %cst = arith.constant dense<0.000000e+00> : vector<16x96xf32>
    %7 = tpu.matmul %4, %6, %cst {dimension_numbers = #tpu.dot_dimension_numbers<[1], [0], [0], [1], [0, 0, 1, 1], [], []>} : vector<16x32xbf16>, vector<32x96xbf16>, vector<16x96xf32> -> vector<16x96xf32>
    %c0_5 = arith.constant 0 : index
    %c0_6 = arith.constant 0 : index
    %c0_7 = arith.constant 0 : index
    %8 = vector.load %arg7[%c0_5, %c0_6, %c0_7] : memref<1x1x96xf32, #tpu.memory_space<vmem>>, vector<1x1x96xf32>
    %9 = vector.shape_cast %8 : vector<1x1x96xf32> to vector<1x96xf32>
    %10 = vector.broadcast %9 : vector<1x96xf32> to vector<16x96xf32>
    %11 = arith.addf %7, %10 : vector<16x96xf32>
    %12 = vector.extract_strided_slice %11 {offsets = [0, 0], sizes = [16, 8], strides = [1, 1]} : vector<16x96xf32> to vector<16x8xf32>
    %13 = vector.shape_cast %12 : vector<16x8xf32> to vector<8x2x8xf32>
    %14 = vector.extract_strided_slice %11 {offsets = [0, 8], sizes = [16, 8], strides = [1, 1]} : vector<16x96xf32> to vector<16x8xf32>
    %15 = vector.shape_cast %14 : vector<16x8xf32> to vector<8x2x8xf32>
    %16 = vector.extract_strided_slice %11 {offsets = [0, 16], sizes = [16, 8], strides = [1, 1]} : vector<16x96xf32> to vector<16x8xf32>
    %17 = vector.shape_cast %16 : vector<16x8xf32> to vector<8x2x8xf32>
    %18 = vector.extract_strided_slice %11 {offsets = [0, 24], sizes = [16, 8], strides = [1, 1]} : vector<16x96xf32> to vector<16x8xf32>
    %19 = vector.shape_cast %18 : vector<16x8xf32> to vector<8x2x8xf32>
    %20 = tpu.concatenate %13, %15, %17, %19 in 0 : vector<8x2x8xf32>, vector<8x2x8xf32>, vector<8x2x8xf32>, vector<8x2x8xf32> -> vector<32x2x8xf32>
    %21 = vector.extract_strided_slice %11 {offsets = [0, 32], sizes = [16, 8], strides = [1, 1]} : vector<16x96xf32> to vector<16x8xf32>
    %22 = vector.shape_cast %21 : vector<16x8xf32> to vector<8x2x8xf32>
    %23 = vector.extract_strided_slice %11 {offsets = [0, 40], sizes = [16, 8], strides = [1, 1]} : vector<16x96xf32> to vector<16x8xf32>
    %24 = vector.shape_cast %23 : vector<16x8xf32> to vector<8x2x8xf32>
    %25 = vector.extract_strided_slice %11 {offsets = [0, 48], sizes = [16, 8], strides = [1, 1]} : vector<16x96xf32> to vector<16x8xf32>
    %26 = vector.shape_cast %25 : vector<16x8xf32> to vector<8x2x8xf32>
    %27 = vector.extract_strided_slice %11 {offsets = [0, 56], sizes = [16, 8], strides = [1, 1]} : vector<16x96xf32> to vector<16x8xf32>
    %28 = vector.shape_cast %27 : vector<16x8xf32> to vector<8x2x8xf32>
    %29 = tpu.concatenate %22, %24, %26, %28 in 0 : vector<8x2x8xf32>, vector<8x2x8xf32>, vector<8x2x8xf32>, vector<8x2x8xf32> -> vector<32x2x8xf32>
    %30 = vector.extract_strided_slice %11 {offsets = [0, 64], sizes = [16, 8], strides = [1, 1]} : vector<16x96xf32> to vector<16x8xf32>
    %31 = vector.shape_cast %30 : vector<16x8xf32> to vector<8x2x8xf32>
    %32 = vector.extract_strided_slice %11 {offsets = [0, 72], sizes = [16, 8], strides = [1, 1]} : vector<16x96xf32> to vector<16x8xf32>
    %33 = vector.shape_cast %32 : vector<16x8xf32> to vector<8x2x8xf32>
    %34 = vector.extract_strided_slice %11 {offsets = [0, 80], sizes = [16, 8], strides = [1, 1]} : vector<16x96xf32> to vector<16x8xf32>
    %35 = vector.shape_cast %34 : vector<16x8xf32> to vector<8x2x8xf32>
    %36 = vector.extract_strided_slice %11 {offsets = [0, 88], sizes = [16, 8], strides = [1, 1]} : vector<16x96xf32> to vector<16x8xf32>
    %37 = vector.shape_cast %36 : vector<16x8xf32> to vector<8x2x8xf32>
    %38 = tpu.concatenate %31, %33, %35, %37 in 0 : vector<8x2x8xf32>, vector<8x2x8xf32>, vector<8x2x8xf32>, vector<8x2x8xf32> -> vector<32x2x8xf32>
    %39 = arith.truncf %20 : vector<32x2x8xf32> to vector<32x2x8xbf16>
    %40 = arith.truncf %29 : vector<32x2x8xf32> to vector<32x2x8xbf16>
    "tpu.trace_start"() <{level = 10 : i32, message = "nbd,ncd->nbc"}> : () -> ()
    %cst_8 = arith.constant dense<0.000000e+00> : vector<32x2x2xf32>
    %41 = tpu.matmul %39, %40, %cst_8 {dimension_numbers = #tpu.dot_dimension_numbers<[2], [2], [1], [1], [0, 0, 0, 1, 1, 1], [0], [0]>} : vector<32x2x8xbf16>, vector<32x2x8xbf16>, vector<32x2x2xf32> -> vector<32x2x2xf32>
    "tpu.trace_stop"() : () -> ()
    %cst_9 = arith.constant dense<0xFF800000> : vector<32x2xf32>
    %42 = vector.multi_reduction <maximumf>, %41, %cst_9 [2] : vector<32x2x2xf32> to vector<32x2xf32>
    %43 = vector.shape_cast %42 : vector<32x2xf32> to vector<32x2x1xf32>
    %44 = vector.broadcast %43 : vector<32x2x1xf32> to vector<32x2x2xf32>
    %45 = arith.subf %41, %44 : vector<32x2x2xf32>
    %46 = math.exp %45 : vector<32x2x2xf32>
    %cst_10 = arith.constant dense<0.000000e+00> : vector<32x2xf32>
    %47 = vector.multi_reduction <add>, %46, %cst_10 [2] : vector<32x2x2xf32> to vector<32x2xf32>
    %48 = vector.shape_cast %47 : vector<32x2xf32> to vector<32x2x1xf32>
    %49 = tpu.reciprocal %48 {approx = true} : vector<32x2x1xf32> -> vector<32x2x1xf32>
    %50 = vector.broadcast %49 : vector<32x2x1xf32> to vector<32x2x2xf32>
    %51 = arith.mulf %46, %50 : vector<32x2x2xf32>
    %52 = arith.truncf %51 : vector<32x2x2xf32> to vector<32x2x2xbf16>
    %53 = arith.truncf %38 : vector<32x2x8xf32> to vector<32x2x8xbf16>
    "tpu.trace_start"() <{level = 10 : i32, message = "nbc,ncd->nbd"}> : () -> ()
    %cst_11 = arith.constant dense<0.000000e+00> : vector<32x2x8xf32>
    %54 = tpu.matmul %52, %53, %cst_11 {dimension_numbers = #tpu.dot_dimension_numbers<[2], [1], [1], [2], [0, 0, 0, 1, 1, 2], [0], [0]>} : vector<32x2x2xbf16>, vector<32x2x8xbf16>, vector<32x2x8xf32> -> vector<32x2x8xf32>
    "tpu.trace_stop"() : () -> ()
    %55 = vector.extract_strided_slice %54 {offsets = [0, 0, 0], sizes = [8, 2, 8], strides = [1, 1, 1]} : vector<32x2x8xf32> to vector<8x2x8xf32>
    %56 = vector.shape_cast %55 : vector<8x2x8xf32> to vector<16x8xf32>
    %57 = vector.extract_strided_slice %54 {offsets = [8, 0, 0], sizes = [8, 2, 8], strides = [1, 1, 1]} : vector<32x2x8xf32> to vector<8x2x8xf32>
    %58 = vector.shape_cast %57 : vector<8x2x8xf32> to vector<16x8xf32>
    %59 = vector.extract_strided_slice %54 {offsets = [16, 0, 0], sizes = [8, 2, 8], strides = [1, 1, 1]} : vector<32x2x8xf32> to vector<8x2x8xf32>
    %60 = vector.shape_cast %59 : vector<8x2x8xf32> to vector<16x8xf32>
    %61 = vector.extract_strided_slice %54 {offsets = [24, 0, 0], sizes = [8, 2, 8], strides = [1, 1, 1]} : vector<32x2x8xf32> to vector<8x2x8xf32>
    %62 = vector.shape_cast %61 : vector<8x2x8xf32> to vector<16x8xf32>
    %63 = tpu.concatenate %56, %58, %60, %62 in 1 : vector<16x8xf32>, vector<16x8xf32>, vector<16x8xf32>, vector<16x8xf32> -> vector<16x32xf32>
    %64 = arith.truncf %63 : vector<16x32xf32> to vector<16x32xbf16>
    %c0_12 = arith.constant 0 : index
    %c0_13 = arith.constant 0 : index
    %c0_14 = arith.constant 0 : index
    %65 = vector.load %arg8[%c0_12, %c0_13, %c0_14] : memref<1x32x32xbf16, #tpu.memory_space<vmem>>, vector<1x32x32xbf16>
    %66 = vector.shape_cast %65 : vector<1x32x32xbf16> to vector<32x32xbf16>
    %cst_15 = arith.constant dense<0.000000e+00> : vector<16x32xf32>
    %67 = tpu.matmul %64, %66, %cst_15 {dimension_numbers = #tpu.dot_dimension_numbers<[1], [0], [0], [1], [0, 0, 1, 1], [], []>} : vector<16x32xbf16>, vector<32x32xbf16>, vector<16x32xf32> -> vector<16x32xf32>
    %c0_16 = arith.constant 0 : index
    %c0_17 = arith.constant 0 : index
    %c0_18 = arith.constant 0 : index
    %68 = vector.load %arg9[%c0_16, %c0_17, %c0_18] : memref<1x1x32xf32, #tpu.memory_space<vmem>>, vector<1x1x32xf32>
    %69 = vector.shape_cast %68 : vector<1x1x32xf32> to vector<1x32xf32>
    %70 = vector.broadcast %69 : vector<1x32xf32> to vector<16x32xf32>
    %71 = arith.addf %67, %70 : vector<16x32xf32>
    %72 = arith.addf %71, %3 : vector<16x32xf32>
    %c0_19 = arith.constant 0 : index
    %c0_20 = arith.constant 0 : index
    %c0_21 = arith.constant 0 : index
    %73 = vector.load %arg10[%c0_19, %c0_20, %c0_21] : memref<1x1x32xf32, #tpu.memory_space<vmem>>, vector<1x1x32xf32>
    %74 = vector.shape_cast %73 : vector<1x1x32xf32> to vector<1x32xf32>
    %c0_22 = arith.constant 0 : index
    %c0_23 = arith.constant 0 : index
    %c0_24 = arith.constant 0 : index
    %75 = vector.load %arg11[%c0_22, %c0_23, %c0_24] : memref<1x1x32xf32, #tpu.memory_space<vmem>>, vector<1x1x32xf32>
    %76 = vector.shape_cast %75 : vector<1x1x32xf32> to vector<1x32xf32>
    %cst_25 = arith.constant dense<0.000000e+00> : vector<16xf32>
    %77 = vector.multi_reduction <add>, %72, %cst_25 [1] : vector<16x32xf32> to vector<16xf32>
    %78 = vector.shape_cast %77 : vector<16xf32> to vector<16x1xf32>
    %cst_26 = arith.constant 3.200000e+01 : f32
    %79 = vector.broadcast %cst_26 : f32 to vector<16x1xf32>
    %80 = arith.divf %78, %79 : vector<16x1xf32>
    %81 = vector.broadcast %80 : vector<16x1xf32> to vector<16x32xf32>
    %82 = arith.subf %72, %81 : vector<16x32xf32>
    %83 = arith.mulf %82, %82 : vector<16x32xf32>
    %cst_27 = arith.constant dense<0.000000e+00> : vector<16xf32>
    %84 = vector.multi_reduction <add>, %83, %cst_27 [1] : vector<16x32xf32> to vector<16xf32>
    %85 = vector.shape_cast %84 : vector<16xf32> to vector<16x1xf32>
    %cst_28 = arith.constant 3.200000e+01 : f32
    %86 = vector.broadcast %cst_28 : f32 to vector<16x1xf32>
    %87 = arith.divf %85, %86 : vector<16x1xf32>
    %88 = vector.broadcast %80 : vector<16x1xf32> to vector<16x32xf32>
    %89 = arith.subf %72, %88 : vector<16x32xf32>
    %cst_29 = arith.constant 9.99999974E-6 : f32
    %90 = vector.broadcast %cst_29 : f32 to vector<16x1xf32>
    %91 = arith.addf %87, %90 : vector<16x1xf32>
    %92 = math.rsqrt %91 : vector<16x1xf32>
    %93 = vector.broadcast %92 : vector<16x1xf32> to vector<16x32xf32>
    %94 = arith.mulf %89, %93 : vector<16x32xf32>
    %95 = vector.broadcast %74 : vector<1x32xf32> to vector<16x32xf32>
    %96 = arith.mulf %94, %95 : vector<16x32xf32>
    %97 = vector.broadcast %76 : vector<1x32xf32> to vector<16x32xf32>
    %98 = arith.addf %96, %97 : vector<16x32xf32>
    %99 = arith.truncf %98 : vector<16x32xf32> to vector<16x32xbf16>
    %c0_30 = arith.constant 0 : index
    %c0_31 = arith.constant 0 : index
    %c0_32 = arith.constant 0 : index
    %100 = vector.load %arg12[%c0_30, %c0_31, %c0_32] : memref<1x32x128xbf16, #tpu.memory_space<vmem>>, vector<1x32x128xbf16>
    %101 = vector.shape_cast %100 : vector<1x32x128xbf16> to vector<32x128xbf16>
    %cst_33 = arith.constant dense<0.000000e+00> : vector<16x128xf32>
    %102 = tpu.matmul %99, %101, %cst_33 {dimension_numbers = #tpu.dot_dimension_numbers<[1], [0], [0], [1], [0, 0, 1, 1], [], []>} : vector<16x32xbf16>, vector<32x128xbf16>, vector<16x128xf32> -> vector<16x128xf32>
    %c0_34 = arith.constant 0 : index
    %c0_35 = arith.constant 0 : index
    %c0_36 = arith.constant 0 : index
    %103 = vector.load %arg13[%c0_34, %c0_35, %c0_36] : memref<1x1x128xf32, #tpu.memory_space<vmem>>, vector<1x1x128xf32>
    %104 = vector.shape_cast %103 : vector<1x1x128xf32> to vector<1x128xf32>
    %105 = vector.broadcast %104 : vector<1x128xf32> to vector<16x128xf32>
    %106 = arith.addf %102, %105 : vector<16x128xf32>
    %cst_37 = arith.constant 0.000000e+00 : f32
    %107 = vector.broadcast %cst_37 : f32 to vector<16x128xf32>
    %108 = arith.maximumf %106, %107 : vector<16x128xf32>
    %109 = arith.truncf %108 : vector<16x128xf32> to vector<16x128xbf16>
    %c0_38 = arith.constant 0 : index
    %c0_39 = arith.constant 0 : index
    %c0_40 = arith.constant 0 : index
    %110 = vector.load %arg14[%c0_38, %c0_39, %c0_40] : memref<1x128x32xbf16, #tpu.memory_space<vmem>>, vector<1x128x32xbf16>
    %111 = vector.shape_cast %110 : vector<1x128x32xbf16> to vector<128x32xbf16>
    %cst_41 = arith.constant dense<0.000000e+00> : vector<16x32xf32>
    %112 = tpu.matmul %109, %111, %cst_41 {dimension_numbers = #tpu.dot_dimension_numbers<[1], [0], [0], [1], [0, 0, 1, 1], [], []>} : vector<16x128xbf16>, vector<128x32xbf16>, vector<16x32xf32> -> vector<16x32xf32>
    %c0_42 = arith.constant 0 : index
    %c0_43 = arith.constant 0 : index
    %c0_44 = arith.constant 0 : index
    %113 = vector.load %arg15[%c0_42, %c0_43, %c0_44] : memref<1x1x32xf32, #tpu.memory_space<vmem>>, vector<1x1x32xf32>
    %114 = vector.shape_cast %113 : vector<1x1x32xf32> to vector<1x32xf32>
    %115 = vector.broadcast %114 : vector<1x32xf32> to vector<16x32xf32>
    %116 = arith.addf %112, %115 : vector<16x32xf32>
    %117 = arith.addf %116, %98 : vector<16x32xf32>
    %c0_45 = arith.constant 0 : index
    %c0_46 = arith.constant 0 : index
    %c0_47 = arith.constant 0 : index
    %118 = vector.load %arg16[%c0_45, %c0_46, %c0_47] : memref<1x1x32xf32, #tpu.memory_space<vmem>>, vector<1x1x32xf32>
    %119 = vector.shape_cast %118 : vector<1x1x32xf32> to vector<1x32xf32>
    %c0_48 = arith.constant 0 : index
    %c0_49 = arith.constant 0 : index
    %c0_50 = arith.constant 0 : index
    %120 = vector.load %arg17[%c0_48, %c0_49, %c0_50] : memref<1x1x32xf32, #tpu.memory_space<vmem>>, vector<1x1x32xf32>
    %121 = vector.shape_cast %120 : vector<1x1x32xf32> to vector<1x32xf32>
    %cst_51 = arith.constant dense<0.000000e+00> : vector<16xf32>
    %122 = vector.multi_reduction <add>, %117, %cst_51 [1] : vector<16x32xf32> to vector<16xf32>
    %123 = vector.shape_cast %122 : vector<16xf32> to vector<16x1xf32>
    %cst_52 = arith.constant 3.200000e+01 : f32
    %124 = vector.broadcast %cst_52 : f32 to vector<16x1xf32>
    %125 = arith.divf %123, %124 : vector<16x1xf32>
    %126 = vector.broadcast %125 : vector<16x1xf32> to vector<16x32xf32>
    %127 = arith.subf %117, %126 : vector<16x32xf32>
    %128 = arith.mulf %127, %127 : vector<16x32xf32>
    %cst_53 = arith.constant dense<0.000000e+00> : vector<16xf32>
    %129 = vector.multi_reduction <add>, %128, %cst_53 [1] : vector<16x32xf32> to vector<16xf32>
    %130 = vector.shape_cast %129 : vector<16xf32> to vector<16x1xf32>
    %cst_54 = arith.constant 3.200000e+01 : f32
    %131 = vector.broadcast %cst_54 : f32 to vector<16x1xf32>
    %132 = arith.divf %130, %131 : vector<16x1xf32>
    %133 = vector.broadcast %125 : vector<16x1xf32> to vector<16x32xf32>
    %134 = arith.subf %117, %133 : vector<16x32xf32>
    %cst_55 = arith.constant 9.99999974E-6 : f32
    %135 = vector.broadcast %cst_55 : f32 to vector<16x1xf32>
    %136 = arith.addf %132, %135 : vector<16x1xf32>
    %137 = math.rsqrt %136 : vector<16x1xf32>
    %138 = vector.broadcast %137 : vector<16x1xf32> to vector<16x32xf32>
    %139 = arith.mulf %134, %138 : vector<16x32xf32>
    %140 = vector.broadcast %119 : vector<1x32xf32> to vector<16x32xf32>
    %141 = arith.mulf %139, %140 : vector<16x32xf32>
    %142 = vector.broadcast %121 : vector<1x32xf32> to vector<16x32xf32>
    %143 = arith.addf %141, %142 : vector<16x32xf32>
    %c0_56 = arith.constant 0 : index
    %c0_57 = arith.constant 0 : index
    %144 = vector.load %arg21[%c0_56, %c0_57] : memref<16x32xf32, #tpu.memory_space<vmem>>, vector<16x32xf32>
    tpu.vector_store %arg21[%c0_56, %c0_57], %143 {strides = array<i32>} : memref<16x32xf32, #tpu.memory_space<vmem>>, vector<16x32xf32>,
    %c1_i32 = arith.constant 1 : i32
    %145 = arith.cmpi eq, %arg0, %c1_i32 : i32
    %146 = arith.extui %145 : i1 to i32
    %c0_i32_58 = arith.constant 0 : i32
    %147 = arith.cmpi ne, %146, %c0_i32_58 : i32
    scf.if %147 {
      %148 = vector.extract_strided_slice %143 {offsets = [0, 0], sizes = [2, 32], strides = [1, 1]} : vector<16x32xf32> to vector<2x32xf32>
      %149 = arith.truncf %148 : vector<2x32xf32> to vector<2x32xbf16>
      %c0_59 = arith.constant 0 : index
      %c0_60 = arith.constant 0 : index
      %150 = vector.load %arg18[%c0_59, %c0_60] : memref<32x10xbf16, #tpu.memory_space<vmem>>, vector<32x10xbf16>
      %cst_61 = arith.constant dense<0.000000e+00> : vector<2x10xf32>
      %151 = tpu.matmul %149, %150, %cst_61 {dimension_numbers = #tpu.dot_dimension_numbers<[1], [0], [0], [1], [0, 0, 1, 1], [], []>} : vector<2x32xbf16>, vector<32x10xbf16>, vector<2x10xf32> -> vector<2x10xf32>
      %c0_62 = arith.constant 0 : index
      %c0_63 = arith.constant 0 : index
      %152 = vector.load %arg19[%c0_62, %c0_63] : memref<1x10xf32, #tpu.memory_space<vmem>>, vector<1x10xf32>
      %153 = vector.broadcast %152 : vector<1x10xf32> to vector<2x10xf32>
      %154 = arith.addf %151, %153 : vector<2x10xf32>
      %c0_64 = arith.constant 0 : index
      %c0_65 = arith.constant 0 : index
      %155 = vector.load %arg20[%c0_64, %c0_65] : memref<2x10xf32, #tpu.memory_space<vmem>>, vector<2x10xf32>
      tpu.vector_store %arg20[%c0_64, %c0_65], %154 {strides = array<i32>} : memref<2x10xf32, #tpu.memory_space<vmem>>, vector<2x10xf32>,
    } else {
    }
    return
  }
  func.func @transform_0(%arg0: i32) -> (i32, i32) {
    %c0_i32 = arith.constant 0 : i32
    %c0_i32_0 = arith.constant 0 : i32
    %c0_i32_1 = arith.constant 0 : i32
    return %c0_i32, %c0_i32_0 : i32, i32
  }
  func.func @transform_1(%arg0: i32) -> (i32, i32) {
    %c0_i32 = arith.constant 0 : i32
    %c0_i32_0 = arith.constant 0 : i32
    %c0_i32_1 = arith.constant 0 : i32
    return %c0_i32, %c0_i32_0 : i32, i32
  }
  func.func @transform_2(%arg0: i32) -> (i32, i32) {
    %c0_i32 = arith.constant 0 : i32
    %c0_i32_0 = arith.constant 0 : i32
    %c0_i32_1 = arith.constant 0 : i32
    return %c0_i32, %c0_i32_0 : i32, i32
  }
  func.func @transform_3(%arg0: i32) -> (i32, i32) {
    %c0_i32 = arith.constant 0 : i32
    %c0_i32_0 = arith.constant 0 : i32
    %c0_i32_1 = arith.constant 0 : i32
    return %c0_i32, %c0_i32_0 : i32, i32
  }
  func.func @transform_4(%arg0: i32) -> (i32, i32) {
    %c0_i32 = arith.constant 0 : i32
    %c0_i32_0 = arith.constant 0 : i32
    %c0_i32_1 = arith.constant 0 : i32
    return %c0_i32, %c0_i32_0 : i32, i32
  }
  func.func @transform_5(%arg0: i32) -> (i32, i32, i32) {
    %c0_i32 = arith.constant 0 : i32
    %c0_i32_0 = arith.constant 0 : i32
    %c0_i32_1 = arith.constant 0 : i32
    return %arg0, %c0_i32, %c0_i32_0 : i32, i32, i32
  }
  func.func @transform_6(%arg0: i32) -> (i32, i32, i32) {
    %c0_i32 = arith.constant 0 : i32
    %c0_i32_0 = arith.constant 0 : i32
    %c0_i32_1 = arith.constant 0 : i32
    return %arg0, %c0_i32, %c0_i32_0 : i32, i32, i32
  }
  func.func @transform_7(%arg0: i32) -> (i32, i32, i32) {
    %c0_i32 = arith.constant 0 : i32
    %c0_i32_0 = arith.constant 0 : i32
    %c0_i32_1 = arith.constant 0 : i32
    return %arg0, %c0_i32, %c0_i32_0 : i32, i32, i32
  }
  func.func @transform_8(%arg0: i32) -> (i32, i32, i32) {
    %c0_i32 = arith.constant 0 : i32
    %c0_i32_0 = arith.constant 0 : i32
    %c0_i32_1 = arith.constant 0 : i32
    return %arg0, %c0_i32, %c0_i32_0 : i32, i32, i32
  }
  func.func @transform_9(%arg0: i32) -> (i32, i32, i32) {
    %c0_i32 = arith.constant 0 : i32
    %c0_i32_0 = arith.constant 0 : i32
    %c0_i32_1 = arith.constant 0 : i32
    return %arg0, %c0_i32, %c0_i32_0 : i32, i32, i32
  }
  func.func @transform_10(%arg0: i32) -> (i32, i32, i32) {
    %c0_i32 = arith.constant 0 : i32
    %c0_i32_0 = arith.constant 0 : i32
    %c0_i32_1 = arith.constant 0 : i32
    return %arg0, %c0_i32, %c0_i32_0 : i32, i32, i32
  }
  func.func @transform_11(%arg0: i32) -> (i32, i32, i32) {
    %c0_i32 = arith.constant 0 : i32
    %c0_i32_0 = arith.constant 0 : i32
    %c0_i32_1 = arith.constant 0 : i32
    return %arg0, %c0_i32, %c0_i32_0 : i32, i32, i32
  }
  func.func @transform_12(%arg0: i32) -> (i32, i32, i32) {
    %c0_i32 = arith.constant 0 : i32
    %c0_i32_0 = arith.constant 0 : i32
    %c0_i32_1 = arith.constant 0 : i32
    return %arg0, %c0_i32, %c0_i32_0 : i32, i32, i32
  }
  func.func @transform_13(%arg0: i32) -> (i32, i32, i32) {
    %c0_i32 = arith.constant 0 : i32
    %c0_i32_0 = arith.constant 0 : i32
    %c0_i32_1 = arith.constant 0 : i32
    return %arg0, %c0_i32, %c0_i32_0 : i32, i32, i32
  }
  func.func @transform_14(%arg0: i32) -> (i32, i32, i32) {
    %c0_i32 = arith.constant 0 : i32
    %c0_i32_0 = arith.constant 0 : i32
    %c0_i32_1 = arith.constant 0 : i32
    return %arg0, %c0_i32, %c0_i32_0 : i32, i32, i32
  }
  func.func @transform_15(%arg0: i32) -> (i32, i32, i32) {
    %c0_i32 = arith.constant 0 : i32
    %c0_i32_0 = arith.constant 0 : i32
    %c0_i32_1 = arith.constant 0 : i32
    return %arg0, %c0_i32, %c0_i32_0 : i32, i32, i32
  }
  func.func @transform_16(%arg0: i32) -> (i32, i32, i32) {
    %c0_i32 = arith.constant 0 : i32
    %c0_i32_0 = arith.constant 0 : i32
    %c0_i32_1 = arith.constant 0 : i32
    return %arg0, %c0_i32, %c0_i32_0 : i32, i32, i32
  }
  func.func @transform_17(%arg0: i32) -> (i32, i32) {
    %c0_i32 = arith.constant 0 : i32
    %c0_i32_0 = arith.constant 0 : i32
    %c0_i32_1 = arith.constant 0 : i32
    return %c0_i32, %c0_i32_0 : i32, i32
  }
  func.func @transform_18(%arg0: i32) -> (i32, i32) {
    %c0_i32 = arith.constant 0 : i32
    %c0_i32_0 = arith.constant 0 : i32
    %c0_i32_1 = arith.constant 0 : i32
    return %c0_i32, %c0_i32_0 : i32, i32
  }
  func.func @transform_19(%arg0: i32) -> (i32, i32) {
    %c0_i32 = arith.constant 0 : i32
    %c0_i32_0 = arith.constant 0 : i32
    %c0_i32_1 = arith.constant 0 : i32
    return %c0_i32, %c0_i32_0 : i32, i32
  }
}

</mosaic_0001>

<llo_original>
// kernel: vit_forward.1
$region0: #{vit_forward.1}
  #allocation0 [shape = 'u32[]', space=smem, size = 0x4, offset = 0x4, fixed_abs, tag = 'smem constant byte address 0x4 - core index']
  #allocation1 [shape = 'u32[144,128]{1,0:T(1,128)}', space=vmem, size = 0x12000, scoped, tag = 'internal scratch']
  #allocation2 [shape = 'f32[16,32]{1,0:T(8,128)}', space=vmem, size = 0x2000, scoped, tag = 'scratch operand']
  %s0 = inlined_call_operand.vmem [shape: bf16[8,256], index: 0, kind: input, shape index: {}]
  %s1 = inlined_call_operand.vmem [shape: bf16[256,32], index: 1, kind: input, shape index: {}]
  %s2 = inlined_call_operand.vmem [shape: f32[1,32], index: 2, kind: input, shape index: {}]
  %s3 = inlined_call_operand.vmem [shape: f32[1,32], index: 3, kind: input, shape index: {}]
  %s4 = inlined_call_operand.vmem [shape: f32[8,32], index: 4, kind: input, shape index: {}]
  %s5 = inlined_call_operand.vmem [shape: bf16[2,32,96], index: 5, kind: input, shape index: {}]
  %s6 = inlined_call_operand.vmem [shape: f32[2,1,96], index: 6, kind: input, shape index: {}]
  %s7 = inlined_call_operand.vmem [shape: bf16[2,32,32], index: 7, kind: input, shape index: {}]
  %s8 = inlined_call_operand.vmem [shape: f32[2,1,32], index: 8, kind: input, shape index: {}]
  %s9 = inlined_call_operand.vmem [shape: f32[2,1,32], index: 9, kind: input, shape index: {}]
  %s10 = inlined_call_operand.vmem [shape: f32[2,1,32], index: 10, kind: input, shape index: {}]
  %s11 = inlined_call_operand.vmem [shape: bf16[2,32,128], index: 11, kind: input, shape index: {}]
  %s12 = inlined_call_operand.vmem [shape: f32[2,1,128], index: 12, kind: input, shape index: {}]
  %s13 = inlined_call_operand.vmem [shape: bf16[2,128,32], index: 13, kind: input, shape index: {}]
  %s14 = inlined_call_operand.vmem [shape: f32[2,1,32], index: 14, kind: input, shape index: {}]
  %s15 = inlined_call_operand.vmem [shape: f32[2,1,32], index: 15, kind: input, shape index: {}]
  %s16 = inlined_call_operand.vmem [shape: f32[2,1,32], index: 16, kind: input, shape index: {}]
  %s17 = inlined_call_operand.vmem [shape: bf16[32,10], index: 17, kind: input, shape index: {}]
  %s18 = inlined_call_operand.vmem [shape: f32[1,10], index: 18, kind: input, shape index: {}]
  %s19 = inlined_call_operand.hbm [shape: f32[2,10], index: 19, kind: output, shape index: {}]
  %s20 = sld [smem:[#allocation0]]
  $region117: #{vit_forward.1} parent=0
    _
  %s22 = ssub.s32 1, %s20
  %s23 = scalar_select 0, %s22, %s20
  $region1: #{vit_forward.1} parent=0
    #allocation3 [shape = 'u8[1024]{0}', space=vmem, size = 0x400, scoped, tag = 'output window, operand 0, single buffered']
    #allocation4 [shape = 's32[2]{0}', space=sflag, size = 0x8, scoped, tag = 'scoped memory for vit_forward.1']
    %24 = vsyncpa [#allocation4], 0
    loop: start=0, step=1, limit=4
    $region2: #{vit_forward.1} parent=1 // loop_pre_header
      _
    $region3: #{vit_forward.1} parent=1 // loop_header
      %s26 = sphi 0, %s30
      %p27 = scmp.ge.s32.totalorder %s26, 4
      %s34 = sphi 0, %s34
      %s36 = sphi 0, %s34
      %s37 = sphi 0, %s36
      %s51 = sphi 0, %s37
      %s55 = sphi 0, %s55
      %s57 = sphi 0, %s55
      %s58 = sphi 0, %s57
      %s72 = sphi 0, %s58
      %s76 = sphi 0, %s76
      %s78 = sphi 0, %s76
      %s79 = sphi 0, %s78
      %s93 = sphi 0, %s79
      %s97 = sphi 0, %s97
      %s99 = sphi 0, %s97
      %s100 = sphi 0, %s99
      %s114 = sphi 0, %s100
      %s118 = sphi 0, %s118
      %s120 = sphi 0, %s118
      %s121 = sphi 0, %s120
      %s135 = sphi 0, %s121
      %s141 = sphi 0, %s143
      %s144 = sphi 0, %s141
      %s145 = sphi 0, %s144
      %s161 = sphi 0, %s145
      %s167 = sphi 0, %s169
      %s170 = sphi 0, %s167
      %s171 = sphi 0, %s170
      %s187 = sphi 0, %s171
      %s193 = sphi 0, %s195
      %s196 = sphi 0, %s193
      %s197 = sphi 0, %s196
      %s213 = sphi 0, %s197
      %s219 = sphi 0, %s221
      %s222 = sphi 0, %s219
      %s223 = sphi 0, %s222
      %s239 = sphi 0, %s223
      %s245 = sphi 0, %s247
      %s248 = sphi 0, %s245
      %s249 = sphi 0, %s248
      %s265 = sphi 0, %s249
      %s271 = sphi 0, %s273
      %s274 = sphi 0, %s271
      %s275 = sphi 0, %s274
      %s291 = sphi 0, %s275
      %s297 = sphi 0, %s299
      %s300 = sphi 0, %s297
      %s301 = sphi 0, %s300
      %s317 = sphi 0, %s301
      %s323 = sphi 0, %s325
      %s326 = sphi 0, %s323
      %s327 = sphi 0, %s326
      %s343 = sphi 0, %s327
      %s349 = sphi 0, %s351
      %s352 = sphi 0, %s349
      %s353 = sphi 0, %s352
      %s369 = sphi 0, %s353
      %s375 = sphi 0, %s377
      %s378 = sphi 0, %s375
      %s379 = sphi 0, %s378
      %s395 = sphi 0, %s379
      %s401 = sphi 0, %s403
      %s404 = sphi 0, %s401
      %s405 = sphi 0, %s404
      %s421 = sphi 0, %s405
      %s427 = sphi 0, %s429
      %s430 = sphi 0, %s427
      %s431 = sphi 0, %s430
      %s447 = sphi 0, %s431
      %s451 = sphi 0, %s451
      %s453 = sphi 0, %s451
      %s454 = sphi 0, %s453
      %s468 = sphi 0, %s454
      %s472 = sphi 0, %s472
      %s474 = sphi 0, %s472
      %s475 = sphi 0, %s474
      %s489 = sphi 0, %s475
      %s493 = sphi 0, %s493
      %s495 = sphi 0, %s493
      %s496 = sphi 0, %s495
      %s510 = sphi 0, %s496
    $region4: #{vit_forward.1} parent=1 // loop_header_branch
      %29 = sbr.rel (%p27) target = $region8
    $region5: #{vit_forward.1} parent=1 // loop_body
      %s31 = ssub.s32 %s26, 1
      %s32 = ssub.s32 %s26, 2
      %s33 = sadd.s32 %s26, 1
      %s35 = sadd.s32 %s34, 1
      %p38 = scmp.eq.s32.totalorder %s26, 1
      %p39 = scmp.ne.s32.totalorder %s34, %s36
      %p40 = scmp.eq.s32.totalorder %s26, 0
      %p41 = por %p39, %p40
      %p42 = scmp.ne.s32.totalorder %s34, %s36
      %p43 = scmp.eq.s32.totalorder %s31, 1
      %p44 = por %p42, %p43
      %p45 = scmp.ne.s32.totalorder %s36, %s37
      %p46 = scmp.eq.s32.totalorder %s31, 0
      %p47 = por %p45, %p46
      %p48 = scmp.ne.s32.totalorder %s36, %s37
      %p49 = scmp.eq.s32.totalorder %s32, 1
      %p50 = por %p48, %p49
      %p52 = scmp.ne.s32.totalorder %s37, %s51
      %p53 = scmp.eq.s32.totalorder %s32, 0
      %p54 = por %p52, %p53
      %s56 = sadd.s32 %s55, 1
      %p59 = scmp.eq.s32.totalorder %s26, 1
      %p60 = scmp.ne.s32.totalorder %s55, %s57
      %p61 = scmp.eq.s32.totalorder %s26, 0
      %p62 = por %p60, %p61
      %p63 = scmp.ne.s32.totalorder %s55, %s57
      %p64 = scmp.eq.s32.totalorder %s31, 1
      %p65 = por %p63, %p64
      %p66 = scmp.ne.s32.totalorder %s57, %s58
      %p67 = scmp.eq.s32.totalorder %s31, 0
      %p68 = por %p66, %p67
      %p69 = scmp.ne.s32.totalorder %s57, %s58
      %p70 = scmp.eq.s32.totalorder %s32, 1
      %p71 = por %p69, %p70
      %p73 = scmp.ne.s32.totalorder %s58, %s72
      %p74 = scmp.eq.s32.totalorder %s32, 0
      %p75 = por %p73, %p74
      %s77 = sadd.s32 %s76, 1
      %p80 = scmp.eq.s32.totalorder %s26, 1
      %p81 = scmp.ne.s32.totalorder %s76, %s78
      %p82 = scmp.eq.s32.totalorder %s26, 0
      %p83 = por %p81, %p82
      %p84 = scmp.ne.s32.totalorder %s76, %s78
      %p85 = scmp.eq.s32.totalorder %s31, 1
      %p86 = por %p84, %p85
      %p87 = scmp.ne.s32.totalorder %s78, %s79
      %p88 = scmp.eq.s32.totalorder %s31, 0
      %p89 = por %p87, %p88
      %p90 = scmp.ne.s32.totalorder %s78, %s79
      %p91 = scmp.eq.s32.totalorder %s32, 1
      %p92 = por %p90, %p91
      %p94 = scmp.ne.s32.totalorder %s79, %s93
      %p95 = scmp.eq.s32.totalorder %s32, 0
      %p96 = por %p94, %p95
      %s98 = sadd.s32 %s97, 1
      %p101 = scmp.eq.s32.totalorder %s26, 1
      %p102 = scmp.ne.s32.totalorder %s97, %s99
      %p103 = scmp.eq.s32.totalorder %s26, 0
      %p104 = por %p102, %p103
      %p105 = scmp.ne.s32.totalorder %s97, %s99
      %p106 = scmp.eq.s32.totalorder %s31, 1
      %p107 = por %p105, %p106
      %p108 = scmp.ne.s32.totalorder %s99, %s100
      %p109 = scmp.eq.s32.totalorder %s31, 0
      %p110 = por %p108, %p109
      %p111 = scmp.ne.s32.totalorder %s99, %s100
      %p112 = scmp.eq.s32.totalorder %s32, 1
      %p113 = por %p111, %p112
      %p115 = scmp.ne.s32.totalorder %s100, %s114
      %p116 = scmp.eq.s32.totalorder %s32, 0
      %p117 = por %p115, %p116
      %s119 = sadd.s32 %s118, 1
      %p122 = scmp.eq.s32.totalorder %s26, 1
      %p123 = scmp.ne.s32.totalorder %s118, %s120
      %p124 = scmp.eq.s32.totalorder %s26, 0
      %p125 = por %p123, %p124
      %p126 = scmp.ne.s32.totalorder %s118, %s120
      %p127 = scmp.eq.s32.totalorder %s31, 1
      %p128 = por %p126, %p127
      %p129 = scmp.ne.s32.totalorder %s120, %s121
      %p130 = scmp.eq.s32.totalorder %s31, 0
      %p131 = por %p129, %p130
      %p132 = scmp.ne.s32.totalorder %s120, %s121
      %p133 = scmp.eq.s32.totalorder %s32, 1
      %p134 = por %p132, %p133
      %p136 = scmp.ne.s32.totalorder %s121, %s135
      %p137 = scmp.eq.s32.totalorder %s32, 0
      %p138 = por %p136, %p137
      %s139 = ssub.s32 %s26, %s33
      %p140 = scmp.eq.s32.totalorder %s139, 0
      %s142 = sadd.s32 %s141, 1
      %s143 = scalar_select %p140, %s141, %s142
      %p146 = pneg %p140
      %p147 = scmp.eq.s32.totalorder %s26, 1
      %p148 = por %p146, %p147
      %p149 = scmp.ne.s32.totalorder %s141, %s144
      %p150 = scmp.eq.s32.totalorder %s26, 0
      %p151 = por %p149, %p150
      %p152 = scmp.ne.s32.totalorder %s141, %s144
      %p153 = scmp.eq.s32.totalorder %s31, 1
      %p154 = por %p152, %p153
      %p155 = scmp.ne.s32.totalorder %s144, %s145
      %p156 = scmp.eq.s32.totalorder %s31, 0
      %p157 = por %p155, %p156
      %p158 = scmp.ne.s32.totalorder %s144, %s145
      %p159 = scmp.eq.s32.totalorder %s32, 1
      %p160 = por %p158, %p159
      %p162 = scmp.ne.s32.totalorder %s145, %s161
      %p163 = scmp.eq.s32.totalorder %s32, 0
      %p164 = por %p162, %p163
      %s165 = ssub.s32 %s26, %s33
      %p166 = scmp.eq.s32.totalorder %s165, 0
      %s168 = sadd.s32 %s167, 1
      %s169 = scalar_select %p166, %s167, %s168
      %p172 = pneg %p166
      %p173 = scmp.eq.s32.totalorder %s26, 1
      %p174 = por %p172, %p173
      %p175 = scmp.ne.s32.totalorder %s167, %s170
      %p176 = scmp.eq.s32.totalorder %s26, 0
      %p177 = por %p175, %p176
      %p178 = scmp.ne.s32.totalorder %s167, %s170
      %p179 = scmp.eq.s32.totalorder %s31, 1
      %p180 = por %p178, %p179
      %p181 = scmp.ne.s32.totalorder %s170, %s171
      %p182 = scmp.eq.s32.totalorder %s31, 0
      %p183 = por %p181, %p182
      %p184 = scmp.ne.s32.totalorder %s170, %s171
      %p185 = scmp.eq.s32.totalorder %s32, 1
      %p186 = por %p184, %p185
      %p188 = scmp.ne.s32.totalorder %s171, %s187
      %p189 = scmp.eq.s32.totalorder %s32, 0
      %p190 = por %p188, %p189
      %s191 = ssub.s32 %s26, %s33
      %p192 = scmp.eq.s32.totalorder %s191, 0
      %s194 = sadd.s32 %s193, 1
      %s195 = scalar_select %p192, %s193, %s194
      %p198 = pneg %p192
      %p199 = scmp.eq.s32.totalorder %s26, 1
      %p200 = por %p198, %p199
      %p201 = scmp.ne.s32.totalorder %s193, %s196
      %p202 = scmp.eq.s32.totalorder %s26, 0
      %p203 = por %p201, %p202
      %p204 = scmp.ne.s32.totalorder %s193, %s196
      %p205 = scmp.eq.s32.totalorder %s31, 1
      %p206 = por %p204, %p205
      %p207 = scmp.ne.s32.totalorder %s196, %s197
      %p208 = scmp.eq.s32.totalorder %s31, 0
      %p209 = por %p207, %p208
      %p210 = scmp.ne.s32.totalorder %s196, %s197
      %p211 = scmp.eq.s32.totalorder %s32, 1
      %p212 = por %p210, %p211
      %p214 = scmp.ne.s32.totalorder %s197, %s213
      %p215 = scmp.eq.s32.totalorder %s32, 0
      %p216 = por %p214, %p215
      %s217 = ssub.s32 %s26, %s33
      %p218 = scmp.eq.s32.totalorder %s217, 0
      %s220 = sadd.s32 %s219, 1
      %s221 = scalar_select %p218, %s219, %s220
      %p224 = pneg %p218
      %p225 = scmp.eq.s32.totalorder %s26, 1
      %p226 = por %p224, %p225
      %p227 = scmp.ne.s32.totalorder %s219, %s222
      %p228 = scmp.eq.s32.totalorder %s26, 0
      %p229 = por %p227, %p228
      %p230 = scmp.ne.s32.totalorder %s219, %s222
      %p231 = scmp.eq.s32.totalorder %s31, 1
      %p232 = por %p230, %p231
      %p233 = scmp.ne.s32.totalorder %s222, %s223
      %p234 = scmp.eq.s32.totalorder %s31, 0
      %p235 = por %p233, %p234
      %p236 = scmp.ne.s32.totalorder %s222, %s223
      %p237 = scmp.eq.s32.totalorder %s32, 1
      %p238 = por %p236, %p237
      %p240 = scmp.ne.s32.totalorder %s223, %s239
      %p241 = scmp.eq.s32.totalorder %s32, 0
      %p242 = por %p240, %p241
      %s243 = ssub.s32 %s26, %s33
      %p244 = scmp.eq.s32.totalorder %s243, 0
      %s246 = sadd.s32 %s245, 1
      %s247 = scalar_select %p244, %s245, %s246
      %p250 = pneg %p244
      %p251 = scmp.eq.s32.totalorder %s26, 1
      %p252 = por %p250, %p251
      %p253 = scmp.ne.s32.totalorder %s245, %s248
      %p254 = scmp.eq.s32.totalorder %s26, 0
      %p255 = por %p253, %p254
      %p256 = scmp.ne.s32.totalorder %s245, %s248
      %p257 = scmp.eq.s32.totalorder %s31, 1
      %p258 = por %p256, %p257
      %p259 = scmp.ne.s32.totalorder %s248, %s249
      %p260 = scmp.eq.s32.totalorder %s31, 0
      %p261 = por %p259, %p260
      %p262 = scmp.ne.s32.totalorder %s248, %s249
      %p263 = scmp.eq.s32.totalorder %s32, 1
      %p264 = por %p262, %p263
      %p266 = scmp.ne.s32.totalorder %s249, %s265
      %p267 = scmp.eq.s32.totalorder %s32, 0
      %p268 = por %p266, %p267
      %s269 = ssub.s32 %s26, %s33
      %p270 = scmp.eq.s32.totalorder %s269, 0
      %s272 = sadd.s32 %s271, 1
      %s273 = scalar_select %p270, %s271, %s272
      %p276 = pneg %p270
      %p277 = scmp.eq.s32.totalorder %s26, 1
      %p278 = por %p276, %p277
      %p279 = scmp.ne.s32.totalorder %s271, %s274
      %p280 = scmp.eq.s32.totalorder %s26, 0
      %p281 = por %p279, %p280
      %p282 = scmp.ne.s32.totalorder %s271, %s274
      %p283 = scmp.eq.s32.totalorder %s31, 1
      %p284 = por %p282, %p283
      %p285 = scmp.ne.s32.totalorder %s274, %s275
      %p286 = scmp.eq.s32.totalorder %s31, 0
      %p287 = por %p285, %p286
      %p288 = scmp.ne.s32.totalorder %s274, %s275
      %p289 = scmp.eq.s32.totalorder %s32, 1
      %p290 = por %p288, %p289
      %p292 = scmp.ne.s32.totalorder %s275, %s291
      %p293 = scmp.eq.s32.totalorder %s32, 0
      %p294 = por %p292, %p293
      %s295 = ssub.s32 %s26, %s33
      %p296 = scmp.eq.s32.totalorder %s295, 0
      %s298 = sadd.s32 %s297, 1
      %s299 = scalar_select %p296, %s297, %s298
      %p302 = pneg %p296
      %p303 = scmp.eq.s32.totalorder %s26, 1
      %p304 = por %p302, %p303
      %p305 = scmp.ne.s32.totalorder %s297, %s300
      %p306 = scmp.eq.s32.totalorder %s26, 0
      %p307 = por %p305, %p306
      %p308 = scmp.ne.s32.totalorder %s297, %s300
      %p309 = scmp.eq.s32.totalorder %s31, 1
      %p310 = por %p308, %p309
      %p311 = scmp.ne.s32.totalorder %s300, %s301
      %p312 = scmp.eq.s32.totalorder %s31, 0
      %p313 = por %p311, %p312
      %p314 = scmp.ne.s32.totalorder %s300, %s301
      %p315 = scmp.eq.s32.totalorder %s32, 1
      %p316 = por %p314, %p315
      %p318 = scmp.ne.s32.totalorder %s301, %s317
      %p319 = scmp.eq.s32.totalorder %s32, 0
      %p320 = por %p318, %p319
      %s321 = ssub.s32 %s26, %s33
      %p322 = scmp.eq.s32.totalorder %s321, 0
      %s324 = sadd.s32 %s323, 1
      %s325 = scalar_select %p322, %s323, %s324
      %p328 = pneg %p322
      %p329 = scmp.eq.s32.totalorder %s26, 1
      %p330 = por %p328, %p329
      %p331 = scmp.ne.s32.totalorder %s323, %s326
      %p332 = scmp.eq.s32.totalorder %s26, 0
      %p333 = por %p331, %p332
      %p334 = scmp.ne.s32.totalorder %s323, %s326
      %p335 = scmp.eq.s32.totalorder %s31, 1
      %p336 = por %p334, %p335
      %p337 = scmp.ne.s32.totalorder %s326, %s327
      %p338 = scmp.eq.s32.totalorder %s31, 0
      %p339 = por %p337, %p338
      %p340 = scmp.ne.s32.totalorder %s326, %s327
      %p341 = scmp.eq.s32.totalorder %s32, 1
      %p342 = por %p340, %p341
      %p344 = scmp.ne.s32.totalorder %s327, %s343
      %p345 = scmp.eq.s32.totalorder %s32, 0
      %p346 = por %p344, %p345
      %s347 = ssub.s32 %s26, %s33
      %p348 = scmp.eq.s32.totalorder %s347, 0
      %s350 = sadd.s32 %s349, 1
      %s351 = scalar_select %p348, %s349, %s350
      %p354 = pneg %p348
      %p355 = scmp.eq.s32.totalorder %s26, 1
      %p356 = por %p354, %p355
      %p357 = scmp.ne.s32.totalorder %s349, %s352
      %p358 = scmp.eq.s32.totalorder %s26, 0
      %p359 = por %p357, %p358
      %p360 = scmp.ne.s32.totalorder %s349, %s352
      %p361 = scmp.eq.s32.totalorder %s31, 1
      %p362 = por %p360, %p361
      %p363 = scmp.ne.s32.totalorder %s352, %s353
      %p364 = scmp.eq.s32.totalorder %s31, 0
      %p365 = por %p363, %p364
      %p366 = scmp.ne.s32.totalorder %s352, %s353
      %p367 = scmp.eq.s32.totalorder %s32, 1
      %p368 = por %p366, %p367
      %p370 = scmp.ne.s32.totalorder %s353, %s369
      %p371 = scmp.eq.s32.totalorder %s32, 0
      %p372 = por %p370, %p371
      %s373 = ssub.s32 %s26, %s33
      %p374 = scmp.eq.s32.totalorder %s373, 0
      %s376 = sadd.s32 %s375, 1
      %s377 = scalar_select %p374, %s375, %s376
      %p380 = pneg %p374
      %p381 = scmp.eq.s32.totalorder %s26, 1
      %p382 = por %p380, %p381
      %p383 = scmp.ne.s32.totalorder %s375, %s378
      %p384 = scmp.eq.s32.totalorder %s26, 0
      %p385 = por %p383, %p384
      %p386 = scmp.ne.s32.totalorder %s375, %s378
      %p387 = scmp.eq.s32.totalorder %s31, 1
      %p388 = por %p386, %p387
      %p389 = scmp.ne.s32.totalorder %s378, %s379
      %p390 = scmp.eq.s32.totalorder %s31, 0
      %p391 = por %p389, %p390
      %p392 = scmp.ne.s32.totalorder %s378, %s379
      %p393 = scmp.eq.s32.totalorder %s32, 1
      %p394 = por %p392, %p393
      %p396 = scmp.ne.s32.totalorder %s379, %s395
      %p397 = scmp.eq.s32.totalorder %s32, 0
      %p398 = por %p396, %p397
      %s399 = ssub.s32 %s26, %s33
      %p400 = scmp.eq.s32.totalorder %s399, 0
      %s402 = sadd.s32 %s401, 1
      %s403 = scalar_select %p400, %s401, %s402
      %p406 = pneg %p400
      %p407 = scmp.eq.s32.totalorder %s26, 1
      %p408 = por %p406, %p407
      %p409 = scmp.ne.s32.totalorder %s401, %s404
      %p410 = scmp.eq.s32.totalorder %s26, 0
      %p411 = por %p409, %p410
      %p412 = scmp.ne.s32.totalorder %s401, %s404
      %p413 = scmp.eq.s32.totalorder %s31, 1
      %p414 = por %p412, %p413
      %p415 = scmp.ne.s32.totalorder %s404, %s405
      %p416 = scmp.eq.s32.totalorder %s31, 0
      %p417 = por %p415, %p416
      %p418 = scmp.ne.s32.totalorder %s404, %s405
      %p419 = scmp.eq.s32.totalorder %s32, 1
      %p420 = por %p418, %p419
      %p422 = scmp.ne.s32.totalorder %s405, %s421
      %p423 = scmp.eq.s32.totalorder %s32, 0
      %p424 = por %p422, %p423
      %s425 = ssub.s32 %s26, %s33
      %p426 = scmp.eq.s32.totalorder %s425, 0
      %s428 = sadd.s32 %s427, 1
      %s429 = scalar_select %p426, %s427, %s428
      %p432 = pneg %p426
      %p433 = scmp.eq.s32.totalorder %s26, 1
      %p434 = por %p432, %p433
      %p435 = scmp.ne.s32.totalorder %s427, %s430
      %p436 = scmp.eq.s32.totalorder %s26, 0
      %p437 = por %p435, %p436
      %p438 = scmp.ne.s32.totalorder %s427, %s430
      %p439 = scmp.eq.s32.totalorder %s31, 1
      %p440 = por %p438, %p439
      %p441 = scmp.ne.s32.totalorder %s430, %s431
      %p442 = scmp.eq.s32.totalorder %s31, 0
      %p443 = por %p441, %p442
      %p444 = scmp.ne.s32.totalorder %s430, %s431
      %p445 = scmp.eq.s32.totalorder %s32, 1
      %p446 = por %p444, %p445
      %p448 = scmp.ne.s32.totalorder %s431, %s447
      %p449 = scmp.eq.s32.totalorder %s32, 0
      %p450 = por %p448, %p449
      %s452 = sadd.s32 %s451, 1
      %p455 = scmp.eq.s32.totalorder %s26, 1
      %p456 = scmp.ne.s32.totalorder %s451, %s453
      %p457 = scmp.eq.s32.totalorder %s26, 0
      %p458 = por %p456, %p457
      %p459 = scmp.ne.s32.totalorder %s451, %s453
      %p460 = scmp.eq.s32.totalorder %s31, 1
      %p461 = por %p459, %p460
      %p462 = scmp.ne.s32.totalorder %s453, %s454
      %p463 = scmp.eq.s32.totalorder %s31, 0
      %p464 = por %p462, %p463
      %p465 = scmp.ne.s32.totalorder %s453, %s454
      %p466 = scmp.eq.s32.totalorder %s32, 1
      %p467 = por %p465, %p466
      %p469 = scmp.ne.s32.totalorder %s454, %s468
      %p470 = scmp.eq.s32.totalorder %s32, 0
      %p471 = por %p469, %p470
      %s473 = sadd.s32 %s472, 1
      %p476 = scmp.eq.s32.totalorder %s26, 1
      %p477 = scmp.ne.s32.totalorder %s472, %s474
      %p478 = scmp.eq.s32.totalorder %s26, 0
      %p479 = por %p477, %p478
      %p480 = scmp.ne.s32.totalorder %s472, %s474
      %p481 = scmp.eq.s32.totalorder %s31, 1
      %p482 = por %p480, %p481
      %p483 = scmp.ne.s32.totalorder %s474, %s475
      %p484 = scmp.eq.s32.totalorder %s31, 0
      %p485 = por %p483, %p484
      %p486 = scmp.ne.s32.totalorder %s474, %s475
      %p487 = scmp.eq.s32.totalorder %s32, 1
      %p488 = por %p486, %p487
      %p490 = scmp.ne.s32.totalorder %s475, %s489
      %p491 = scmp.eq.s32.totalorder %s32, 0
      %p492 = por %p490, %p491
      %s494 = sadd.s32 %s493, 1
      %p497 = scmp.eq.s32.totalorder %s26, 1
      %p498 = scmp.ne.s32.totalorder %s493, %s495
      %p499 = scmp.eq.s32.totalorder %s26, 0
      %p500 = por %p498, %p499
      %p501 = scmp.ne.s32.totalorder %s493, %s495
      %p502 = scmp.eq.s32.totalorder %s31, 1
      %p503 = por %p501, %p502
      %p504 = scmp.ne.s32.totalorder %s495, %s496
      %p505 = scmp.eq.s32.totalorder %s31, 0
      %p506 = por %p504, %p505
      %p507 = scmp.ne.s32.totalorder %s495, %s496
      %p508 = scmp.eq.s32.totalorder %s32, 1
      %p509 = por %p507, %p508
      %p511 = scmp.ne.s32.totalorder %s496, %s510
      %p512 = scmp.eq.s32.totalorder %s32, 0
      %p513 = por %p511, %p512
      %p514 = scmp.le.s32.totalorder 1, %s26
      %p515 = scmp.lt.s32.totalorder %s26, 3
      %p516 = pnand %p514, %p515
      %p517 = pneg %p516
      // Predicated region
      $region9: #{vit_forward.1} parent=5 // pred_check
        _
      $region10: #{vit_forward.1} parent=5 // pred_check_branch
        %519 = sbr.rel (%p516) target = $region12
      $region11: #{vit_forward.1} parent=5 // pred_region
        %s520 = ssub.s32 %s26, 1
        // Predicated region
        $region13: #{vit_forward.1} parent=11 // pred_check
          %p521 = pneg %p47
        $region14: #{vit_forward.1} parent=11 // pred_check_branch
          %523 = sbr.rel (%p521) target = $region16
        $region15: #{vit_forward.1} parent=11 // pred_region
          _
        $region16: #{vit_forward.1} parent=11 // pred_fallthru
          _
        // Predicated region
        $region17: #{vit_forward.1} parent=11 // pred_check
          %p524 = pneg %p68
        $region18: #{vit_forward.1} parent=11 // pred_check_branch
          %526 = sbr.rel (%p524) target = $region20
        $region19: #{vit_forward.1} parent=11 // pred_region
          _
        $region20: #{vit_forward.1} parent=11 // pred_fallthru
          _
        // Predicated region
        $region21: #{vit_forward.1} parent=11 // pred_check
          %p527 = pneg %p89
        $region22: #{vit_forward.1} parent=11 // pred_check_branch
          %529 = sbr.rel (%p527) target = $region24
        $region23: #{vit_forward.1} parent=11 // pred_region
          _
        $region24: #{vit_forward.1} parent=11 // pred_fallthru
          _
        // Predicated region
        $region25: #{vit_forward.1} parent=11 // pred_check
          %p530 = pneg %p110
        $region26: #{vit_forward.1} parent=11 // pred_check_branch
          %532 = sbr.rel (%p530) target = $region28
        $region27: #{vit_forward.1} parent=11 // pred_region
          _
        $region28: #{vit_forward.1} parent=11 // pred_fallthru
          _
        // Predicated region
        $region29: #{vit_forward.1} parent=11 // pred_check
          %p533 = pneg %p131
        $region30: #{vit_forward.1} parent=11 // pred_check_branch
          %535 = sbr.rel (%p533) target = $region32
        $region31: #{vit_forward.1} parent=11 // pred_region
          _
        $region32: #{vit_forward.1} parent=11 // pred_fallthru
          _
        // Predicated region
        $region33: #{vit_forward.1} parent=11 // pred_check
          %p536 = pneg %p464
        $region34: #{vit_forward.1} parent=11 // pred_check_branch
          %538 = sbr.rel (%p536) target = $region36
        $region35: #{vit_forward.1} parent=11 // pred_region
          _
        $region36: #{vit_forward.1} parent=11 // pred_fallthru
          _
        // Predicated region
        $region37: #{vit_forward.1} parent=11 // pred_check
          %p539 = pneg %p485
        $region38: #{vit_forward.1} parent=11 // pred_check_branch
          %541 = sbr.rel (%p539) target = $region40
        $region39: #{vit_forward.1} parent=11 // pred_region
          _
        $region40: #{vit_forward.1} parent=11 // pred_fallthru
          _
      $region12: #{vit_forward.1} parent=5 // pred_fallthru
        _
      %p542 = scmp.lt.s32.totalorder %s26, 2
      // Predicated region
      $region41: #{vit_forward.1} parent=5 // pred_check
        %p543 = pneg %p542
      $region42: #{vit_forward.1} parent=5 // pred_check_branch
        %545 = sbr.rel (%p543) target = $region44
      $region43: #{vit_forward.1} parent=5 // pred_region
        // Predicated region
        $region45: #{vit_forward.1} parent=43 // pred_check
          %p546 = pneg %p151
        $region46: #{vit_forward.1} parent=43 // pred_check_branch
          %548 = sbr.rel (%p546) target = $region48
        $region47: #{vit_forward.1} parent=43 // pred_region
          %p549 = scmp.lt.s32.totalorder %s26, 1
          %s550 = scalar_select %p549, %s26, 1
          %s551 = smul.addr %s550, 4
          %s552 = smul.addr %s551, 4
          %s553 = scalar_lea.vmem %s5, %s552
        $region48: #{vit_forward.1} parent=43 // pred_fallthru
          _
        // Predicated region
        $region49: #{vit_forward.1} parent=43 // pred_check
          %p554 = pneg %p177
        $region50: #{vit_forward.1} parent=43 // pred_check_branch
          %556 = sbr.rel (%p554) target = $region52
        $region51: #{vit_forward.1} parent=43 // pred_region
          %p557 = scmp.lt.s32.totalorder %s26, 1
          %s558 = scalar_select %p557, %s26, 1
          %s559 = scalar_lea.vmem %s6, %s558
        $region52: #{vit_forward.1} parent=43 // pred_fallthru
          _
        // Predicated region
        $region53: #{vit_forward.1} parent=43 // pred_check
          %p560 = pneg %p203
        $region54: #{vit_forward.1} parent=43 // pred_check_branch
          %562 = sbr.rel (%p560) target = $region56
        $region55: #{vit_forward.1} parent=43 // pred_region
          %p563 = scmp.lt.s32.totalorder %s26, 1
          %s564 = scalar_select %p563, %s26, 1
          %s565 = smul.addr %s564, 4
          %s566 = smul.addr %s565, 4
          %s567 = scalar_lea.vmem %s7, %s566
        $region56: #{vit_forward.1} parent=43 // pred_fallthru
          _
        // Predicated region
        $region57: #{vit_forward.1} parent=43 // pred_check
          %p568 = pneg %p229
        $region58: #{vit_forward.1} parent=43 // pred_check_branch
          %570 = sbr.rel (%p568) target = $region60
        $region59: #{vit_forward.1} parent=43 // pred_region
          %p571 = scmp.lt.s32.totalorder %s26, 1
          %s572 = scalar_select %p571, %s26, 1
          %s573 = scalar_lea.vmem %s8, %s572
        $region60: #{vit_forward.1} parent=43 // pred_fallthru
          _
        // Predicated region
        $region61: #{vit_forward.1} parent=43 // pred_check
          %p574 = pneg %p255
        $region62: #{vit_forward.1} parent=43 // pred_check_branch
          %576 = sbr.rel (%p574) target = $region64
        $region63: #{vit_forward.1} parent=43 // pred_region
          %p577 = scmp.lt.s32.totalorder %s26, 1
          %s578 = scalar_select %p577, %s26, 1
          %s579 = scalar_lea.vmem %s9, %s578
        $region64: #{vit_forward.1} parent=43 // pred_fallthru
          _
        // Predicated region
        $region65: #{vit_forward.1} parent=43 // pred_check
          %p580 = pneg %p281
        $region66: #{vit_forward.1} parent=43 // pred_check_branch
          %582 = sbr.rel (%p580) target = $region68
        $region67: #{vit_forward.1} parent=43 // pred_region
          %p583 = scmp.lt.s32.totalorder %s26, 1
          %s584 = scalar_select %p583, %s26, 1
          %s585 = scalar_lea.vmem %s10, %s584
        $region68: #{vit_forward.1} parent=43 // pred_fallthru
          _
        // Predicated region
        $region69: #{vit_forward.1} parent=43 // pred_check
          %p586 = pneg %p307
        $region70: #{vit_forward.1} parent=43 // pred_check_branch
          %588 = sbr.rel (%p586) target = $region72
        $region71: #{vit_forward.1} parent=43 // pred_region
          %p589 = scmp.lt.s32.totalorder %s26, 1
          %s590 = scalar_select %p589, %s26, 1
          %s591 = smul.addr %s590, 4
          %s592 = smul.addr %s591, 4
          %s593 = scalar_lea.vmem %s11, %s592
        $region72: #{vit_forward.1} parent=43 // pred_fallthru
          _
        // Predicated region
        $region73: #{vit_forward.1} parent=43 // pred_check
          %p594 = pneg %p333
        $region74: #{vit_forward.1} parent=43 // pred_check_branch
          %596 = sbr.rel (%p594) target = $region76
        $region75: #{vit_forward.1} parent=43 // pred_region
          %p597 = scmp.lt.s32.totalorder %s26, 1
          %s598 = scalar_select %p597, %s26, 1
          %s599 = scalar_lea.vmem %s12, %s598
        $region76: #{vit_forward.1} parent=43 // pred_fallthru
          _
        // Predicated region
        $region77: #{vit_forward.1} parent=43 // pred_check
          %p600 = pneg %p359
        $region78: #{vit_forward.1} parent=43 // pred_check_branch
          %602 = sbr.rel (%p600) target = $region80
        $region79: #{vit_forward.1} parent=43 // pred_region
          %p603 = scmp.lt.s32.totalorder %s26, 1
          %s604 = scalar_select %p603, %s26, 1
          %s605 = smul.addr %s604, 16
          %s606 = smul.addr %s605, 4
          %s607 = scalar_lea.vmem %s13, %s606
        $region80: #{vit_forward.1} parent=43 // pred_fallthru
          _
        // Predicated region
        $region81: #{vit_forward.1} parent=43 // pred_check
          %p608 = pneg %p385
        $region82: #{vit_forward.1} parent=43 // pred_check_branch
          %610 = sbr.rel (%p608) target = $region84
        $region83: #{vit_forward.1} parent=43 // pred_region
          %p611 = scmp.lt.s32.totalorder %s26, 1
          %s612 = scalar_select %p611, %s26, 1
          %s613 = scalar_lea.vmem %s14, %s612
        $region84: #{vit_forward.1} parent=43 // pred_fallthru
          _
        // Predicated region
        $region85: #{vit_forward.1} parent=43 // pred_check
          %p614 = pneg %p411
        $region86: #{vit_forward.1} parent=43 // pred_check_branch
          %616 = sbr.rel (%p614) target = $region88
        $region87: #{vit_forward.1} parent=43 // pred_region
          %p617 = scmp.lt.s32.totalorder %s26, 1
          %s618 = scalar_select %p617, %s26, 1
          %s619 = scalar_lea.vmem %s15, %s618
        $region88: #{vit_forward.1} parent=43 // pred_fallthru
          _
        // Predicated region
        $region89: #{vit_forward.1} parent=43 // pred_check
          %p620 = pneg %p437
        $region90: #{vit_forward.1} parent=43 // pred_check_branch
          %622 = sbr.rel (%p620) target = $region92
        $region91: #{vit_forward.1} parent=43 // pred_region
          %p623 = scmp.lt.s32.totalorder %s26, 1
          %s624 = scalar_select %p623, %s26, 1
          %s625 = scalar_lea.vmem %s16, %s624
        $region92: #{vit_forward.1} parent=43 // pred_fallthru
          _
      $region44: #{vit_forward.1} parent=5 // pred_fallthru
        _
      %p626 = scmp.le.s32.totalorder 1, %s26
      %p627 = scmp.lt.s32.totalorder %s26, 3
      %p628 = pnand %p626, %p627
      %p629 = pneg %p628
      // Predicated region
      $region93: #{vit_forward.1} parent=5 // pred_check
        _
      $region94: #{vit_forward.1} parent=5 // pred_check_branch
        %631 = sbr.rel (%p628) target = $region96
      $region95: #{vit_forward.1} parent=5 // pred_region
        %s632 = ssub.s32 %s26, 1
        %p633 = pneg %p47
        %p634 = pneg %p44
        %p635 = pneg %p68
        %p636 = pneg %p65
        %p637 = pneg %p89
        %p638 = pneg %p86
        %p639 = pneg %p110
        %p640 = pneg %p107
        %p641 = pneg %p131
        %p642 = pneg %p128
        %p643 = scmp.lt.s32.totalorder %s31, 1
        %s644 = scalar_select %p643, %s31, 1
        %s645 = smul.addr %s644, 4
        %s646 = smul.addr %s645, 4
        %s647 = scalar_lea.vmem %s5, %s646
        %p648 = pneg %p157
        %p649 = pneg %p154
        %p650 = scmp.lt.s32.totalorder %s31, 1
        %s651 = scalar_select %p650, %s31, 1
        %s652 = scalar_lea.vmem %s6, %s651
        %p653 = pneg %p183
        %p654 = pneg %p180
        %p655 = scmp.lt.s32.totalorder %s31, 1
        %s656 = scalar_select %p655, %s31, 1
        %s657 = smul.addr %s656, 4
        %s658 = smul.addr %s657, 4
        %s659 = scalar_lea.vmem %s7, %s658
        %p660 = pneg %p209
        %p661 = pneg %p206
        %p662 = scmp.lt.s32.totalorder %s31, 1
        %s663 = scalar_select %p662, %s31, 1
        %s664 = scalar_lea.vmem %s8, %s663
        %p665 = pneg %p235
        %p666 = pneg %p232
        %p667 = scmp.lt.s32.totalorder %s31, 1
        %s668 = scalar_select %p667, %s31, 1
        %s669 = scalar_lea.vmem %s9, %s668
        %p670 = pneg %p261
        %p671 = pneg %p258
        %p672 = scmp.lt.s32.totalorder %s31, 1
        %s673 = scalar_select %p672, %s31, 1
        %s674 = scalar_lea.vmem %s10, %s673
        %p675 = pneg %p287
        %p676 = pneg %p284
        %p677 = scmp.lt.s32.totalorder %s31, 1
        %s678 = scalar_select %p677, %s31, 1
        %s679 = smul.addr %s678, 4
        %s680 = smul.addr %s679, 4
        %s681 = scalar_lea.vmem %s11, %s680
        %p682 = pneg %p313
        %p683 = pneg %p310
        %p684 = scmp.lt.s32.totalorder %s31, 1
        %s685 = scalar_select %p684, %s31, 1
        %s686 = scalar_lea.vmem %s12, %s685
        %p687 = pneg %p339
        %p688 = pneg %p336
        %p689 = scmp.lt.s32.totalorder %s31, 1
        %s690 = scalar_select %p689, %s31, 1
        %s691 = smul.addr %s690, 16
        %s692 = smul.addr %s691, 4
        %s693 = scalar_lea.vmem %s13, %s692
        %p694 = pneg %p365
        %p695 = pneg %p362
        %p696 = scmp.lt.s32.totalorder %s31, 1
        %s697 = scalar_select %p696, %s31, 1
        %s698 = scalar_lea.vmem %s14, %s697
        %p699 = pneg %p391
        %p700 = pneg %p388
        %p701 = scmp.lt.s32.totalorder %s31, 1
        %s702 = scalar_select %p701, %s31, 1
        %s703 = scalar_lea.vmem %s15, %s702
        %p704 = pneg %p417
        %p705 = pneg %p414
        %p706 = scmp.lt.s32.totalorder %s31, 1
        %s707 = scalar_select %p706, %s31, 1
        %s708 = scalar_lea.vmem %s16, %s707
        %p709 = pneg %p443
        %p710 = pneg %p440
        %p711 = pneg %p464
        %p712 = pneg %p461
        %p713 = pneg %p485
        %p714 = pneg %p482
        %p715 = pneg %p506
        %p716 = pneg %p503
        %p717 = scmp.lt.s32.totalorder %s31, 1
        %s718 = scalar_select %p717, %s31, 1
        %s719 = smul.addr %s718, 4
        %s720 = smul.addr %s719, 4
        %s721 = scalar_lea.vmem %s5, %s720
        %p722 = scmp.lt.s32.totalorder %s31, 1
        %s723 = scalar_select %p722, %s31, 1
        %s724 = scalar_lea.vmem %s6, %s723
        %p725 = scmp.lt.s32.totalorder %s31, 1
        %s726 = scalar_select %p725, %s31, 1
        %s727 = smul.addr %s726, 4
        %s728 = smul.addr %s727, 4
        %s729 = scalar_lea.vmem %s7, %s728
        %p730 = scmp.lt.s32.totalorder %s31, 1
        %s731 = scalar_select %p730, %s31, 1
        %s732 = scalar_lea.vmem %s8, %s731
        %p733 = scmp.lt.s32.totalorder %s31, 1
        %s734 = scalar_select %p733, %s31, 1
        %s735 = scalar_lea.vmem %s9, %s734
        %p736 = scmp.lt.s32.totalorder %s31, 1
        %s737 = scalar_select %p736, %s31, 1
        %s738 = scalar_lea.vmem %s10, %s737
        %p739 = scmp.lt.s32.totalorder %s31, 1
        %s740 = scalar_select %p739, %s31, 1
        %s741 = smul.addr %s740, 4
        %s742 = smul.addr %s741, 4
        %s743 = scalar_lea.vmem %s11, %s742
        %p744 = scmp.lt.s32.totalorder %s31, 1
        %s745 = scalar_select %p744, %s31, 1
        %s746 = scalar_lea.vmem %s12, %s745
        %p747 = scmp.lt.s32.totalorder %s31, 1
        %s748 = scalar_select %p747, %s31, 1
        %s749 = smul.addr %s748, 16
        %s750 = smul.addr %s749, 4
        %s751 = scalar_lea.vmem %s13, %s750
        %p752 = scmp.lt.s32.totalorder %s31, 1
        %s753 = scalar_select %p752, %s31, 1
        %s754 = scalar_lea.vmem %s14, %s753
        %p755 = scmp.lt.s32.totalorder %s31, 1
        %s756 = scalar_select %p755, %s31, 1
        %s757 = scalar_lea.vmem %s15, %s756
        %p758 = scmp.lt.s32.totalorder %s31, 1
        %s759 = scalar_select %p758, %s31, 1
        %s760 = scalar_lea.vmem %s16, %s759
        %p762 = scmp.eq.s32.totalorder %s31, 0
        // Predicated region
        $region97: #{vit_forward.1} parent=95 // pred_check
          %p763 = pneg %p762
        $region98: #{vit_forward.1} parent=95 // pred_check_branch
          %765 = sbr.rel (%p763) target = $region100
        $region99: #{vit_forward.1} parent=95 // pred_region
          %v766 = vld [vmem:[%s0] sm:$0xff]
          %v767 = vld [vmem:[%s1] sm:$0xf]
          %v768 = vld [vmem:[%s1 + $0x4] sm:$0xf]
          %v769 = vld [vmem:[%s1 + $0x8] sm:$0xf]
          %v770 = vld [vmem:[%s1 + $0xc] sm:$0xf]
          %v771 = vld [vmem:[%s1 + $0x10] sm:$0xf]
          %v772 = vld [vmem:[%s1 + $0x14] sm:$0xf]
          %v773 = vld [vmem:[%s1 + $0x18] sm:$0xf]
          %v774 = vld [vmem:[%s1 + $0x1c] sm:$0xf]
          %v775 = vld [vmem:[%s1 + $0x20] sm:$0xf]
          %v776 = vld [vmem:[%s1 + $0x24] sm:$0xf]
          %v777 = vld [vmem:[%s1 + $0x28] sm:$0xf]
          %v778 = vld [vmem:[%s1 + $0x2c] sm:$0xf]
          %v779 = vld [vmem:[%s1 + $0x30] sm:$0xf]
          %v780 = vld [vmem:[%s1 + $0x34] sm:$0xf]
          %v781 = vld [vmem:[%s1 + $0x38] sm:$0xf]
          %v782 = vld [vmem:[%s1 + $0x3c] sm:$0xf]
          %v783 = vld [vmem:[%s1 + $0x40] sm:$0xf]
          %v784 = vld [vmem:[%s1 + $0x44] sm:$0xf]
          %v785 = vld [vmem:[%s1 + $0x48] sm:$0xf]
          %v786 = vld [vmem:[%s1 + $0x4c] sm:$0xf]
          %v787 = vld [vmem:[%s1 + $0x50] sm:$0xf]
          %v788 = vld [vmem:[%s1 + $0x54] sm:$0xf]
          %v789 = vld [vmem:[%s1 + $0x58] sm:$0xf]
          %v790 = vld [vmem:[%s1 + $0x5c] sm:$0xf]
          %v791 = vld [vmem:[%s1 + $0x60] sm:$0xf]
          %v792 = vld [vmem:[%s1 + $0x64] sm:$0xf]
          %v793 = vld [vmem:[%s1 + $0x68] sm:$0xf]
          %v794 = vld [vmem:[%s1 + $0x6c] sm:$0xf]
          %v795 = vld [vmem:[%s1 + $0x70] sm:$0xf]
          %v796 = vld [vmem:[%s1 + $0x74] sm:$0xf]
          %v797 = vld [vmem:[%s1 + $0x78] sm:$0xf]
          %v798 = vld [vmem:[%s1 + $0x7c] sm:$0xf]
          %v799 = vld [vmem:[%s2] sm:$0x1]
          %v801 = vlaneseq
          %v802 = vshrl.u32 %v801, 7
          %v803 = vsub.s32 0, %v802
          %v804 = vrot.slane %v799, %v803
          %v807 = vunpack.c.l.b16 %v766
          %v808 = vunpack.c.h.b16 %v766
          %v809 = vpack.c.b16 %v807, %v807
          %v810 = vpack.c.b16 %v808, %v808
          %v845 = vunpack.c.l.b16 %v767
          %v846 = vunpack.c.l.b16 %v768
          %v847 = vunpack.c.l.b16 %v769
          %v848 = vunpack.c.l.b16 %v770
          %v849 = vunpack.c.l.b16 %v771
          %v850 = vunpack.c.l.b16 %v772
          %v851 = vunpack.c.l.b16 %v773
          %v852 = vunpack.c.l.b16 %v774
          %v853 = vunpack.c.l.b16 %v775
          %v854 = vunpack.c.l.b16 %v776
          %v855 = vunpack.c.l.b16 %v777
          %v856 = vunpack.c.l.b16 %v778
          %v857 = vunpack.c.l.b16 %v779
          %v858 = vunpack.c.l.b16 %v780
          %v859 = vunpack.c.l.b16 %v781
          %v860 = vunpack.c.l.b16 %v782
          %v861 = vunpack.c.l.b16 %v783
          %v862 = vunpack.c.l.b16 %v784
          %v863 = vunpack.c.l.b16 %v785
          %v864 = vunpack.c.l.b16 %v786
          %v865 = vunpack.c.l.b16 %v787
          %v866 = vunpack.c.l.b16 %v788
          %v867 = vunpack.c.l.b16 %v789
          %v868 = vunpack.c.l.b16 %v790
          %v869 = vunpack.c.l.b16 %v791
          %v870 = vunpack.c.l.b16 %v792
          %v871 = vunpack.c.l.b16 %v793
          %v872 = vunpack.c.l.b16 %v794
          %v873 = vunpack.c.l.b16 %v795
          %v874 = vunpack.c.l.b16 %v796
          %v875 = vunpack.c.l.b16 %v797
          %v876 = vunpack.c.l.b16 %v798
          %v877 = vpack.c.b16 %v846, %v845
          %v878 = vpack.c.b16 %v848, %v847
          %v879 = vpack.c.b16 %v850, %v849
          %v880 = vpack.c.b16 %v852, %v851
          %v881 = vpack.c.b16 %v854, %v853
          %v882 = vpack.c.b16 %v856, %v855
          %v883 = vpack.c.b16 %v858, %v857
          %v884 = vpack.c.b16 %v860, %v859
          %v885 = vpack.c.b16 %v862, %v861
          %v886 = vpack.c.b16 %v864, %v863
          %v887 = vpack.c.b16 %v866, %v865
          %v888 = vpack.c.b16 %v868, %v867
          %v889 = vpack.c.b16 %v870, %v869
          %v890 = vpack.c.b16 %v872, %v871
          %v891 = vpack.c.b16 %v874, %v873
          %v892 = vpack.c.b16 %v876, %v875
          %909 = vmatprep.subr.bf16.mxu0 0
          %910 = vmatpush1.bf16.msra.mxu0 %v884
          %911 = vmatprep.subr.bf16.mxu0 0
          %912 = vmatpush1.bf16.msra.mxu0 %v883
          %913 = vmatprep.subr.bf16.mxu0 0
          %914 = vmatpush1.bf16.msra.mxu0 %v882
          %915 = vmatprep.subr.bf16.mxu0 0
          %916 = vmatpush1.bf16.msra.mxu0 %v881
          %917 = vmatprep.subr.bf16.mxu0 0
          %918 = vmatpush1.bf16.msra.mxu0 %v880
          %919 = vmatprep.subr.bf16.mxu0 0
          %920 = vmatpush1.bf16.msra.mxu0 %v879
          %921 = vmatprep.subr.bf16.mxu0 0
          %922 = vmatpush1.bf16.msra.mxu0 %v878
          %923 = vmatprep.subr.bf16.mxu0 0
          %924 = vmatpush1.bf16.msra.mxu0 %v877
          %925 = vmatprep.subr.bf16.mxu0 0
          %926 = vmatpush2.bf16.msra.mxu0 %v892
          %927 = vmatprep.subr.bf16.mxu0 0
          %928 = vmatpush2.bf16.msra.mxu0 %v891
          %929 = vmatprep.subr.bf16.mxu0 0
          %930 = vmatpush2.bf16.msra.mxu0 %v890
          %931 = vmatprep.subr.bf16.mxu0 0
          %932 = vmatpush2.bf16.msra.mxu0 %v889
          %933 = vmatprep.subr.bf16.mxu0 0
          %934 = vmatpush2.bf16.msra.mxu0 %v888
          %935 = vmatprep.subr.bf16.mxu0 0
          %936 = vmatpush2.bf16.msra.mxu0 %v887
          %937 = vmatprep.subr.bf16.mxu0 0
          %938 = vmatpush2.bf16.msra.mxu0 %v886
          %939 = vmatprep.subr.bf16.mxu0 0
          %940 = vmatpush2.bf16.msra.mxu0 %v885
          %941 = vmatprep.mubr.bf16.mxu0 %v810
          %942 = vmatmul.mubr.bf16.gmra.mxu0 %v809
          %v943 = vpop.f32.mrf.mxu0
          %v944 = vadd.f32 %v804, %v943
          %v945 = vpop.f32.mrf.mxu0
          %v946 = vpop.f32.mrf.mxu0
          %v947 = vpop.f32.mrf.mxu0
          %948 = vdwg.mxu0
          %v949 = vld [vmem:[%s3] sm:$0x1]
          %v951 = vlaneseq
          %v952 = vshrl.u32 %v951, 7
          %v953 = vsub.s32 0, %v952
          %v954 = vrot.slane %v949, %v953
          %v957 = vrot.slane %v944, 6
          %vm959 = vcmask 1041408
          %v960 = vsel %vm959, %v954, %v957
          %v961 = vsel %vm959, %v957, 0.0
          %v964 = vcombine.high %v960, %v960
          %v966 = vunpack.c.l.s4 1983009808
          %v967 = vunpack.c.0.s8 %v966
          %v968 = vlaneseq
          %v969 = vshrl.u32 %v968, 7
          %v970 = vsub.s32 %v967, %v969
          %v971 = vrot.slane %v960, %v970
          %v973 = vunpack.c.l.s4 1983009808
          %v974 = vunpack.c.0.s8 %v973
          %v975 = vlaneseq
          %v976 = vshrl.u32 %v975, 7
          %v977 = vsub.s32 %v974, %v976
          %v978 = vrot.slane %v964, %v977
          %v979 = vcombine.high %v971, %v971
          %v980 = vcombine.high %v978, %v978
          %v981 = vcombine.high %v961, %v961
          %v983 = vunpack.c.l.s4 1983009808
          %v984 = vunpack.c.0.s8 %v983
          %v985 = vlaneseq
          %v986 = vshrl.u32 %v985, 7
          %v987 = vsub.s32 %v984, %v986
          %v988 = vrot.slane %v961, %v987
          %v990 = vunpack.c.l.s4 1983009808
          %v991 = vunpack.c.0.s8 %v990
          %v992 = vlaneseq
          %v993 = vshrl.u32 %v992, 7
          %v994 = vsub.s32 %v991, %v993
          %v995 = vrot.slane %v981, %v994
          %v996 = vcombine.high %v988, %v988
          %v997 = vcombine.high %v995, %v995
          %v1006 = vld [vmem:[%s4] sm:$0xff]
          %v1008 = vcombine.high %v1006, %v1006
          %v1010 = vunpack.c.l.s4 1966171168
          %v1011 = vunpack.c.0.s8 %v1010
          %v1012 = vlaneseq
          %v1013 = vshrl.u32 %v1012, 7
          %v1014 = vsub.s32 %v1011, %v1013
          %v1015 = vrot.slane %v1006, %v1014
          %v1017 = vunpack.c.l.s4 1966171168
          %v1018 = vunpack.c.0.s8 %v1017
          %v1019 = vlaneseq
          %v1020 = vshrl.u32 %v1019, 7
          %v1021 = vsub.s32 %v1018, %v1020
          %v1022 = vrot.slane %v1008, %v1021
          %v1023 = vcombine.high %v1015, %v1015
          %v1024 = vcombine.high %v1022, %v1022
          %v1026 = vunpack.c.l.s4 1966171168
          %v1027 = vunpack.c.0.s8 %v1026
          %v1028 = vlaneseq
          %v1029 = vshrl.u32 %v1028, 7
          %v1030 = vsub.s32 %v1027, %v1029
          %v1031 = vrot.slane %v1015, %v1030
          %v1033 = vunpack.c.l.s4 1966171168
          %v1034 = vunpack.c.0.s8 %v1033
          %v1035 = vlaneseq
          %v1036 = vshrl.u32 %v1035, 7
          %v1037 = vsub.s32 %v1034, %v1036
          %v1038 = vrot.slane %v1022, %v1037
          %v1040 = vunpack.c.l.s4 1966171168
          %v1041 = vunpack.c.0.s8 %v1040
          %v1042 = vlaneseq
          %v1043 = vshrl.u32 %v1042, 7
          %v1044 = vsub.s32 %v1041, %v1043
          %v1045 = vrot.slane %v1023, %v1044
          %v1047 = vunpack.c.l.s4 1966171168
          %v1048 = vunpack.c.0.s8 %v1047
          %v1049 = vlaneseq
          %v1050 = vshrl.u32 %v1049, 7
          %v1051 = vsub.s32 %v1048, %v1050
          %v1052 = vrot.slane %v1024, %v1051
          %v1053 = vcombine.high %v1031, %v1031
          %v1054 = vcombine.high %v1038, %v1038
          %v1055 = vcombine.high %v1045, %v1045
          %v1056 = vcombine.high %v1052, %v1052
          %v1057 = vlaneseq
          %v1058 = vshrl.u32 %v1057, 7
          %v1059 = vsub.s32 0, %v1058
          %v1060 = vrot.slane %v1031, %v1059
          %v1061 = vlaneseq
          %v1062 = vshrl.u32 %v1061, 7
          %v1063 = vsub.s32 0, %v1062
          %v1064 = vrot.slane %v1045, %v1063
          %v1065 = vlaneseq
          %v1066 = vshrl.u32 %v1065, 7
          %v1067 = vsub.s32 0, %v1066
          %v1068 = vrot.slane %v1053, %v1067
          %v1069 = vlaneseq
          %v1070 = vshrl.u32 %v1069, 7
          %v1071 = vsub.s32 0, %v1070
          %v1072 = vrot.slane %v1055, %v1071
          %v1073 = vlaneseq
          %v1074 = vshrl.u32 %v1073, 7
          %v1075 = vsub.s32 0, %v1074
          %v1076 = vrot.slane %v1038, %v1075
          %v1077 = vlaneseq
          %v1078 = vshrl.u32 %v1077, 7
          %v1079 = vsub.s32 0, %v1078
          %v1080 = vrot.slane %v1052, %v1079
          %v1081 = vlaneseq
          %v1082 = vshrl.u32 %v1081, 7
          %v1083 = vsub.s32 0, %v1082
          %v1084 = vrot.slane %v1054, %v1083
          %v1085 = vlaneseq
          %v1086 = vshrl.u32 %v1085, 7
          %v1087 = vsub.s32 0, %v1086
          %v1088 = vrot.slane %v1056, %v1087
          %v1097 = vadd.f32 %v971, %v1060
          %v1098 = vadd.f32 %v979, %v1064
          %v1099 = vadd.f32 %v978, %v1068
          %v1100 = vadd.f32 %v980, %v1072
          %v1101 = vadd.f32 %v988, %v1076
          %v1102 = vadd.f32 %v996, %v1080
          %v1103 = vadd.f32 %v995, %v1084
          %v1104 = vadd.f32 %v997, %v1088
          %v1113 = vcombine.low %v1097, %v1098
          %v1114 = vcombine.low %v1099, %v1100
          %v1116 = vunpack.c.l.s4 1983009808
          %v1117 = vunpack.c.0.s8 %v1116
          %v1118 = vlaneseq
          %v1119 = vshrl.u32 %v1118, 7
          %v1120 = vsub.s32 %v1117, %v1119
          %v1121 = vrot.slane %v1113, %v1120
          %v1123 = vunpack.c.l.s4 1983009808
          %v1124 = vunpack.c.0.s8 %v1123
          %v1125 = vlaneseq
          %v1126 = vshrl.u32 %v1125, 7
          %v1127 = vsub.s32 %v1124, %v1126
          %v1128 = vrot.slane %v1114, %v1127
          %v1129 = vcombine.low %v1121, %v1128
          %v1130 = vcombine.low %v1101, %v1102
          %v1131 = vcombine.low %v1103, %v1104
          %v1133 = vunpack.c.l.s4 1983009808
          %v1134 = vunpack.c.0.s8 %v1133
          %v1135 = vlaneseq
          %v1136 = vshrl.u32 %v1135, 7
          %v1137 = vsub.s32 %v1134, %v1136
          %v1138 = vrot.slane %v1130, %v1137
          %v1140 = vunpack.c.l.s4 1983009808
          %v1141 = vunpack.c.0.s8 %v1140
          %v1142 = vlaneseq
          %v1143 = vshrl.u32 %v1142, 7
          %v1144 = vsub.s32 %v1141, %v1143
          %v1145 = vrot.slane %v1131, %v1144
          %v1146 = vcombine.low %v1138, %v1145
          %vm1149 = vcmask 261120
          %1150 = vst.msk [vmem:[#allocation2] sm:$0xff] %vm1149, %v1129
          %1151 = vst.msk [vmem:[#allocation2 + $0x8] sm:$0xff] %vm1149, %v1146
        $region100: #{vit_forward.1} parent=95 // pred_fallthru
          _
        %v1152 = vld [vmem:[#allocation2] sm:$0xff]
        %v1153 = vld [vmem:[#allocation2 + $0x8] sm:$0xff]
        %v1154 = vpack.c.bf16 %v1153, %v1152
        %v1155 = vld [vmem:[%s721] sm:$0xf]
        %v1156 = vld [vmem:[%s721 + $0x4] sm:$0xf]
        %v1157 = vld [vmem:[%s721 + $0x8] sm:$0xf]
        %v1158 = vld [vmem:[%s721 + $0xc] sm:$0xf]
        %v1159 = vld [vmem:[%s724] sm:$0x1]
        %v1161 = vlaneseq
        %v1162 = vshrl.u32 %v1161, 7
        %v1163 = vsub.s32 0, %v1162
        %v1164 = vrot.slane %v1159, %v1163
        %v1170 = vunpack.c.l.b16 %v1155
        %v1171 = vunpack.c.l.b16 %v1156
        %v1172 = vunpack.c.l.b16 %v1157
        %v1173 = vunpack.c.l.b16 %v1158
        %v1174 = vpack.c.b16 %v1171, %v1170
        %v1175 = vpack.c.b16 %v1173, %v1172
        %vm1178 = vcmask 261120
        %v1180 = vsel %vm1178, %v1154, 0
        %1182 = vmatprep.subr.bf16.mxu0 0
        %1183 = vmatpush1.bf16.msra.mxu0 0
        %1184 = vmatprep.subr.bf16.mxu0 0
        %1185 = vmatpush1.bf16.msra.mxu0 0
        %1186 = vmatprep.subr.bf16.mxu0 0
        %1187 = vmatpush1.bf16.msra.mxu0 0
        %1188 = vmatprep.subr.bf16.mxu0 0
        %1189 = vmatpush1.bf16.msra.mxu0 0
        %1190 = vmatprep.subr.bf16.mxu0 0
        %1191 = vmatpush1.bf16.msra.mxu0 0
        %1192 = vmatprep.subr.bf16.mxu0 0
        %1193 = vmatpush1.bf16.msra.mxu0 0
        %1194 = vmatprep.subr.bf16.mxu0 0
        %1195 = vmatpush1.bf16.msra.mxu0 %v1175
        %1196 = vmatprep.subr.bf16.mxu0 0
        %1197 = vmatpush1.bf16.msra.mxu0 %v1174
        %1198 = vmatprep.subr.bf16.mxu0 0
        %1199 = vmatpush2.bf16.msra.mxu0 0
        %1200 = vmatprep.subr.bf16.mxu0 0
        %1201 = vmatpush2.bf16.msra.mxu0 0
        %1202 = vmatprep.subr.bf16.mxu0 0
        %1203 = vmatpush2.bf16.msra.mxu0 0
        %1204 = vmatprep.subr.bf16.mxu0 0
        %1205 = vmatpush2.bf16.msra.mxu0 0
        %1206 = vmatprep.subr.bf16.mxu0 0
        %1207 = vmatpush2.bf16.msra.mxu0 0
        %1208 = vmatprep.subr.bf16.mxu0 0
        %1209 = vmatpush2.bf16.msra.mxu0 0
        %1210 = vmatprep.subr.bf16.mxu0 0
        %1211 = vmatpush2.bf16.msra.mxu0 0
        %1212 = vmatprep.subr.bf16.mxu0 0
        %1213 = vmatpush2.bf16.msra.mxu0 0
        %1214 = vmatprep.mubr.bf16.mxu0 0
        %1215 = vmatmul.mubr.bf16.gmra.mxu0 %v1180
        %v1216 = vpop.f32.mrf.mxu0
        %v1217 = vadd.f32 %v1164, %v1216
        %v1218 = vpop.f32.mrf.mxu0
        %v1219 = vpop.f32.mrf.mxu0
        %v1220 = vadd.f32 %v1164, %v1219
        %v1221 = vpop.f32.mrf.mxu0
        %1222 = vdwg.mxu0
        %v1225 = vcombine.high %v1217, %v1217
        %v1227 = vunpack.c.l.s4 1983009808
        %v1228 = vunpack.c.0.s8 %v1227
        %v1229 = vlaneseq
        %v1230 = vshrl.u32 %v1229, 7
        %v1231 = vsub.s32 %v1228, %v1230
        %v1232 = vrot.slane %v1217, %v1231
        %v1234 = vunpack.c.l.s4 1983009808
        %v1235 = vunpack.c.0.s8 %v1234
        %v1236 = vlaneseq
        %v1237 = vshrl.u32 %v1236, 7
        %v1238 = vsub.s32 %v1235, %v1237
        %v1239 = vrot.slane %v1225, %v1238
        %v1240 = vcombine.high %v1232, %v1232
        %v1241 = vcombine.high %v1239, %v1239
        %v1242 = vcombine.high %v1220, %v1220
        %v1244 = vunpack.c.l.s4 1983009808
        %v1245 = vunpack.c.0.s8 %v1244
        %v1246 = vlaneseq
        %v1247 = vshrl.u32 %v1246, 7
        %v1248 = vsub.s32 %v1245, %v1247
        %v1249 = vrot.slane %v1220, %v1248
        %v1251 = vunpack.c.l.s4 1983009808
        %v1252 = vunpack.c.0.s8 %v1251
        %v1253 = vlaneseq
        %v1254 = vshrl.u32 %v1253, 7
        %v1255 = vsub.s32 %v1252, %v1254
        %v1256 = vrot.slane %v1242, %v1255
        %v1257 = vcombine.high %v1249, %v1249
        %v1258 = vcombine.high %v1256, %v1256
        %1267 = vrot.lane.b32.xlu0 %v1232, 120
        %v1268 = vpop.permute.xlu0 %1267
        %1269 = vrot.lane.b32.xlu0 %v1240, 120
        %v1270 = vpop.permute.xlu0 %1269
        %1271 = vrot.lane.b32.xlu0 %v1239, 120
        %v1272 = vpop.permute.xlu0 %1271
        %1273 = vrot.lane.b32.xlu0 %v1241, 120
        %v1274 = vpop.permute.xlu0 %1273
        %1275 = vrot.lane.b32.xlu0 %v1249, 120
        %v1276 = vpop.permute.xlu0 %1275
        %1277 = vrot.lane.b32.xlu0 %v1257, 120
        %v1278 = vpop.permute.xlu0 %1277
        %1279 = vrot.lane.b32.xlu0 %v1256, 120
        %v1280 = vpop.permute.xlu0 %1279
        %1281 = vrot.lane.b32.xlu0 %v1258, 120
        %v1282 = vpop.permute.xlu0 %1281
        %1291 = vrot.lane.b32.xlu0 %v1232, 112
        %v1292 = vpop.permute.xlu0 %1291
        %1293 = vrot.lane.b32.xlu0 %v1240, 112
        %v1294 = vpop.permute.xlu0 %1293
        %1295 = vrot.lane.b32.xlu0 %v1239, 112
        %v1296 = vpop.permute.xlu0 %1295
        %1297 = vrot.lane.b32.xlu0 %v1241, 112
        %v1298 = vpop.permute.xlu0 %1297
        %1299 = vrot.lane.b32.xlu0 %v1249, 112
        %v1300 = vpop.permute.xlu0 %1299
        %1301 = vrot.lane.b32.xlu0 %v1257, 112
        %v1302 = vpop.permute.xlu0 %1301
        %1303 = vrot.lane.b32.xlu0 %v1256, 112
        %v1304 = vpop.permute.xlu0 %1303
        %1305 = vrot.lane.b32.xlu0 %v1258, 112
        %v1306 = vpop.permute.xlu0 %1305
        %1315 = vrot.lane.b32.xlu0 %v1232, 104
        %v1316 = vpop.permute.xlu0 %1315
        %1317 = vrot.lane.b32.xlu0 %v1240, 104
        %v1318 = vpop.permute.xlu0 %1317
        %1319 = vrot.lane.b32.xlu0 %v1239, 104
        %v1320 = vpop.permute.xlu0 %1319
        %1321 = vrot.lane.b32.xlu0 %v1241, 104
        %v1322 = vpop.permute.xlu0 %1321
        %1323 = vrot.lane.b32.xlu0 %v1249, 104
        %v1324 = vpop.permute.xlu0 %1323
        %1325 = vrot.lane.b32.xlu0 %v1257, 104
        %v1326 = vpop.permute.xlu0 %1325
        %1327 = vrot.lane.b32.xlu0 %v1256, 104
        %v1328 = vpop.permute.xlu0 %1327
        %1329 = vrot.lane.b32.xlu0 %v1258, 104
        %v1330 = vpop.permute.xlu0 %1329
        %v1339 = vpack.c.bf16 %v1232, %v1232
        %v1340 = vpack.c.bf16 %v1240, %v1240
        %v1341 = vpack.c.bf16 %v1239, %v1239
        %v1342 = vpack.c.bf16 %v1241, %v1241
        %v1343 = vpack.c.bf16 %v1249, %v1249
        %v1344 = vpack.c.bf16 %v1257, %v1257
        %v1345 = vpack.c.bf16 %v1256, %v1256
        %v1346 = vpack.c.bf16 %v1258, %v1258
        %v1347 = vpack.c.bf16 %v1268, %v1268
        %v1348 = vpack.c.bf16 %v1270, %v1270
        %v1349 = vpack.c.bf16 %v1272, %v1272
        %v1350 = vpack.c.bf16 %v1274, %v1274
        %v1351 = vpack.c.bf16 %v1276, %v1276
        %v1352 = vpack.c.bf16 %v1278, %v1278
        %v1353 = vpack.c.bf16 %v1280, %v1280
        %v1354 = vpack.c.bf16 %v1282, %v1282
        %v1355 = vpack.c.bf16 %v1292, %v1292
        %v1356 = vpack.c.bf16 %v1294, %v1294
        %v1357 = vpack.c.bf16 %v1296, %v1296
        %v1358 = vpack.c.bf16 %v1298, %v1298
        %v1359 = vpack.c.bf16 %v1300, %v1300
        %v1360 = vpack.c.bf16 %v1302, %v1302
        %v1361 = vpack.c.bf16 %v1304, %v1304
        %v1362 = vpack.c.bf16 %v1306, %v1306
        %v1363 = vpack.c.bf16 %v1316, %v1316
        %v1364 = vpack.c.bf16 %v1318, %v1318
        %v1365 = vpack.c.bf16 %v1320, %v1320
        %v1366 = vpack.c.bf16 %v1322, %v1322
        %v1367 = vpack.c.bf16 %v1324, %v1324
        %v1368 = vpack.c.bf16 %v1326, %v1326
        %v1369 = vpack.c.bf16 %v1328, %v1328
        %v1370 = vpack.c.bf16 %v1330, %v1330
        %1372 = vrot.lane.b32.xlu0 %v1339, 96
        %v1373 = vpop.permute.xlu0 %1372
        %vm1374 = vcmask 64512
        %v1376 = vsel %vm1374, %v1339, 0
        %v1379 = vsel %vm1374, %v1373, 0
        %1381 = vmatprep.subr.bf16.mxu0 0
        %1382 = vmatpush1.bf16.xpose.msra.mxu0 0
        %1383 = vmatprep.subr.bf16.mxu0 0
        %1384 = vmatpush1.bf16.xpose.msra.mxu0 0
        %1385 = vmatprep.subr.bf16.mxu0 0
        %1386 = vmatpush1.bf16.xpose.msra.mxu0 0
        %1387 = vmatprep.subr.bf16.mxu0 0
        %1388 = vmatpush1.bf16.xpose.msra.mxu0 0
        %1389 = vmatprep.subr.bf16.mxu0 0
        %1390 = vmatpush1.bf16.xpose.msra.mxu0 0
        %1391 = vmatprep.subr.bf16.mxu0 0
        %1392 = vmatpush1.bf16.xpose.msra.mxu0 0
        %1393 = vmatprep.subr.bf16.mxu0 0
        %1394 = vmatpush1.bf16.xpose.msra.mxu0 0
        %1395 = vmatprep.subr.bf16.mxu0 0
        %1396 = vmatpush1.bf16.xpose.msra.mxu0 %v1379
        %1397 = vmatprep.subr.bf16.mxu0 0
        %1398 = vmatpush2.bf16.xpose.msra.mxu0 0
        %1399 = vmatprep.subr.bf16.mxu0 0
        %1400 = vmatpush2.bf16.xpose.msra.mxu0 0
        %1401 = vmatprep.subr.bf16.mxu0 0
        %1402 = vmatpush2.bf16.xpose.msra.mxu0 0
        %1403 = vmatprep.subr.bf16.mxu0 0
        %1404 = vmatpush2.bf16.xpose.msra.mxu0 0
        %1405 = vmatprep.subr.bf16.mxu0 0
        %1406 = vmatpush2.bf16.xpose.msra.mxu0 0
        %1407 = vmatprep.subr.bf16.mxu0 0
        %1408 = vmatpush2.bf16.xpose.msra.mxu0 0
        %1409 = vmatprep.subr.bf16.mxu0 0
        %1410 = vmatpush2.bf16.xpose.msra.mxu0 0
        %1411 = vmatprep.subr.bf16.mxu0 0
        %1412 = vmatpush2.bf16.xpose.msra.mxu0 0
        %1413 = vmatprep.mubr.bf16.mxu0 0
        %1414 = vmatmul.mubr.bf16.gmra.mxu0 %v1376
        %v1415 = vpop.f32.mrf.mxu0
        %v1416 = vadd.f32 0.0, %v1415
        %v1417 = vpop.f32.mrf.mxu0
        %v1418 = vpop.f32.mrf.mxu0
        %v1419 = vpop.f32.mrf.mxu0
        %1420 = vdwg.mxu0
        %1422 = vrot.lane.b32.xlu0 %v1340, 96
        %v1423 = vpop.permute.xlu0 %1422
        %v1425 = vsel %vm1374, %v1340, 0
        %v1428 = vsel %vm1374, %v1423, 0
        %1430 = vmatprep.subr.bf16.mxu0 0
        %1431 = vmatpush1.bf16.xpose.msra.mxu0 0
        %1432 = vmatprep.subr.bf16.mxu0 0
        %1433 = vmatpush1.bf16.xpose.msra.mxu0 0
        %1434 = vmatprep.subr.bf16.mxu0 0
        %1435 = vmatpush1.bf16.xpose.msra.mxu0 0
        %1436 = vmatprep.subr.bf16.mxu0 0
        %1437 = vmatpush1.bf16.xpose.msra.mxu0 0
        %1438 = vmatprep.subr.bf16.mxu0 0
        %1439 = vmatpush1.bf16.xpose.msra.mxu0 0
        %1440 = vmatprep.subr.bf16.mxu0 0
        %1441 = vmatpush1.bf16.xpose.msra.mxu0 0
        %1442 = vmatprep.subr.bf16.mxu0 0
        %1443 = vmatpush1.bf16.xpose.msra.mxu0 0
        %1444 = vmatprep.subr.bf16.mxu0 0
        %1445 = vmatpush1.bf16.xpose.msra.mxu0 %v1428
        %1446 = vmatprep.subr.bf16.mxu0 0
        %1447 = vmatpush2.bf16.xpose.msra.mxu0 0
        %1448 = vmatprep.subr.bf16.mxu0 0
        %1449 = vmatpush2.bf16.xpose.msra.mxu0 0
        %1450 = vmatprep.subr.bf16.mxu0 0
        %1451 = vmatpush2.bf16.xpose.msra.mxu0 0
        %1452 = vmatprep.subr.bf16.mxu0 0
        %1453 = vmatpush2.bf16.xpose.msra.mxu0 0
        %1454 = vmatprep.subr.bf16.mxu0 0
        %1455 = vmatpush2.bf16.xpose.msra.mxu0 0
        %1456 = vmatprep.subr.bf16.mxu0 0
        %1457 = vmatpush2.bf16.xpose.msra.mxu0 0
        %1458 = vmatprep.subr.bf16.mxu0 0
        %1459 = vmatpush2.bf16.xpose.msra.mxu0 0
        %1460 = vmatprep.subr.bf16.mxu0 0
        %1461 = vmatpush2.bf16.xpose.msra.mxu0 0
        %1462 = vmatprep.mubr.bf16.mxu0 0
        %1463 = vmatmul.mubr.bf16.gmra.mxu0 %v1425
        %v1464 = vpop.f32.mrf.mxu0
        %v1465 = vadd.f32 0.0, %v1464
        %v1466 = vpop.f32.mrf.mxu0
        %v1467 = vpop.f32.mrf.mxu0
        %v1468 = vpop.f32.mrf.mxu0
        %1469 = vdwg.mxu0
        %1471 = vrot.lane.b32.xlu0 %v1341, 96
        %v1472 = vpop.permute.xlu0 %1471
        %v1474 = vsel %vm1374, %v1341, 0
        %v1477 = vsel %vm1374, %v1472, 0
        %1479 = vmatprep.subr.bf16.mxu0 0
        %1480 = vmatpush1.bf16.xpose.msra.mxu0 0
        %1481 = vmatprep.subr.bf16.mxu0 0
        %1482 = vmatpush1.bf16.xpose.msra.mxu0 0
        %1483 = vmatprep.subr.bf16.mxu0 0
        %1484 = vmatpush1.bf16.xpose.msra.mxu0 0
        %1485 = vmatprep.subr.bf16.mxu0 0
        %1486 = vmatpush1.bf16.xpose.msra.mxu0 0
        %1487 = vmatprep.subr.bf16.mxu0 0
        %1488 = vmatpush1.bf16.xpose.msra.mxu0 0
        %1489 = vmatprep.subr.bf16.mxu0 0
        %1490 = vmatpush1.bf16.xpose.msra.mxu0 0
        %1491 = vmatprep.subr.bf16.mxu0 0
        %1492 = vmatpush1.bf16.xpose.msra.mxu0 0
        %1493 = vmatprep.subr.bf16.mxu0 0
        %1494 = vmatpush1.bf16.xpose.msra.mxu0 %v1477
        %1495 = vmatprep.subr.bf16.mxu0 0
        %1496 = vmatpush2.bf16.xpose.msra.mxu0 0
        %1497 = vmatprep.subr.bf16.mxu0 0
        %1498 = vmatpush2.bf16.xpose.msra.mxu0 0
        %1499 = vmatprep.subr.bf16.mxu0 0
        %1500 = vmatpush2.bf16.xpose.msra.mxu0 0
        %1501 = vmatprep.subr.bf16.mxu0 0
        %1502 = vmatpush2.bf16.xpose.msra.mxu0 0
        %1503 = vmatprep.subr.bf16.mxu0 0
        %1504 = vmatpush2.bf16.xpose.msra.mxu0 0
        %1505 = vmatprep.subr.bf16.mxu0 0
        %1506 = vmatpush2.bf16.xpose.msra.mxu0 0
        %1507 = vmatprep.subr.bf16.mxu0 0
        %1508 = vmatpush2.bf16.xpose.msra.mxu0 0
        %1509 = vmatprep.subr.bf16.mxu0 0
        %1510 = vmatpush2.bf16.xpose.msra.mxu0 0
        %1511 = vmatprep.mubr.bf16.mxu0 0
        %1512 = vmatmul.mubr.bf16.gmra.mxu0 %v1474
        %v1513 = vpop.f32.mrf.mxu0
        %v1514 = vadd.f32 0.0, %v1513
        %v1515 = vpop.f32.mrf.mxu0
        %v1516 = vpop.f32.mrf.mxu0
        %v1517 = vpop.f32.mrf.mxu0
        %1518 = vdwg.mxu0
        %1520 = vrot.lane.b32.xlu0 %v1342, 96
        %v1521 = vpop.permute.xlu0 %1520
        %v1523 = vsel %vm1374, %v1342, 0
        %v1526 = vsel %vm1374, %v1521, 0
        %1528 = vmatprep.subr.bf16.mxu0 0
        %1529 = vmatpush1.bf16.xpose.msra.mxu0 0
        %1530 = vmatprep.subr.bf16.mxu0 0
        %1531 = vmatpush1.bf16.xpose.msra.mxu0 0
        %1532 = vmatprep.subr.bf16.mxu0 0
        %1533 = vmatpush1.bf16.xpose.msra.mxu0 0
        %1534 = vmatprep.subr.bf16.mxu0 0
        %1535 = vmatpush1.bf16.xpose.msra.mxu0 0
        %1536 = vmatprep.subr.bf16.mxu0 0
        %1537 = vmatpush1.bf16.xpose.msra.mxu0 0
        %1538 = vmatprep.subr.bf16.mxu0 0
        %1539 = vmatpush1.bf16.xpose.msra.mxu0 0
        %1540 = vmatprep.subr.bf16.mxu0 0
        %1541 = vmatpush1.bf16.xpose.msra.mxu0 0
        %1542 = vmatprep.subr.bf16.mxu0 0
        %1543 = vmatpush1.bf16.xpose.msra.mxu0 %v1526
        %1544 = vmatprep.subr.bf16.mxu0 0
        %1545 = vmatpush2.bf16.xpose.msra.mxu0 0
        %1546 = vmatprep.subr.bf16.mxu0 0
        %1547 = vmatpush2.bf16.xpose.msra.mxu0 0
        %1548 = vmatprep.subr.bf16.mxu0 0
        %1549 = vmatpush2.bf16.xpose.msra.mxu0 0
        %1550 = vmatprep.subr.bf16.mxu0 0
        %1551 = vmatpush2.bf16.xpose.msra.mxu0 0
        %1552 = vmatprep.subr.bf16.mxu0 0
        %1553 = vmatpush2.bf16.xpose.msra.mxu0 0
        %1554 = vmatprep.subr.bf16.mxu0 0
        %1555 = vmatpush2.bf16.xpose.msra.mxu0 0
        %1556 = vmatprep.subr.bf16.mxu0 0
        %1557 = vmatpush2.bf16.xpose.msra.mxu0 0
        %1558 = vmatprep.subr.bf16.mxu0 0
        %1559 = vmatpush2.bf16.xpose.msra.mxu0 0
        %1560 = vmatprep.mubr.bf16.mxu0 0
        %1561 = vmatmul.mubr.bf16.gmra.mxu0 %v1523
        %v1562 = vpop.f32.mrf.mxu0
        %v1563 = vadd.f32 0.0, %v1562
        %v1564 = vpop.f32.mrf.mxu0
        %v1565 = vpop.f32.mrf.mxu0
        %v1566 = vpop.f32.mrf.mxu0
        %1567 = vdwg.mxu0
        %1569 = vrot.lane.b32.xlu0 %v1343, 96
        %v1570 = vpop.permute.xlu0 %1569
        %v1572 = vsel %vm1374, %v1343, 0
        %v1575 = vsel %vm1374, %v1570, 0
        %1577 = vmatprep.subr.bf16.mxu0 0
        %1578 = vmatpush1.bf16.xpose.msra.mxu0 0
        %1579 = vmatprep.subr.bf16.mxu0 0
        %1580 = vmatpush1.bf16.xpose.msra.mxu0 0
        %1581 = vmatprep.subr.bf16.mxu0 0
        %1582 = vmatpush1.bf16.xpose.msra.mxu0 0
        %1583 = vmatprep.subr.bf16.mxu0 0
        %1584 = vmatpush1.bf16.xpose.msra.mxu0 0
        %1585 = vmatprep.subr.bf16.mxu0 0
        %1586 = vmatpush1.bf16.xpose.msra.mxu0 0
        %1587 = vmatprep.subr.bf16.mxu0 0
        %1588 = vmatpush1.bf16.xpose.msra.mxu0 0
        %1589 = vmatprep.subr.bf16.mxu0 0
        %1590 = vmatpush1.bf16.xpose.msra.mxu0 0
        %1591 = vmatprep.subr.bf16.mxu0 0
        %1592 = vmatpush1.bf16.xpose.msra.mxu0 %v1575
        %1593 = vmatprep.subr.bf16.mxu0 0
        %1594 = vmatpush2.bf16.xpose.msra.mxu0 0
        %1595 = vmatprep.subr.bf16.mxu0 0
        %1596 = vmatpush2.bf16.xpose.msra.mxu0 0
        %1597 = vmatprep.subr.bf16.mxu0 0
        %1598 = vmatpush2.bf16.xpose.msra.mxu0 0
        %1599 = vmatprep.subr.bf16.mxu0 0
        %1600 = vmatpush2.bf16.xpose.msra.mxu0 0
        %1601 = vmatprep.subr.bf16.mxu0 0
        %1602 = vmatpush2.bf16.xpose.msra.mxu0 0
        %1603 = vmatprep.subr.bf16.mxu0 0
        %1604 = vmatpush2.bf16.xpose.msra.mxu0 0
        %1605 = vmatprep.subr.bf16.mxu0 0
        %1606 = vmatpush2.bf16.xpose.msra.mxu0 0
        %1607 = vmatprep.subr.bf16.mxu0 0
        %1608 = vmatpush2.bf16.xpose.msra.mxu0 0
        %1609 = vmatprep.mubr.bf16.mxu0 0
        %1610 = vmatmul.mubr.bf16.gmra.mxu0 %v1572
        %v1611 = vpop.f32.mrf.mxu0
        %v1612 = vadd.f32 0.0, %v1611
        %v1613 = vpop.f32.mrf.mxu0
        %v1614 = vpop.f32.mrf.mxu0
        %v1615 = vpop.f32.mrf.mxu0
        %1616 = vdwg.mxu0
        %1618 = vrot.lane.b32.xlu0 %v1344, 96
        %v1619 = vpop.permute.xlu0 %1618
        %v1621 = vsel %vm1374, %v1344, 0
        %v1624 = vsel %vm1374, %v1619, 0
        %1626 = vmatprep.subr.bf16.mxu0 0
        %1627 = vmatpush1.bf16.xpose.msra.mxu0 0
        %1628 = vmatprep.subr.bf16.mxu0 0
        %1629 = vmatpush1.bf16.xpose.msra.mxu0 0
        %1630 = vmatprep.subr.bf16.mxu0 0
        %1631 = vmatpush1.bf16.xpose.msra.mxu0 0
        %1632 = vmatprep.subr.bf16.mxu0 0
        %1633 = vmatpush1.bf16.xpose.msra.mxu0 0
        %1634 = vmatprep.subr.bf16.mxu0 0
        %1635 = vmatpush1.bf16.xpose.msra.mxu0 0
        %1636 = vmatprep.subr.bf16.mxu0 0
        %1637 = vmatpush1.bf16.xpose.msra.mxu0 0
        %1638 = vmatprep.subr.bf16.mxu0 0
        %1639 = vmatpush1.bf16.xpose.msra.mxu0 0
        %1640 = vmatprep.subr.bf16.mxu0 0
        %1641 = vmatpush1.bf16.xpose.msra.mxu0 %v1624
        %1642 = vmatprep.subr.bf16.mxu0 0
        %1643 = vmatpush2.bf16.xpose.msra.mxu0 0
        %1644 = vmatprep.subr.bf16.mxu0 0
        %1645 = vmatpush2.bf16.xpose.msra.mxu0 0
        %1646 = vmatprep.subr.bf16.mxu0 0
        %1647 = vmatpush2.bf16.xpose.msra.mxu0 0
        %1648 = vmatprep.subr.bf16.mxu0 0
        %1649 = vmatpush2.bf16.xpose.msra.mxu0 0
        %1650 = vmatprep.subr.bf16.mxu0 0
        %1651 = vmatpush2.bf16.xpose.msra.mxu0 0
        %1652 = vmatprep.subr.bf16.mxu0 0
        %1653 = vmatpush2.bf16.xpose.msra.mxu0 0
        %1654 = vmatprep.subr.bf16.mxu0 0
        %1655 = vmatpush2.bf16.xpose.msra.mxu0 0
        %1656 = vmatprep.subr.bf16.mxu0 0
        %1657 = vmatpush2.bf16.xpose.msra.mxu0 0
        %1658 = vmatprep.mubr.bf16.mxu0 0
        %1659 = vmatmul.mubr.bf16.gmra.mxu0 %v1621
        %v1660 = vpop.f32.mrf.mxu0
        %v1661 = vadd.f32 0.0, %v1660
        %v1662 = vpop.f32.mrf.mxu0
        %v1663 = vpop.f32.mrf.mxu0
        %v1664 = vpop.f32.mrf.mxu0
        %1665 = vdwg.mxu0
        %1667 = vrot.lane.b32.xlu0 %v1345, 96
        %v1668 = vpop.permute.xlu0 %1667
        %v1670 = vsel %vm1374, %v1345, 0
        %v1673 = vsel %vm1374, %v1668, 0
        %1675 = vmatprep.subr.bf16.mxu0 0
        %1676 = vmatpush1.bf16.xpose.msra.mxu0 0
        %1677 = vmatprep.subr.bf16.mxu0 0
        %1678 = vmatpush1.bf16.xpose.msra.mxu0 0
        %1679 = vmatprep.subr.bf16.mxu0 0
        %1680 = vmatpush1.bf16.xpose.msra.mxu0 0
        %1681 = vmatprep.subr.bf16.mxu0 0
        %1682 = vmatpush1.bf16.xpose.msra.mxu0 0
        %1683 = vmatprep.subr.bf16.mxu0 0
        %1684 = vmatpush1.bf16.xpose.msra.mxu0 0
        %1685 = vmatprep.subr.bf16.mxu0 0
        %1686 = vmatpush1.bf16.xpose.msra.mxu0 0
        %1687 = vmatprep.subr.bf16.mxu0 0
        %1688 = vmatpush1.bf16.xpose.msra.mxu0 0
        %1689 = vmatprep.subr.bf16.mxu0 0
        %1690 = vmatpush1.bf16.xpose.msra.mxu0 %v1673
        %1691 = vmatprep.subr.bf16.mxu0 0
        %1692 = vmatpush2.bf16.xpose.msra.mxu0 0
        %1693 = vmatprep.subr.bf16.mxu0 0
        %1694 = vmatpush2.bf16.xpose.msra.mxu0 0
        %1695 = vmatprep.subr.bf16.mxu0 0
        %1696 = vmatpush2.bf16.xpose.msra.mxu0 0
        %1697 = vmatprep.subr.bf16.mxu0 0
        %1698 = vmatpush2.bf16.xpose.msra.mxu0 0
        %1699 = vmatprep.subr.bf16.mxu0 0
        %1700 = vmatpush2.bf16.xpose.msra.mxu0 0
        %1701 = vmatprep.subr.bf16.mxu0 0
        %1702 = vmatpush2.bf16.xpose.msra.mxu0 0
        %1703 = vmatprep.subr.bf16.mxu0 0
        %1704 = vmatpush2.bf16.xpose.msra.mxu0 0
        %1705 = vmatprep.subr.bf16.mxu0 0
        %1706 = vmatpush2.bf16.xpose.msra.mxu0 0
        %1707 = vmatprep.mubr.bf16.mxu0 0
        %1708 = vmatmul.mubr.bf16.gmra.mxu0 %v1670
        %v1709 = vpop.f32.mrf.mxu0
        %v1710 = vadd.f32 0.0, %v1709
        %v1711 = vpop.f32.mrf.mxu0
        %v1712 = vpop.f32.mrf.mxu0
        %v1713 = vpop.f32.mrf.mxu0
        %1714 = vdwg.mxu0
        %1716 = vrot.lane.b32.xlu0 %v1346, 96
        %v1717 = vpop.permute.xlu0 %1716
        %v1719 = vsel %vm1374, %v1346, 0
        %v1722 = vsel %vm1374, %v1717, 0
        %1724 = vmatprep.subr.bf16.mxu0 0
        %1725 = vmatpush1.bf16.xpose.msra.mxu0 0
        %1726 = vmatprep.subr.bf16.mxu0 0
        %1727 = vmatpush1.bf16.xpose.msra.mxu0 0
        %1728 = vmatprep.subr.bf16.mxu0 0
        %1729 = vmatpush1.bf16.xpose.msra.mxu0 0
        %1730 = vmatprep.subr.bf16.mxu0 0
        %1731 = vmatpush1.bf16.xpose.msra.mxu0 0
        %1732 = vmatprep.subr.bf16.mxu0 0
        %1733 = vmatpush1.bf16.xpose.msra.mxu0 0
        %1734 = vmatprep.subr.bf16.mxu0 0
        %1735 = vmatpush1.bf16.xpose.msra.mxu0 0
        %1736 = vmatprep.subr.bf16.mxu0 0
        %1737 = vmatpush1.bf16.xpose.msra.mxu0 0
        %1738 = vmatprep.subr.bf16.mxu0 0
        %1739 = vmatpush1.bf16.xpose.msra.mxu0 %v1722
        %1740 = vmatprep.subr.bf16.mxu0 0
        %1741 = vmatpush2.bf16.xpose.msra.mxu0 0
        %1742 = vmatprep.subr.bf16.mxu0 0
        %1743 = vmatpush2.bf16.xpose.msra.mxu0 0
        %1744 = vmatprep.subr.bf16.mxu0 0
        %1745 = vmatpush2.bf16.xpose.msra.mxu0 0
        %1746 = vmatprep.subr.bf16.mxu0 0
        %1747 = vmatpush2.bf16.xpose.msra.mxu0 0
        %1748 = vmatprep.subr.bf16.mxu0 0
        %1749 = vmatpush2.bf16.xpose.msra.mxu0 0
        %1750 = vmatprep.subr.bf16.mxu0 0
        %1751 = vmatpush2.bf16.xpose.msra.mxu0 0
        %1752 = vmatprep.subr.bf16.mxu0 0
        %1753 = vmatpush2.bf16.xpose.msra.mxu0 0
        %1754 = vmatprep.subr.bf16.mxu0 0
        %1755 = vmatpush2.bf16.xpose.msra.mxu0 0
        %1756 = vmatprep.mubr.bf16.mxu0 0
        %1757 = vmatmul.mubr.bf16.gmra.mxu0 %v1719
        %v1758 = vpop.f32.mrf.mxu0
        %v1759 = vadd.f32 0.0, %v1758
        %v1760 = vpop.f32.mrf.mxu0
        %v1761 = vpop.f32.mrf.mxu0
        %v1762 = vpop.f32.mrf.mxu0
        %1763 = vdwg.mxu0
        %1765 = vrot.lane.b32.xlu0 %v1347, 96
        %v1766 = vpop.permute.xlu0 %1765
        %v1768 = vsel %vm1374, %v1347, 0
        %v1771 = vsel %vm1374, %v1766, 0
        %1773 = vmatprep.subr.bf16.mxu0 0
        %1774 = vmatpush1.bf16.xpose.msra.mxu0 0
        %1775 = vmatprep.subr.bf16.mxu0 0
        %1776 = vmatpush1.bf16.xpose.msra.mxu0 0
        %1777 = vmatprep.subr.bf16.mxu0 0
        %1778 = vmatpush1.bf16.xpose.msra.mxu0 0
        %1779 = vmatprep.subr.bf16.mxu0 0
        %1780 = vmatpush1.bf16.xpose.msra.mxu0 0
        %1781 = vmatprep.subr.bf16.mxu0 0
        %1782 = vmatpush1.bf16.xpose.msra.mxu0 0
        %1783 = vmatprep.subr.bf16.mxu0 0
        %1784 = vmatpush1.bf16.xpose.msra.mxu0 0
        %1785 = vmatprep.subr.bf16.mxu0 0
        %1786 = vmatpush1.bf16.xpose.msra.mxu0 0
        %1787 = vmatprep.subr.bf16.mxu0 0
        %1788 = vmatpush1.bf16.xpose.msra.mxu0 %v1771
        %1789 = vmatprep.subr.bf16.mxu0 0
        %1790 = vmatpush2.bf16.xpose.msra.mxu0 0
        %1791 = vmatprep.subr.bf16.mxu0 0
        %1792 = vmatpush2.bf16.xpose.msra.mxu0 0
        %1793 = vmatprep.subr.bf16.mxu0 0
        %1794 = vmatpush2.bf16.xpose.msra.mxu0 0
        %1795 = vmatprep.subr.bf16.mxu0 0
        %1796 = vmatpush2.bf16.xpose.msra.mxu0 0
        %1797 = vmatprep.subr.bf16.mxu0 0
        %1798 = vmatpush2.bf16.xpose.msra.mxu0 0
        %1799 = vmatprep.subr.bf16.mxu0 0
        %1800 = vmatpush2.bf16.xpose.msra.mxu0 0
        %1801 = vmatprep.subr.bf16.mxu0 0
        %1802 = vmatpush2.bf16.xpose.msra.mxu0 0
        %1803 = vmatprep.subr.bf16.mxu0 0
        %1804 = vmatpush2.bf16.xpose.msra.mxu0 0
        %1805 = vmatprep.mubr.bf16.mxu0 0
        %1806 = vmatmul.mubr.bf16.gmra.mxu0 %v1768
        %v1807 = vpop.f32.mrf.mxu0
        %v1808 = vadd.f32 0.0, %v1807
        %v1809 = vpop.f32.mrf.mxu0
        %v1810 = vpop.f32.mrf.mxu0
        %v1811 = vpop.f32.mrf.mxu0
        %1812 = vdwg.mxu0
        %1814 = vrot.lane.b32.xlu0 %v1348, 96
        %v1815 = vpop.permute.xlu0 %1814
        %v1817 = vsel %vm1374, %v1348, 0
        %v1820 = vsel %vm1374, %v1815, 0
        %1822 = vmatprep.subr.bf16.mxu0 0
        %1823 = vmatpush1.bf16.xpose.msra.mxu0 0
        %1824 = vmatprep.subr.bf16.mxu0 0
        %1825 = vmatpush1.bf16.xpose.msra.mxu0 0
        %1826 = vmatprep.subr.bf16.mxu0 0
        %1827 = vmatpush1.bf16.xpose.msra.mxu0 0
        %1828 = vmatprep.subr.bf16.mxu0 0
        %1829 = vmatpush1.bf16.xpose.msra.mxu0 0
        %1830 = vmatprep.subr.bf16.mxu0 0
        %1831 = vmatpush1.bf16.xpose.msra.mxu0 0
        %1832 = vmatprep.subr.bf16.mxu0 0
        %1833 = vmatpush1.bf16.xpose.msra.mxu0 0
        %1834 = vmatprep.subr.bf16.mxu0 0
        %1835 = vmatpush1.bf16.xpose.msra.mxu0 0
        %1836 = vmatprep.subr.bf16.mxu0 0
        %1837 = vmatpush1.bf16.xpose.msra.mxu0 %v1820
        %1838 = vmatprep.subr.bf16.mxu0 0
        %1839 = vmatpush2.bf16.xpose.msra.mxu0 0
        %1840 = vmatprep.subr.bf16.mxu0 0
        %1841 = vmatpush2.bf16.xpose.msra.mxu0 0
        %1842 = vmatprep.subr.bf16.mxu0 0
        %1843 = vmatpush2.bf16.xpose.msra.mxu0 0
        %1844 = vmatprep.subr.bf16.mxu0 0
        %1845 = vmatpush2.bf16.xpose.msra.mxu0 0
        %1846 = vmatprep.subr.bf16.mxu0 0
        %1847 = vmatpush2.bf16.xpose.msra.mxu0 0
        %1848 = vmatprep.subr.bf16.mxu0 0
        %1849 = vmatpush2.bf16.xpose.msra.mxu0 0
        %1850 = vmatprep.subr.bf16.mxu0 0
        %1851 = vmatpush2.bf16.xpose.msra.mxu0 0
        %1852 = vmatprep.subr.bf16.mxu0 0
        %1853 = vmatpush2.bf16.xpose.msra.mxu0 0
        %1854 = vmatprep.mubr.bf16.mxu0 0
        %1855 = vmatmul.mubr.bf16.gmra.mxu0 %v1817
        %v1856 = vpop.f32.mrf.mxu0
        %v1857 = vadd.f32 0.0, %v1856
        %v1858 = vpop.f32.mrf.mxu0
        %v1859 = vpop.f32.mrf.mxu0
        %v1860 = vpop.f32.mrf.mxu0
        %1861 = vdwg.mxu0
        %1863 = vrot.lane.b32.xlu0 %v1349, 96
        %v1864 = vpop.permute.xlu0 %1863
        %v1866 = vsel %vm1374, %v1349, 0
        %v1869 = vsel %vm1374, %v1864, 0
        %1871 = vmatprep.subr.bf16.mxu0 0
        %1872 = vmatpush1.bf16.xpose.msra.mxu0 0
        %1873 = vmatprep.subr.bf16.mxu0 0
        %1874 = vmatpush1.bf16.xpose.msra.mxu0 0
        %1875 = vmatprep.subr.bf16.mxu0 0
        %1876 = vmatpush1.bf16.xpose.msra.mxu0 0
        %1877 = vmatprep.subr.bf16.mxu0 0
        %1878 = vmatpush1.bf16.xpose.msra.mxu0 0
        %1879 = vmatprep.subr.bf16.mxu0 0
        %1880 = vmatpush1.bf16.xpose.msra.mxu0 0
        %1881 = vmatprep.subr.bf16.mxu0 0
        %1882 = vmatpush1.bf16.xpose.msra.mxu0 0
        %1883 = vmatprep.subr.bf16.mxu0 0
        %1884 = vmatpush1.bf16.xpose.msra.mxu0 0
        %1885 = vmatprep.subr.bf16.mxu0 0
        %1886 = vmatpush1.bf16.xpose.msra.mxu0 %v1869
        %1887 = vmatprep.subr.bf16.mxu0 0
        %1888 = vmatpush2.bf16.xpose.msra.mxu0 0
        %1889 = vmatprep.subr.bf16.mxu0 0
        %1890 = vmatpush2.bf16.xpose.msra.mxu0 0
        %1891 = vmatprep.subr.bf16.mxu0 0
        %1892 = vmatpush2.bf16.xpose.msra.mxu0 0
        %1893 = vmatprep.subr.bf16.mxu0 0
        %1894 = vmatpush2.bf16.xpose.msra.mxu0 0
        %1895 = vmatprep.subr.bf16.mxu0 0
        %1896 = vmatpush2.bf16.xpose.msra.mxu0 0
        %1897 = vmatprep.subr.bf16.mxu0 0
        %1898 = vmatpush2.bf16.xpose.msra.mxu0 0
        %1899 = vmatprep.subr.bf16.mxu0 0
        %1900 = vmatpush2.bf16.xpose.msra.mxu0 0
        %1901 = vmatprep.subr.bf16.mxu0 0
        %1902 = vmatpush2.bf16.xpose.msra.mxu0 0
        %1903 = vmatprep.mubr.bf16.mxu0 0
        %1904 = vmatmul.mubr.bf16.gmra.mxu0 %v1866
        %v1905 = vpop.f32.mrf.mxu0
        %v1906 = vadd.f32 0.0, %v1905
        %v1907 = vpop.f32.mrf.mxu0
        %v1908 = vpop.f32.mrf.mxu0
        %v1909 = vpop.f32.mrf.mxu0
        %1910 = vdwg.mxu0
        %1912 = vrot.lane.b32.xlu0 %v1350, 96
        %v1913 = vpop.permute.xlu0 %1912
        %v1915 = vsel %vm1374, %v1350, 0
        %v1918 = vsel %vm1374, %v1913, 0
        %1920 = vmatprep.subr.bf16.mxu0 0
        %1921 = vmatpush1.bf16.xpose.msra.mxu0 0
        %1922 = vmatprep.subr.bf16.mxu0 0
        %1923 = vmatpush1.bf16.xpose.msra.mxu0 0
        %1924 = vmatprep.subr.bf16.mxu0 0
        %1925 = vmatpush1.bf16.xpose.msra.mxu0 0
        %1926 = vmatprep.subr.bf16.mxu0 0
        %1927 = vmatpush1.bf16.xpose.msra.mxu0 0
        %1928 = vmatprep.subr.bf16.mxu0 0
        %1929 = vmatpush1.bf16.xpose.msra.mxu0 0
        %1930 = vmatprep.subr.bf16.mxu0 0
        %1931 = vmatpush1.bf16.xpose.msra.mxu0 0
        %1932 = vmatprep.subr.bf16.mxu0 0
        %1933 = vmatpush1.bf16.xpose.msra.mxu0 0
        %1934 = vmatprep.subr.bf16.mxu0 0
        %1935 = vmatpush1.bf16.xpose.msra.mxu0 %v1918
        %1936 = vmatprep.subr.bf16.mxu0 0
        %1937 = vmatpush2.bf16.xpose.msra.mxu0 0
        %1938 = vmatprep.subr.bf16.mxu0 0
        %1939 = vmatpush2.bf16.xpose.msra.mxu0 0
        %1940 = vmatprep.subr.bf16.mxu0 0
        %1941 = vmatpush2.bf16.xpose.msra.mxu0 0
        %1942 = vmatprep.subr.bf16.mxu0 0
        %1943 = vmatpush2.bf16.xpose.msra.mxu0 0
        %1944 = vmatprep.subr.bf16.mxu0 0
        %1945 = vmatpush2.bf16.xpose.msra.mxu0 0
        %1946 = vmatprep.subr.bf16.mxu0 0
        %1947 = vmatpush2.bf16.xpose.msra.mxu0 0
        %1948 = vmatprep.subr.bf16.mxu0 0
        %1949 = vmatpush2.bf16.xpose.msra.mxu0 0
        %1950 = vmatprep.subr.bf16.mxu0 0
        %1951 = vmatpush2.bf16.xpose.msra.mxu0 0
        %1952 = vmatprep.mubr.bf16.mxu0 0
        %1953 = vmatmul.mubr.bf16.gmra.mxu0 %v1915
        %v1954 = vpop.f32.mrf.mxu0
        %v1955 = vadd.f32 0.0, %v1954
        %v1956 = vpop.f32.mrf.mxu0
        %v1957 = vpop.f32.mrf.mxu0
        %v1958 = vpop.f32.mrf.mxu0
        %1959 = vdwg.mxu0
        %1961 = vrot.lane.b32.xlu0 %v1351, 96
        %v1962 = vpop.permute.xlu0 %1961
        %v1964 = vsel %vm1374, %v1351, 0
        %v1967 = vsel %vm1374, %v1962, 0
        %1969 = vmatprep.subr.bf16.mxu0 0
        %1970 = vmatpush1.bf16.xpose.msra.mxu0 0
        %1971 = vmatprep.subr.bf16.mxu0 0
        %1972 = vmatpush1.bf16.xpose.msra.mxu0 0
        %1973 = vmatprep.subr.bf16.mxu0 0
        %1974 = vmatpush1.bf16.xpose.msra.mxu0 0
        %1975 = vmatprep.subr.bf16.mxu0 0
        %1976 = vmatpush1.bf16.xpose.msra.mxu0 0
        %1977 = vmatprep.subr.bf16.mxu0 0
        %1978 = vmatpush1.bf16.xpose.msra.mxu0 0
        %1979 = vmatprep.subr.bf16.mxu0 0
        %1980 = vmatpush1.bf16.xpose.msra.mxu0 0
        %1981 = vmatprep.subr.bf16.mxu0 0
        %1982 = vmatpush1.bf16.xpose.msra.mxu0 0
        %1983 = vmatprep.subr.bf16.mxu0 0
        %1984 = vmatpush1.bf16.xpose.msra.mxu0 %v1967
        %1985 = vmatprep.subr.bf16.mxu0 0
        %1986 = vmatpush2.bf16.xpose.msra.mxu0 0
        %1987 = vmatprep.subr.bf16.mxu0 0
        %1988 = vmatpush2.bf16.xpose.msra.mxu0 0
        %1989 = vmatprep.subr.bf16.mxu0 0
        %1990 = vmatpush2.bf16.xpose.msra.mxu0 0
        %1991 = vmatprep.subr.bf16.mxu0 0
        %1992 = vmatpush2.bf16.xpose.msra.mxu0 0
        %1993 = vmatprep.subr.bf16.mxu0 0
        %1994 = vmatpush2.bf16.xpose.msra.mxu0 0
        %1995 = vmatprep.subr.bf16.mxu0 0
        %1996 = vmatpush2.bf16.xpose.msra.mxu0 0
        %1997 = vmatprep.subr.bf16.mxu0 0
        %1998 = vmatpush2.bf16.xpose.msra.mxu0 0
        %1999 = vmatprep.subr.bf16.mxu0 0
        %2000 = vmatpush2.bf16.xpose.msra.mxu0 0
        %2001 = vmatprep.mubr.bf16.mxu0 0
        %2002 = vmatmul.mubr.bf16.gmra.mxu0 %v1964
        %v2003 = vpop.f32.mrf.mxu0
        %v2004 = vadd.f32 0.0, %v2003
        %v2005 = vpop.f32.mrf.mxu0
        %v2006 = vpop.f32.mrf.mxu0
        %v2007 = vpop.f32.mrf.mxu0
        %2008 = vdwg.mxu0
        %2010 = vrot.lane.b32.xlu0 %v1352, 96
        %v2011 = vpop.permute.xlu0 %2010
        %v2013 = vsel %vm1374, %v1352, 0
        %v2016 = vsel %vm1374, %v2011, 0
        %2018 = vmatprep.subr.bf16.mxu0 0
        %2019 = vmatpush1.bf16.xpose.msra.mxu0 0
        %2020 = vmatprep.subr.bf16.mxu0 0
        %2021 = vmatpush1.bf16.xpose.msra.mxu0 0
        %2022 = vmatprep.subr.bf16.mxu0 0
        %2023 = vmatpush1.bf16.xpose.msra.mxu0 0
        %2024 = vmatprep.subr.bf16.mxu0 0
        %2025 = vmatpush1.bf16.xpose.msra.mxu0 0
        %2026 = vmatprep.subr.bf16.mxu0 0
        %2027 = vmatpush1.bf16.xpose.msra.mxu0 0
        %2028 = vmatprep.subr.bf16.mxu0 0
        %2029 = vmatpush1.bf16.xpose.msra.mxu0 0
        %2030 = vmatprep.subr.bf16.mxu0 0
        %2031 = vmatpush1.bf16.xpose.msra.mxu0 0
        %2032 = vmatprep.subr.bf16.mxu0 0
        %2033 = vmatpush1.bf16.xpose.msra.mxu0 %v2016
        %2034 = vmatprep.subr.bf16.mxu0 0
        %2035 = vmatpush2.bf16.xpose.msra.mxu0 0
        %2036 = vmatprep.subr.bf16.mxu0 0
        %2037 = vmatpush2.bf16.xpose.msra.mxu0 0
        %2038 = vmatprep.subr.bf16.mxu0 0
        %2039 = vmatpush2.bf16.xpose.msra.mxu0 0
        %2040 = vmatprep.subr.bf16.mxu0 0
        %2041 = vmatpush2.bf16.xpose.msra.mxu0 0
        %2042 = vmatprep.subr.bf16.mxu0 0
        %2043 = vmatpush2.bf16.xpose.msra.mxu0 0
        %2044 = vmatprep.subr.bf16.mxu0 0
        %2045 = vmatpush2.bf16.xpose.msra.mxu0 0
        %2046 = vmatprep.subr.bf16.mxu0 0
        %2047 = vmatpush2.bf16.xpose.msra.mxu0 0
        %2048 = vmatprep.subr.bf16.mxu0 0
        %2049 = vmatpush2.bf16.xpose.msra.mxu0 0
        %2050 = vmatprep.mubr.bf16.mxu0 0
        %2051 = vmatmul.mubr.bf16.gmra.mxu0 %v2013
        %v2052 = vpop.f32.mrf.mxu0
        %v2053 = vadd.f32 0.0, %v2052
        %v2054 = vpop.f32.mrf.mxu0
        %v2055 = vpop.f32.mrf.mxu0
        %v2056 = vpop.f32.mrf.mxu0
        %2057 = vdwg.mxu0
        %2059 = vrot.lane.b32.xlu0 %v1353, 96
        %v2060 = vpop.permute.xlu0 %2059
        %v2062 = vsel %vm1374, %v1353, 0
        %v2065 = vsel %vm1374, %v2060, 0
        %2067 = vmatprep.subr.bf16.mxu0 0
        %2068 = vmatpush1.bf16.xpose.msra.mxu0 0
        %2069 = vmatprep.subr.bf16.mxu0 0
        %2070 = vmatpush1.bf16.xpose.msra.mxu0 0
        %2071 = vmatprep.subr.bf16.mxu0 0
        %2072 = vmatpush1.bf16.xpose.msra.mxu0 0
        %2073 = vmatprep.subr.bf16.mxu0 0
        %2074 = vmatpush1.bf16.xpose.msra.mxu0 0
        %2075 = vmatprep.subr.bf16.mxu0 0
        %2076 = vmatpush1.bf16.xpose.msra.mxu0 0
        %2077 = vmatprep.subr.bf16.mxu0 0
        %2078 = vmatpush1.bf16.xpose.msra.mxu0 0
        %2079 = vmatprep.subr.bf16.mxu0 0
        %2080 = vmatpush1.bf16.xpose.msra.mxu0 0
        %2081 = vmatprep.subr.bf16.mxu0 0
        %2082 = vmatpush1.bf16.xpose.msra.mxu0 %v2065
        %2083 = vmatprep.subr.bf16.mxu0 0
        %2084 = vmatpush2.bf16.xpose.msra.mxu0 0
        %2085 = vmatprep.subr.bf16.mxu0 0
        %2086 = vmatpush2.bf16.xpose.msra.mxu0 0
        %2087 = vmatprep.subr.bf16.mxu0 0
        %2088 = vmatpush2.bf16.xpose.msra.mxu0 0
        %2089 = vmatprep.subr.bf16.mxu0 0
        %2090 = vmatpush2.bf16.xpose.msra.mxu0 0
        %2091 = vmatprep.subr.bf16.mxu0 0
        %2092 = vmatpush2.bf16.xpose.msra.mxu0 0
        %2093 = vmatprep.subr.bf16.mxu0 0
        %2094 = vmatpush2.bf16.xpose.msra.mxu0 0
        %2095 = vmatprep.subr.bf16.mxu0 0
        %2096 = vmatpush2.bf16.xpose.msra.mxu0 0
        %2097 = vmatprep.subr.bf16.mxu0 0
        %2098 = vmatpush2.bf16.xpose.msra.mxu0 0
        %2099 = vmatprep.mubr.bf16.mxu0 0
        %2100 = vmatmul.mubr.bf16.gmra.mxu0 %v2062
        %v2101 = vpop.f32.mrf.mxu0
        %v2102 = vadd.f32 0.0, %v2101
        %v2103 = vpop.f32.mrf.mxu0
        %v2104 = vpop.f32.mrf.mxu0
        %v2105 = vpop.f32.mrf.mxu0
        %2106 = vdwg.mxu0
        %2108 = vrot.lane.b32.xlu0 %v1354, 96
        %v2109 = vpop.permute.xlu0 %2108
        %v2111 = vsel %vm1374, %v1354, 0
        %v2114 = vsel %vm1374, %v2109, 0
        %2116 = vmatprep.subr.bf16.mxu0 0
        %2117 = vmatpush1.bf16.xpose.msra.mxu0 0
        %2118 = vmatprep.subr.bf16.mxu0 0
        %2119 = vmatpush1.bf16.xpose.msra.mxu0 0
        %2120 = vmatprep.subr.bf16.mxu0 0
        %2121 = vmatpush1.bf16.xpose.msra.mxu0 0
        %2122 = vmatprep.subr.bf16.mxu0 0
        %2123 = vmatpush1.bf16.xpose.msra.mxu0 0
        %2124 = vmatprep.subr.bf16.mxu0 0
        %2125 = vmatpush1.bf16.xpose.msra.mxu0 0
        %2126 = vmatprep.subr.bf16.mxu0 0
        %2127 = vmatpush1.bf16.xpose.msra.mxu0 0
        %2128 = vmatprep.subr.bf16.mxu0 0
        %2129 = vmatpush1.bf16.xpose.msra.mxu0 0
        %2130 = vmatprep.subr.bf16.mxu0 0
        %2131 = vmatpush1.bf16.xpose.msra.mxu0 %v2114
        %2132 = vmatprep.subr.bf16.mxu0 0
        %2133 = vmatpush2.bf16.xpose.msra.mxu0 0
        %2134 = vmatprep.subr.bf16.mxu0 0
        %2135 = vmatpush2.bf16.xpose.msra.mxu0 0
        %2136 = vmatprep.subr.bf16.mxu0 0
        %2137 = vmatpush2.bf16.xpose.msra.mxu0 0
        %2138 = vmatprep.subr.bf16.mxu0 0
        %2139 = vmatpush2.bf16.xpose.msra.mxu0 0
        %2140 = vmatprep.subr.bf16.mxu0 0
        %2141 = vmatpush2.bf16.xpose.msra.mxu0 0
        %2142 = vmatprep.subr.bf16.mxu0 0
        %2143 = vmatpush2.bf16.xpose.msra.mxu0 0
        %2144 = vmatprep.subr.bf16.mxu0 0
        %2145 = vmatpush2.bf16.xpose.msra.mxu0 0
        %2146 = vmatprep.subr.bf16.mxu0 0
        %2147 = vmatpush2.bf16.xpose.msra.mxu0 0
        %2148 = vmatprep.mubr.bf16.mxu0 0
        %2149 = vmatmul.mubr.bf16.gmra.mxu0 %v2111
        %v2150 = vpop.f32.mrf.mxu0
        %v2151 = vadd.f32 0.0, %v2150
        %v2152 = vpop.f32.mrf.mxu0
        %v2153 = vpop.f32.mrf.mxu0
        %v2154 = vpop.f32.mrf.mxu0
        %2155 = vdwg.mxu0
        %2157 = vrot.lane.b32.xlu0 %v1355, 96
        %v2158 = vpop.permute.xlu0 %2157
        %v2160 = vsel %vm1374, %v1355, 0
        %v2163 = vsel %vm1374, %v2158, 0
        %2165 = vmatprep.subr.bf16.mxu0 0
        %2166 = vmatpush1.bf16.xpose.msra.mxu0 0
        %2167 = vmatprep.subr.bf16.mxu0 0
        %2168 = vmatpush1.bf16.xpose.msra.mxu0 0
        %2169 = vmatprep.subr.bf16.mxu0 0
        %2170 = vmatpush1.bf16.xpose.msra.mxu0 0
        %2171 = vmatprep.subr.bf16.mxu0 0
        %2172 = vmatpush1.bf16.xpose.msra.mxu0 0
        %2173 = vmatprep.subr.bf16.mxu0 0
        %2174 = vmatpush1.bf16.xpose.msra.mxu0 0
        %2175 = vmatprep.subr.bf16.mxu0 0
        %2176 = vmatpush1.bf16.xpose.msra.mxu0 0
        %2177 = vmatprep.subr.bf16.mxu0 0
        %2178 = vmatpush1.bf16.xpose.msra.mxu0 0
        %2179 = vmatprep.subr.bf16.mxu0 0
        %2180 = vmatpush1.bf16.xpose.msra.mxu0 %v2163
        %2181 = vmatprep.subr.bf16.mxu0 0
        %2182 = vmatpush2.bf16.xpose.msra.mxu0 0
        %2183 = vmatprep.subr.bf16.mxu0 0
        %2184 = vmatpush2.bf16.xpose.msra.mxu0 0
        %2185 = vmatprep.subr.bf16.mxu0 0
        %2186 = vmatpush2.bf16.xpose.msra.mxu0 0
        %2187 = vmatprep.subr.bf16.mxu0 0
        %2188 = vmatpush2.bf16.xpose.msra.mxu0 0
        %2189 = vmatprep.subr.bf16.mxu0 0
        %2190 = vmatpush2.bf16.xpose.msra.mxu0 0
        %2191 = vmatprep.subr.bf16.mxu0 0
        %2192 = vmatpush2.bf16.xpose.msra.mxu0 0
        %2193 = vmatprep.subr.bf16.mxu0 0
        %2194 = vmatpush2.bf16.xpose.msra.mxu0 0
        %2195 = vmatprep.subr.bf16.mxu0 0
        %2196 = vmatpush2.bf16.xpose.msra.mxu0 0
        %2197 = vmatprep.mubr.bf16.mxu0 0
        %2198 = vmatmul.mubr.bf16.gmra.mxu0 %v2160
        %v2199 = vpop.f32.mrf.mxu0
        %v2200 = vadd.f32 0.0, %v2199
        %v2201 = vpop.f32.mrf.mxu0
        %v2202 = vpop.f32.mrf.mxu0
        %v2203 = vpop.f32.mrf.mxu0
        %2204 = vdwg.mxu0
        %2206 = vrot.lane.b32.xlu0 %v1356, 96
        %v2207 = vpop.permute.xlu0 %2206
        %v2209 = vsel %vm1374, %v1356, 0
        %v2212 = vsel %vm1374, %v2207, 0
        %2214 = vmatprep.subr.bf16.mxu0 0
        %2215 = vmatpush1.bf16.xpose.msra.mxu0 0
        %2216 = vmatprep.subr.bf16.mxu0 0
        %2217 = vmatpush1.bf16.xpose.msra.mxu0 0
        %2218 = vmatprep.subr.bf16.mxu0 0
        %2219 = vmatpush1.bf16.xpose.msra.mxu0 0
        %2220 = vmatprep.subr.bf16.mxu0 0
        %2221 = vmatpush1.bf16.xpose.msra.mxu0 0
        %2222 = vmatprep.subr.bf16.mxu0 0
        %2223 = vmatpush1.bf16.xpose.msra.mxu0 0
        %2224 = vmatprep.subr.bf16.mxu0 0
        %2225 = vmatpush1.bf16.xpose.msra.mxu0 0
        %2226 = vmatprep.subr.bf16.mxu0 0
        %2227 = vmatpush1.bf16.xpose.msra.mxu0 0
        %2228 = vmatprep.subr.bf16.mxu0 0
        %2229 = vmatpush1.bf16.xpose.msra.mxu0 %v2212
        %2230 = vmatprep.subr.bf16.mxu0 0
        %2231 = vmatpush2.bf16.xpose.msra.mxu0 0
        %2232 = vmatprep.subr.bf16.mxu0 0
        %2233 = vmatpush2.bf16.xpose.msra.mxu0 0
        %2234 = vmatprep.subr.bf16.mxu0 0
        %2235 = vmatpush2.bf16.xpose.msra.mxu0 0
        %2236 = vmatprep.subr.bf16.mxu0 0
        %2237 = vmatpush2.bf16.xpose.msra.mxu0 0
        %2238 = vmatprep.subr.bf16.mxu0 0
        %2239 = vmatpush2.bf16.xpose.msra.mxu0 0
        %2240 = vmatprep.subr.bf16.mxu0 0
        %2241 = vmatpush2.bf16.xpose.msra.mxu0 0
        %2242 = vmatprep.subr.bf16.mxu0 0
        %2243 = vmatpush2.bf16.xpose.msra.mxu0 0
        %2244 = vmatprep.subr.bf16.mxu0 0
        %2245 = vmatpush2.bf16.xpose.msra.mxu0 0
        %2246 = vmatprep.mubr.bf16.mxu0 0
        %2247 = vmatmul.mubr.bf16.gmra.mxu0 %v2209
        %v2248 = vpop.f32.mrf.mxu0
        %v2249 = vadd.f32 0.0, %v2248
        %v2250 = vpop.f32.mrf.mxu0
        %v2251 = vpop.f32.mrf.mxu0
        %v2252 = vpop.f32.mrf.mxu0
        %2253 = vdwg.mxu0
        %2255 = vrot.lane.b32.xlu0 %v1357, 96
        %v2256 = vpop.permute.xlu0 %2255
        %v2258 = vsel %vm1374, %v1357, 0
        %v2261 = vsel %vm1374, %v2256, 0
        %2263 = vmatprep.subr.bf16.mxu0 0
        %2264 = vmatpush1.bf16.xpose.msra.mxu0 0
        %2265 = vmatprep.subr.bf16.mxu0 0
        %2266 = vmatpush1.bf16.xpose.msra.mxu0 0
        %2267 = vmatprep.subr.bf16.mxu0 0
        %2268 = vmatpush1.bf16.xpose.msra.mxu0 0
        %2269 = vmatprep.subr.bf16.mxu0 0
        %2270 = vmatpush1.bf16.xpose.msra.mxu0 0
        %2271 = vmatprep.subr.bf16.mxu0 0
        %2272 = vmatpush1.bf16.xpose.msra.mxu0 0
        %2273 = vmatprep.subr.bf16.mxu0 0
        %2274 = vmatpush1.bf16.xpose.msra.mxu0 0
        %2275 = vmatprep.subr.bf16.mxu0 0
        %2276 = vmatpush1.bf16.xpose.msra.mxu0 0
        %2277 = vmatprep.subr.bf16.mxu0 0
        %2278 = vmatpush1.bf16.xpose.msra.mxu0 %v2261
        %2279 = vmatprep.subr.bf16.mxu0 0
        %2280 = vmatpush2.bf16.xpose.msra.mxu0 0
        %2281 = vmatprep.subr.bf16.mxu0 0
        %2282 = vmatpush2.bf16.xpose.msra.mxu0 0
        %2283 = vmatprep.subr.bf16.mxu0 0
        %2284 = vmatpush2.bf16.xpose.msra.mxu0 0
        %2285 = vmatprep.subr.bf16.mxu0 0
        %2286 = vmatpush2.bf16.xpose.msra.mxu0 0
        %2287 = vmatprep.subr.bf16.mxu0 0
        %2288 = vmatpush2.bf16.xpose.msra.mxu0 0
        %2289 = vmatprep.subr.bf16.mxu0 0
        %2290 = vmatpush2.bf16.xpose.msra.mxu0 0
        %2291 = vmatprep.subr.bf16.mxu0 0
        %2292 = vmatpush2.bf16.xpose.msra.mxu0 0
        %2293 = vmatprep.subr.bf16.mxu0 0
        %2294 = vmatpush2.bf16.xpose.msra.mxu0 0
        %2295 = vmatprep.mubr.bf16.mxu0 0
        %2296 = vmatmul.mubr.bf16.gmra.mxu0 %v2258
        %v2297 = vpop.f32.mrf.mxu0
        %v2298 = vadd.f32 0.0, %v2297
        %v2299 = vpop.f32.mrf.mxu0
        %v2300 = vpop.f32.mrf.mxu0
        %v2301 = vpop.f32.mrf.mxu0
        %2302 = vdwg.mxu0
        %2304 = vrot.lane.b32.xlu0 %v1358, 96
        %v2305 = vpop.permute.xlu0 %2304
        %v2307 = vsel %vm1374, %v1358, 0
        %v2310 = vsel %vm1374, %v2305, 0
        %2312 = vmatprep.subr.bf16.mxu0 0
        %2313 = vmatpush1.bf16.xpose.msra.mxu0 0
        %2314 = vmatprep.subr.bf16.mxu0 0
        %2315 = vmatpush1.bf16.xpose.msra.mxu0 0
        %2316 = vmatprep.subr.bf16.mxu0 0
        %2317 = vmatpush1.bf16.xpose.msra.mxu0 0
        %2318 = vmatprep.subr.bf16.mxu0 0
        %2319 = vmatpush1.bf16.xpose.msra.mxu0 0
        %2320 = vmatprep.subr.bf16.mxu0 0
        %2321 = vmatpush1.bf16.xpose.msra.mxu0 0
        %2322 = vmatprep.subr.bf16.mxu0 0
        %2323 = vmatpush1.bf16.xpose.msra.mxu0 0
        %2324 = vmatprep.subr.bf16.mxu0 0
        %2325 = vmatpush1.bf16.xpose.msra.mxu0 0
        %2326 = vmatprep.subr.bf16.mxu0 0
        %2327 = vmatpush1.bf16.xpose.msra.mxu0 %v2310
        %2328 = vmatprep.subr.bf16.mxu0 0
        %2329 = vmatpush2.bf16.xpose.msra.mxu0 0
        %2330 = vmatprep.subr.bf16.mxu0 0
        %2331 = vmatpush2.bf16.xpose.msra.mxu0 0
        %2332 = vmatprep.subr.bf16.mxu0 0
        %2333 = vmatpush2.bf16.xpose.msra.mxu0 0
        %2334 = vmatprep.subr.bf16.mxu0 0
        %2335 = vmatpush2.bf16.xpose.msra.mxu0 0
        %2336 = vmatprep.subr.bf16.mxu0 0
        %2337 = vmatpush2.bf16.xpose.msra.mxu0 0
        %2338 = vmatprep.subr.bf16.mxu0 0
        %2339 = vmatpush2.bf16.xpose.msra.mxu0 0
        %2340 = vmatprep.subr.bf16.mxu0 0
        %2341 = vmatpush2.bf16.xpose.msra.mxu0 0
        %2342 = vmatprep.subr.bf16.mxu0 0
        %2343 = vmatpush2.bf16.xpose.msra.mxu0 0
        %2344 = vmatprep.mubr.bf16.mxu0 0
        %2345 = vmatmul.mubr.bf16.gmra.mxu0 %v2307
        %v2346 = vpop.f32.mrf.mxu0
        %v2347 = vadd.f32 0.0, %v2346
        %v2348 = vpop.f32.mrf.mxu0
        %v2349 = vpop.f32.mrf.mxu0
        %v2350 = vpop.f32.mrf.mxu0
        %2351 = vdwg.mxu0
        %2353 = vrot.lane.b32.xlu0 %v1359, 96
        %v2354 = vpop.permute.xlu0 %2353
        %v2356 = vsel %vm1374, %v1359, 0
        %v2359 = vsel %vm1374, %v2354, 0
        %2361 = vmatprep.subr.bf16.mxu0 0
        %2362 = vmatpush1.bf16.xpose.msra.mxu0 0
        %2363 = vmatprep.subr.bf16.mxu0 0
        %2364 = vmatpush1.bf16.xpose.msra.mxu0 0
        %2365 = vmatprep.subr.bf16.mxu0 0
        %2366 = vmatpush1.bf16.xpose.msra.mxu0 0
        %2367 = vmatprep.subr.bf16.mxu0 0
        %2368 = vmatpush1.bf16.xpose.msra.mxu0 0
        %2369 = vmatprep.subr.bf16.mxu0 0
        %2370 = vmatpush1.bf16.xpose.msra.mxu0 0
        %2371 = vmatprep.subr.bf16.mxu0 0
        %2372 = vmatpush1.bf16.xpose.msra.mxu0 0
        %2373 = vmatprep.subr.bf16.mxu0 0
        %2374 = vmatpush1.bf16.xpose.msra.mxu0 0
        %2375 = vmatprep.subr.bf16.mxu0 0
        %2376 = vmatpush1.bf16.xpose.msra.mxu0 %v2359
        %2377 = vmatprep.subr.bf16.mxu0 0
        %2378 = vmatpush2.bf16.xpose.msra.mxu0 0
        %2379 = vmatprep.subr.bf16.mxu0 0
        %2380 = vmatpush2.bf16.xpose.msra.mxu0 0
        %2381 = vmatprep.subr.bf16.mxu0 0
        %2382 = vmatpush2.bf16.xpose.msra.mxu0 0
        %2383 = vmatprep.subr.bf16.mxu0 0
        %2384 = vmatpush2.bf16.xpose.msra.mxu0 0
        %2385 = vmatprep.subr.bf16.mxu0 0
        %2386 = vmatpush2.bf16.xpose.msra.mxu0 0
        %2387 = vmatprep.subr.bf16.mxu0 0
        %2388 = vmatpush2.bf16.xpose.msra.mxu0 0
        %2389 = vmatprep.subr.bf16.mxu0 0
        %2390 = vmatpush2.bf16.xpose.msra.mxu0 0
        %2391 = vmatprep.subr.bf16.mxu0 0
        %2392 = vmatpush2.bf16.xpose.msra.mxu0 0
        %2393 = vmatprep.mubr.bf16.mxu0 0
        %2394 = vmatmul.mubr.bf16.gmra.mxu0 %v2356
        %v2395 = vpop.f32.mrf.mxu0
        %v2396 = vadd.f32 0.0, %v2395
        %v2397 = vpop.f32.mrf.mxu0
        %v2398 = vpop.f32.mrf.mxu0
        %v2399 = vpop.f32.mrf.mxu0
        %2400 = vdwg.mxu0
        %2402 = vrot.lane.b32.xlu0 %v1360, 96
        %v2403 = vpop.permute.xlu0 %2402
        %v2405 = vsel %vm1374, %v1360, 0
        %v2408 = vsel %vm1374, %v2403, 0
        %2410 = vmatprep.subr.bf16.mxu0 0
        %2411 = vmatpush1.bf16.xpose.msra.mxu0 0
        %2412 = vmatprep.subr.bf16.mxu0 0
        %2413 = vmatpush1.bf16.xpose.msra.mxu0 0
        %2414 = vmatprep.subr.bf16.mxu0 0
        %2415 = vmatpush1.bf16.xpose.msra.mxu0 0
        %2416 = vmatprep.subr.bf16.mxu0 0
        %2417 = vmatpush1.bf16.xpose.msra.mxu0 0
        %2418 = vmatprep.subr.bf16.mxu0 0
        %2419 = vmatpush1.bf16.xpose.msra.mxu0 0
        %2420 = vmatprep.subr.bf16.mxu0 0
        %2421 = vmatpush1.bf16.xpose.msra.mxu0 0
        %2422 = vmatprep.subr.bf16.mxu0 0
        %2423 = vmatpush1.bf16.xpose.msra.mxu0 0
        %2424 = vmatprep.subr.bf16.mxu0 0
        %2425 = vmatpush1.bf16.xpose.msra.mxu0 %v2408
        %2426 = vmatprep.subr.bf16.mxu0 0
        %2427 = vmatpush2.bf16.xpose.msra.mxu0 0
        %2428 = vmatprep.subr.bf16.mxu0 0
        %2429 = vmatpush2.bf16.xpose.msra.mxu0 0
        %2430 = vmatprep.subr.bf16.mxu0 0
        %2431 = vmatpush2.bf16.xpose.msra.mxu0 0
        %2432 = vmatprep.subr.bf16.mxu0 0
        %2433 = vmatpush2.bf16.xpose.msra.mxu0 0
        %2434 = vmatprep.subr.bf16.mxu0 0
        %2435 = vmatpush2.bf16.xpose.msra.mxu0 0
        %2436 = vmatprep.subr.bf16.mxu0 0
        %2437 = vmatpush2.bf16.xpose.msra.mxu0 0
        %2438 = vmatprep.subr.bf16.mxu0 0
        %2439 = vmatpush2.bf16.xpose.msra.mxu0 0
        %2440 = vmatprep.subr.bf16.mxu0 0
        %2441 = vmatpush2.bf16.xpose.msra.mxu0 0
        %2442 = vmatprep.mubr.bf16.mxu0 0
        %2443 = vmatmul.mubr.bf16.gmra.mxu0 %v2405
        %v2444 = vpop.f32.mrf.mxu0
        %v2445 = vadd.f32 0.0, %v2444
        %v2446 = vpop.f32.mrf.mxu0
        %v2447 = vpop.f32.mrf.mxu0
        %v2448 = vpop.f32.mrf.mxu0
        %2449 = vdwg.mxu0
        %2451 = vrot.lane.b32.xlu0 %v1361, 96
        %v2452 = vpop.permute.xlu0 %2451
        %v2454 = vsel %vm1374, %v1361, 0
        %v2457 = vsel %vm1374, %v2452, 0
        %2459 = vmatprep.subr.bf16.mxu0 0
        %2460 = vmatpush1.bf16.xpose.msra.mxu0 0
        %2461 = vmatprep.subr.bf16.mxu0 0
        %2462 = vmatpush1.bf16.xpose.msra.mxu0 0
        %2463 = vmatprep.subr.bf16.mxu0 0
        %2464 = vmatpush1.bf16.xpose.msra.mxu0 0
        %2465 = vmatprep.subr.bf16.mxu0 0
        %2466 = vmatpush1.bf16.xpose.msra.mxu0 0
        %2467 = vmatprep.subr.bf16.mxu0 0
        %2468 = vmatpush1.bf16.xpose.msra.mxu0 0
        %2469 = vmatprep.subr.bf16.mxu0 0
        %2470 = vmatpush1.bf16.xpose.msra.mxu0 0
        %2471 = vmatprep.subr.bf16.mxu0 0
        %2472 = vmatpush1.bf16.xpose.msra.mxu0 0
        %2473 = vmatprep.subr.bf16.mxu0 0
        %2474 = vmatpush1.bf16.xpose.msra.mxu0 %v2457
        %2475 = vmatprep.subr.bf16.mxu0 0
        %2476 = vmatpush2.bf16.xpose.msra.mxu0 0
        %2477 = vmatprep.subr.bf16.mxu0 0
        %2478 = vmatpush2.bf16.xpose.msra.mxu0 0
        %2479 = vmatprep.subr.bf16.mxu0 0
        %2480 = vmatpush2.bf16.xpose.msra.mxu0 0
        %2481 = vmatprep.subr.bf16.mxu0 0
        %2482 = vmatpush2.bf16.xpose.msra.mxu0 0
        %2483 = vmatprep.subr.bf16.mxu0 0
        %2484 = vmatpush2.bf16.xpose.msra.mxu0 0
        %2485 = vmatprep.subr.bf16.mxu0 0
        %2486 = vmatpush2.bf16.xpose.msra.mxu0 0
        %2487 = vmatprep.subr.bf16.mxu0 0
        %2488 = vmatpush2.bf16.xpose.msra.mxu0 0
        %2489 = vmatprep.subr.bf16.mxu0 0
        %2490 = vmatpush2.bf16.xpose.msra.mxu0 0
        %2491 = vmatprep.mubr.bf16.mxu0 0
        %2492 = vmatmul.mubr.bf16.gmra.mxu0 %v2454
        %v2493 = vpop.f32.mrf.mxu0
        %v2494 = vadd.f32 0.0, %v2493
        %v2495 = vpop.f32.mrf.mxu0
        %v2496 = vpop.f32.mrf.mxu0
        %v2497 = vpop.f32.mrf.mxu0
        %2498 = vdwg.mxu0
        %2500 = vrot.lane.b32.xlu0 %v1362, 96
        %v2501 = vpop.permute.xlu0 %2500
        %v2503 = vsel %vm1374, %v1362, 0
        %v2506 = vsel %vm1374, %v2501, 0
        %2508 = vmatprep.subr.bf16.mxu0 0
        %2509 = vmatpush1.bf16.xpose.msra.mxu0 0
        %2510 = vmatprep.subr.bf16.mxu0 0
        %2511 = vmatpush1.bf16.xpose.msra.mxu0 0
        %2512 = vmatprep.subr.bf16.mxu0 0
        %2513 = vmatpush1.bf16.xpose.msra.mxu0 0
        %2514 = vmatprep.subr.bf16.mxu0 0
        %2515 = vmatpush1.bf16.xpose.msra.mxu0 0
        %2516 = vmatprep.subr.bf16.mxu0 0
        %2517 = vmatpush1.bf16.xpose.msra.mxu0 0
        %2518 = vmatprep.subr.bf16.mxu0 0
        %2519 = vmatpush1.bf16.xpose.msra.mxu0 0
        %2520 = vmatprep.subr.bf16.mxu0 0
        %2521 = vmatpush1.bf16.xpose.msra.mxu0 0
        %2522 = vmatprep.subr.bf16.mxu0 0
        %2523 = vmatpush1.bf16.xpose.msra.mxu0 %v2506
        %2524 = vmatprep.subr.bf16.mxu0 0
        %2525 = vmatpush2.bf16.xpose.msra.mxu0 0
        %2526 = vmatprep.subr.bf16.mxu0 0
        %2527 = vmatpush2.bf16.xpose.msra.mxu0 0
        %2528 = vmatprep.subr.bf16.mxu0 0
        %2529 = vmatpush2.bf16.xpose.msra.mxu0 0
        %2530 = vmatprep.subr.bf16.mxu0 0
        %2531 = vmatpush2.bf16.xpose.msra.mxu0 0
        %2532 = vmatprep.subr.bf16.mxu0 0
        %2533 = vmatpush2.bf16.xpose.msra.mxu0 0
        %2534 = vmatprep.subr.bf16.mxu0 0
        %2535 = vmatpush2.bf16.xpose.msra.mxu0 0
        %2536 = vmatprep.subr.bf16.mxu0 0
        %2537 = vmatpush2.bf16.xpose.msra.mxu0 0
        %2538 = vmatprep.subr.bf16.mxu0 0
        %2539 = vmatpush2.bf16.xpose.msra.mxu0 0
        %2540 = vmatprep.mubr.bf16.mxu0 0
        %2541 = vmatmul.mubr.bf16.gmra.mxu0 %v2503
        %v2542 = vpop.f32.mrf.mxu0
        %v2543 = vadd.f32 0.0, %v2542
        %v2544 = vpop.f32.mrf.mxu0
        %v2545 = vpop.f32.mrf.mxu0
        %v2546 = vpop.f32.mrf.mxu0
        %2547 = vdwg.mxu0
        %2549 = vrot.lane.b32.xlu0 %v1363, 96
        %v2550 = vpop.permute.xlu0 %2549
        %v2552 = vsel %vm1374, %v1363, 0
        %v2555 = vsel %vm1374, %v2550, 0
        %2557 = vmatprep.subr.bf16.mxu0 0
        %2558 = vmatpush1.bf16.xpose.msra.mxu0 0
        %2559 = vmatprep.subr.bf16.mxu0 0
        %2560 = vmatpush1.bf16.xpose.msra.mxu0 0
        %2561 = vmatprep.subr.bf16.mxu0 0
        %2562 = vmatpush1.bf16.xpose.msra.mxu0 0
        %2563 = vmatprep.subr.bf16.mxu0 0
        %2564 = vmatpush1.bf16.xpose.msra.mxu0 0
        %2565 = vmatprep.subr.bf16.mxu0 0
        %2566 = vmatpush1.bf16.xpose.msra.mxu0 0
        %2567 = vmatprep.subr.bf16.mxu0 0
        %2568 = vmatpush1.bf16.xpose.msra.mxu0 0
        %2569 = vmatprep.subr.bf16.mxu0 0
        %2570 = vmatpush1.bf16.xpose.msra.mxu0 0
        %2571 = vmatprep.subr.bf16.mxu0 0
        %2572 = vmatpush1.bf16.xpose.msra.mxu0 %v2555
        %2573 = vmatprep.subr.bf16.mxu0 0
        %2574 = vmatpush2.bf16.xpose.msra.mxu0 0
        %2575 = vmatprep.subr.bf16.mxu0 0
        %2576 = vmatpush2.bf16.xpose.msra.mxu0 0
        %2577 = vmatprep.subr.bf16.mxu0 0
        %2578 = vmatpush2.bf16.xpose.msra.mxu0 0
        %2579 = vmatprep.subr.bf16.mxu0 0
        %2580 = vmatpush2.bf16.xpose.msra.mxu0 0
        %2581 = vmatprep.subr.bf16.mxu0 0
        %2582 = vmatpush2.bf16.xpose.msra.mxu0 0
        %2583 = vmatprep.subr.bf16.mxu0 0
        %2584 = vmatpush2.bf16.xpose.msra.mxu0 0
        %2585 = vmatprep.subr.bf16.mxu0 0
        %2586 = vmatpush2.bf16.xpose.msra.mxu0 0
        %2587 = vmatprep.subr.bf16.mxu0 0
        %2588 = vmatpush2.bf16.xpose.msra.mxu0 0
        %2589 = vmatprep.mubr.bf16.mxu0 0
        %2590 = vmatmul.mubr.bf16.gmra.mxu0 %v2552
        %v2591 = vpop.f32.mrf.mxu0
        %v2592 = vadd.f32 0.0, %v2591
        %v2593 = vpop.f32.mrf.mxu0
        %v2594 = vpop.f32.mrf.mxu0
        %v2595 = vpop.f32.mrf.mxu0
        %2596 = vdwg.mxu0
        %2598 = vrot.lane.b32.xlu0 %v1364, 96
        %v2599 = vpop.permute.xlu0 %2598
        %v2601 = vsel %vm1374, %v1364, 0
        %v2604 = vsel %vm1374, %v2599, 0
        %2606 = vmatprep.subr.bf16.mxu0 0
        %2607 = vmatpush1.bf16.xpose.msra.mxu0 0
        %2608 = vmatprep.subr.bf16.mxu0 0
        %2609 = vmatpush1.bf16.xpose.msra.mxu0 0
        %2610 = vmatprep.subr.bf16.mxu0 0
        %2611 = vmatpush1.bf16.xpose.msra.mxu0 0
        %2612 = vmatprep.subr.bf16.mxu0 0
        %2613 = vmatpush1.bf16.xpose.msra.mxu0 0
        %2614 = vmatprep.subr.bf16.mxu0 0
        %2615 = vmatpush1.bf16.xpose.msra.mxu0 0
        %2616 = vmatprep.subr.bf16.mxu0 0
        %2617 = vmatpush1.bf16.xpose.msra.mxu0 0
        %2618 = vmatprep.subr.bf16.mxu0 0
        %2619 = vmatpush1.bf16.xpose.msra.mxu0 0
        %2620 = vmatprep.subr.bf16.mxu0 0
        %2621 = vmatpush1.bf16.xpose.msra.mxu0 %v2604
        %2622 = vmatprep.subr.bf16.mxu0 0
        %2623 = vmatpush2.bf16.xpose.msra.mxu0 0
        %2624 = vmatprep.subr.bf16.mxu0 0
        %2625 = vmatpush2.bf16.xpose.msra.mxu0 0
        %2626 = vmatprep.subr.bf16.mxu0 0
        %2627 = vmatpush2.bf16.xpose.msra.mxu0 0
        %2628 = vmatprep.subr.bf16.mxu0 0
        %2629 = vmatpush2.bf16.xpose.msra.mxu0 0
        %2630 = vmatprep.subr.bf16.mxu0 0
        %2631 = vmatpush2.bf16.xpose.msra.mxu0 0
        %2632 = vmatprep.subr.bf16.mxu0 0
        %2633 = vmatpush2.bf16.xpose.msra.mxu0 0
        %2634 = vmatprep.subr.bf16.mxu0 0
        %2635 = vmatpush2.bf16.xpose.msra.mxu0 0
        %2636 = vmatprep.subr.bf16.mxu0 0
        %2637 = vmatpush2.bf16.xpose.msra.mxu0 0
        %2638 = vmatprep.mubr.bf16.mxu0 0
        %2639 = vmatmul.mubr.bf16.gmra.mxu0 %v2601
        %v2640 = vpop.f32.mrf.mxu0
        %v2641 = vadd.f32 0.0, %v2640
        %v2642 = vpop.f32.mrf.mxu0
        %v2643 = vpop.f32.mrf.mxu0
        %v2644 = vpop.f32.mrf.mxu0
        %2645 = vdwg.mxu0
        %2647 = vrot.lane.b32.xlu0 %v1365, 96
        %v2648 = vpop.permute.xlu0 %2647
        %v2650 = vsel %vm1374, %v1365, 0
        %v2653 = vsel %vm1374, %v2648, 0
        %2655 = vmatprep.subr.bf16.mxu0 0
        %2656 = vmatpush1.bf16.xpose.msra.mxu0 0
        %2657 = vmatprep.subr.bf16.mxu0 0
        %2658 = vmatpush1.bf16.xpose.msra.mxu0 0
        %2659 = vmatprep.subr.bf16.mxu0 0
        %2660 = vmatpush1.bf16.xpose.msra.mxu0 0
        %2661 = vmatprep.subr.bf16.mxu0 0
        %2662 = vmatpush1.bf16.xpose.msra.mxu0 0
        %2663 = vmatprep.subr.bf16.mxu0 0
        %2664 = vmatpush1.bf16.xpose.msra.mxu0 0
        %2665 = vmatprep.subr.bf16.mxu0 0
        %2666 = vmatpush1.bf16.xpose.msra.mxu0 0
        %2667 = vmatprep.subr.bf16.mxu0 0
        %2668 = vmatpush1.bf16.xpose.msra.mxu0 0
        %2669 = vmatprep.subr.bf16.mxu0 0
        %2670 = vmatpush1.bf16.xpose.msra.mxu0 %v2653
        %2671 = vmatprep.subr.bf16.mxu0 0
        %2672 = vmatpush2.bf16.xpose.msra.mxu0 0
        %2673 = vmatprep.subr.bf16.mxu0 0
        %2674 = vmatpush2.bf16.xpose.msra.mxu0 0
        %2675 = vmatprep.subr.bf16.mxu0 0
        %2676 = vmatpush2.bf16.xpose.msra.mxu0 0
        %2677 = vmatprep.subr.bf16.mxu0 0
        %2678 = vmatpush2.bf16.xpose.msra.mxu0 0
        %2679 = vmatprep.subr.bf16.mxu0 0
        %2680 = vmatpush2.bf16.xpose.msra.mxu0 0
        %2681 = vmatprep.subr.bf16.mxu0 0
        %2682 = vmatpush2.bf16.xpose.msra.mxu0 0
        %2683 = vmatprep.subr.bf16.mxu0 0
        %2684 = vmatpush2.bf16.xpose.msra.mxu0 0
        %2685 = vmatprep.subr.bf16.mxu0 0
        %2686 = vmatpush2.bf16.xpose.msra.mxu0 0
        %2687 = vmatprep.mubr.bf16.mxu0 0
        %2688 = vmatmul.mubr.bf16.gmra.mxu0 %v2650
        %v2689 = vpop.f32.mrf.mxu0
        %v2690 = vadd.f32 0.0, %v2689
        %v2691 = vpop.f32.mrf.mxu0
        %v2692 = vpop.f32.mrf.mxu0
        %v2693 = vpop.f32.mrf.mxu0
        %2694 = vdwg.mxu0
        %2696 = vrot.lane.b32.xlu0 %v1366, 96
        %v2697 = vpop.permute.xlu0 %2696
        %v2699 = vsel %vm1374, %v1366, 0
        %v2702 = vsel %vm1374, %v2697, 0
        %2704 = vmatprep.subr.bf16.mxu0 0
        %2705 = vmatpush1.bf16.xpose.msra.mxu0 0
        %2706 = vmatprep.subr.bf16.mxu0 0
        %2707 = vmatpush1.bf16.xpose.msra.mxu0 0
        %2708 = vmatprep.subr.bf16.mxu0 0
        %2709 = vmatpush1.bf16.xpose.msra.mxu0 0
        %2710 = vmatprep.subr.bf16.mxu0 0
        %2711 = vmatpush1.bf16.xpose.msra.mxu0 0
        %2712 = vmatprep.subr.bf16.mxu0 0
        %2713 = vmatpush1.bf16.xpose.msra.mxu0 0
        %2714 = vmatprep.subr.bf16.mxu0 0
        %2715 = vmatpush1.bf16.xpose.msra.mxu0 0
        %2716 = vmatprep.subr.bf16.mxu0 0
        %2717 = vmatpush1.bf16.xpose.msra.mxu0 0
        %2718 = vmatprep.subr.bf16.mxu0 0
        %2719 = vmatpush1.bf16.xpose.msra.mxu0 %v2702
        %2720 = vmatprep.subr.bf16.mxu0 0
        %2721 = vmatpush2.bf16.xpose.msra.mxu0 0
        %2722 = vmatprep.subr.bf16.mxu0 0
        %2723 = vmatpush2.bf16.xpose.msra.mxu0 0
        %2724 = vmatprep.subr.bf16.mxu0 0
        %2725 = vmatpush2.bf16.xpose.msra.mxu0 0
        %2726 = vmatprep.subr.bf16.mxu0 0
        %2727 = vmatpush2.bf16.xpose.msra.mxu0 0
        %2728 = vmatprep.subr.bf16.mxu0 0
        %2729 = vmatpush2.bf16.xpose.msra.mxu0 0
        %2730 = vmatprep.subr.bf16.mxu0 0
        %2731 = vmatpush2.bf16.xpose.msra.mxu0 0
        %2732 = vmatprep.subr.bf16.mxu0 0
        %2733 = vmatpush2.bf16.xpose.msra.mxu0 0
        %2734 = vmatprep.subr.bf16.mxu0 0
        %2735 = vmatpush2.bf16.xpose.msra.mxu0 0
        %2736 = vmatprep.mubr.bf16.mxu0 0
        %2737 = vmatmul.mubr.bf16.gmra.mxu0 %v2699
        %v2738 = vpop.f32.mrf.mxu0
        %v2739 = vadd.f32 0.0, %v2738
        %v2740 = vpop.f32.mrf.mxu0
        %v2741 = vpop.f32.mrf.mxu0
        %v2742 = vpop.f32.mrf.mxu0
        %2743 = vdwg.mxu0
        %2745 = vrot.lane.b32.xlu0 %v1367, 96
        %v2746 = vpop.permute.xlu0 %2745
        %v2748 = vsel %vm1374, %v1367, 0
        %v2751 = vsel %vm1374, %v2746, 0
        %2753 = vmatprep.subr.bf16.mxu0 0
        %2754 = vmatpush1.bf16.xpose.msra.mxu0 0
        %2755 = vmatprep.subr.bf16.mxu0 0
        %2756 = vmatpush1.bf16.xpose.msra.mxu0 0
        %2757 = vmatprep.subr.bf16.mxu0 0
        %2758 = vmatpush1.bf16.xpose.msra.mxu0 0
        %2759 = vmatprep.subr.bf16.mxu0 0
        %2760 = vmatpush1.bf16.xpose.msra.mxu0 0
        %2761 = vmatprep.subr.bf16.mxu0 0
        %2762 = vmatpush1.bf16.xpose.msra.mxu0 0
        %2763 = vmatprep.subr.bf16.mxu0 0
        %2764 = vmatpush1.bf16.xpose.msra.mxu0 0
        %2765 = vmatprep.subr.bf16.mxu0 0
        %2766 = vmatpush1.bf16.xpose.msra.mxu0 0
        %2767 = vmatprep.subr.bf16.mxu0 0
        %2768 = vmatpush1.bf16.xpose.msra.mxu0 %v2751
        %2769 = vmatprep.subr.bf16.mxu0 0
        %2770 = vmatpush2.bf16.xpose.msra.mxu0 0
        %2771 = vmatprep.subr.bf16.mxu0 0
        %2772 = vmatpush2.bf16.xpose.msra.mxu0 0
        %2773 = vmatprep.subr.bf16.mxu0 0
        %2774 = vmatpush2.bf16.xpose.msra.mxu0 0
        %2775 = vmatprep.subr.bf16.mxu0 0
        %2776 = vmatpush2.bf16.xpose.msra.mxu0 0
        %2777 = vmatprep.subr.bf16.mxu0 0
        %2778 = vmatpush2.bf16.xpose.msra.mxu0 0
        %2779 = vmatprep.subr.bf16.mxu0 0
        %2780 = vmatpush2.bf16.xpose.msra.mxu0 0
        %2781 = vmatprep.subr.bf16.mxu0 0
        %2782 = vmatpush2.bf16.xpose.msra.mxu0 0
        %2783 = vmatprep.subr.bf16.mxu0 0
        %2784 = vmatpush2.bf16.xpose.msra.mxu0 0
        %2785 = vmatprep.mubr.bf16.mxu0 0
        %2786 = vmatmul.mubr.bf16.gmra.mxu0 %v2748
        %v2787 = vpop.f32.mrf.mxu0
        %v2788 = vadd.f32 0.0, %v2787
        %v2789 = vpop.f32.mrf.mxu0
        %v2790 = vpop.f32.mrf.mxu0
        %v2791 = vpop.f32.mrf.mxu0
        %2792 = vdwg.mxu0
        %2794 = vrot.lane.b32.xlu0 %v1368, 96
        %v2795 = vpop.permute.xlu0 %2794
        %v2797 = vsel %vm1374, %v1368, 0
        %v2800 = vsel %vm1374, %v2795, 0
        %2802 = vmatprep.subr.bf16.mxu0 0
        %2803 = vmatpush1.bf16.xpose.msra.mxu0 0
        %2804 = vmatprep.subr.bf16.mxu0 0
        %2805 = vmatpush1.bf16.xpose.msra.mxu0 0
        %2806 = vmatprep.subr.bf16.mxu0 0
        %2807 = vmatpush1.bf16.xpose.msra.mxu0 0
        %2808 = vmatprep.subr.bf16.mxu0 0
        %2809 = vmatpush1.bf16.xpose.msra.mxu0 0
        %2810 = vmatprep.subr.bf16.mxu0 0
        %2811 = vmatpush1.bf16.xpose.msra.mxu0 0
        %2812 = vmatprep.subr.bf16.mxu0 0
        %2813 = vmatpush1.bf16.xpose.msra.mxu0 0
        %2814 = vmatprep.subr.bf16.mxu0 0
        %2815 = vmatpush1.bf16.xpose.msra.mxu0 0
        %2816 = vmatprep.subr.bf16.mxu0 0
        %2817 = vmatpush1.bf16.xpose.msra.mxu0 %v2800
        %2818 = vmatprep.subr.bf16.mxu0 0
        %2819 = vmatpush2.bf16.xpose.msra.mxu0 0
        %2820 = vmatprep.subr.bf16.mxu0 0
        %2821 = vmatpush2.bf16.xpose.msra.mxu0 0
        %2822 = vmatprep.subr.bf16.mxu0 0
        %2823 = vmatpush2.bf16.xpose.msra.mxu0 0
        %2824 = vmatprep.subr.bf16.mxu0 0
        %2825 = vmatpush2.bf16.xpose.msra.mxu0 0
        %2826 = vmatprep.subr.bf16.mxu0 0
        %2827 = vmatpush2.bf16.xpose.msra.mxu0 0
        %2828 = vmatprep.subr.bf16.mxu0 0
        %2829 = vmatpush2.bf16.xpose.msra.mxu0 0
        %2830 = vmatprep.subr.bf16.mxu0 0
        %2831 = vmatpush2.bf16.xpose.msra.mxu0 0
        %2832 = vmatprep.subr.bf16.mxu0 0
        %2833 = vmatpush2.bf16.xpose.msra.mxu0 0
        %2834 = vmatprep.mubr.bf16.mxu0 0
        %2835 = vmatmul.mubr.bf16.gmra.mxu0 %v2797
        %v2836 = vpop.f32.mrf.mxu0
        %v2837 = vadd.f32 0.0, %v2836
        %v2838 = vpop.f32.mrf.mxu0
        %v2839 = vpop.f32.mrf.mxu0
        %v2840 = vpop.f32.mrf.mxu0
        %2841 = vdwg.mxu0
        %2843 = vrot.lane.b32.xlu0 %v1369, 96
        %v2844 = vpop.permute.xlu0 %2843
        %v2846 = vsel %vm1374, %v1369, 0
        %v2849 = vsel %vm1374, %v2844, 0
        %2851 = vmatprep.subr.bf16.mxu0 0
        %2852 = vmatpush1.bf16.xpose.msra.mxu0 0
        %2853 = vmatprep.subr.bf16.mxu0 0
        %2854 = vmatpush1.bf16.xpose.msra.mxu0 0
        %2855 = vmatprep.subr.bf16.mxu0 0
        %2856 = vmatpush1.bf16.xpose.msra.mxu0 0
        %2857 = vmatprep.subr.bf16.mxu0 0
        %2858 = vmatpush1.bf16.xpose.msra.mxu0 0
        %2859 = vmatprep.subr.bf16.mxu0 0
        %2860 = vmatpush1.bf16.xpose.msra.mxu0 0
        %2861 = vmatprep.subr.bf16.mxu0 0
        %2862 = vmatpush1.bf16.xpose.msra.mxu0 0
        %2863 = vmatprep.subr.bf16.mxu0 0
        %2864 = vmatpush1.bf16.xpose.msra.mxu0 0
        %2865 = vmatprep.subr.bf16.mxu0 0
        %2866 = vmatpush1.bf16.xpose.msra.mxu0 %v2849
        %2867 = vmatprep.subr.bf16.mxu0 0
        %2868 = vmatpush2.bf16.xpose.msra.mxu0 0
        %2869 = vmatprep.subr.bf16.mxu0 0
        %2870 = vmatpush2.bf16.xpose.msra.mxu0 0
        %2871 = vmatprep.subr.bf16.mxu0 0
        %2872 = vmatpush2.bf16.xpose.msra.mxu0 0
        %2873 = vmatprep.subr.bf16.mxu0 0
        %2874 = vmatpush2.bf16.xpose.msra.mxu0 0
        %2875 = vmatprep.subr.bf16.mxu0 0
        %2876 = vmatpush2.bf16.xpose.msra.mxu0 0
        %2877 = vmatprep.subr.bf16.mxu0 0
        %2878 = vmatpush2.bf16.xpose.msra.mxu0 0
        %2879 = vmatprep.subr.bf16.mxu0 0
        %2880 = vmatpush2.bf16.xpose.msra.mxu0 0
        %2881 = vmatprep.subr.bf16.mxu0 0
        %2882 = vmatpush2.bf16.xpose.msra.mxu0 0
        %2883 = vmatprep.mubr.bf16.mxu0 0
        %2884 = vmatmul.mubr.bf16.gmra.mxu0 %v2846
        %v2885 = vpop.f32.mrf.mxu0
        %v2886 = vadd.f32 0.0, %v2885
        %v2887 = vpop.f32.mrf.mxu0
        %v2888 = vpop.f32.mrf.mxu0
        %v2889 = vpop.f32.mrf.mxu0
        %2890 = vdwg.mxu0
        %2892 = vrot.lane.b32.xlu0 %v1370, 96
        %v2893 = vpop.permute.xlu0 %2892
        %v2895 = vsel %vm1374, %v1370, 0
        %v2898 = vsel %vm1374, %v2893, 0
        %2900 = vmatprep.subr.bf16.mxu0 0
        %2901 = vmatpush1.bf16.xpose.msra.mxu0 0
        %2902 = vmatprep.subr.bf16.mxu0 0
        %2903 = vmatpush1.bf16.xpose.msra.mxu0 0
        %2904 = vmatprep.subr.bf16.mxu0 0
        %2905 = vmatpush1.bf16.xpose.msra.mxu0 0
        %2906 = vmatprep.subr.bf16.mxu0 0
        %2907 = vmatpush1.bf16.xpose.msra.mxu0 0
        %2908 = vmatprep.subr.bf16.mxu0 0
        %2909 = vmatpush1.bf16.xpose.msra.mxu0 0
        %2910 = vmatprep.subr.bf16.mxu0 0
        %2911 = vmatpush1.bf16.xpose.msra.mxu0 0
        %2912 = vmatprep.subr.bf16.mxu0 0
        %2913 = vmatpush1.bf16.xpose.msra.mxu0 0
        %2914 = vmatprep.subr.bf16.mxu0 0
        %2915 = vmatpush1.bf16.xpose.msra.mxu0 %v2898
        %2916 = vmatprep.subr.bf16.mxu0 0
        %2917 = vmatpush2.bf16.xpose.msra.mxu0 0
        %2918 = vmatprep.subr.bf16.mxu0 0
        %2919 = vmatpush2.bf16.xpose.msra.mxu0 0
        %2920 = vmatprep.subr.bf16.mxu0 0
        %2921 = vmatpush2.bf16.xpose.msra.mxu0 0
        %2922 = vmatprep.subr.bf16.mxu0 0
        %2923 = vmatpush2.bf16.xpose.msra.mxu0 0
        %2924 = vmatprep.subr.bf16.mxu0 0
        %2925 = vmatpush2.bf16.xpose.msra.mxu0 0
        %2926 = vmatprep.subr.bf16.mxu0 0
        %2927 = vmatpush2.bf16.xpose.msra.mxu0 0
        %2928 = vmatprep.subr.bf16.mxu0 0
        %2929 = vmatpush2.bf16.xpose.msra.mxu0 0
        %2930 = vmatprep.subr.bf16.mxu0 0
        %2931 = vmatpush2.bf16.xpose.msra.mxu0 0
        %2932 = vmatprep.mubr.bf16.mxu0 0
        %2933 = vmatmul.mubr.bf16.gmra.mxu0 %v2895
        %v2934 = vpop.f32.mrf.mxu0
        %v2935 = vadd.f32 0.0, %v2934
        %v2936 = vpop.f32.mrf.mxu0
        %v2937 = vpop.f32.mrf.mxu0
        %v2938 = vpop.f32.mrf.mxu0
        %2939 = vdwg.mxu0
        %vm2940 = vcmask 9216
        %v2941 = vsel %vm2940, %v1416, -inf
        %2942 = vmax.xlane.f32.xlu0 %v2941
        %v2943 = vpop.xlane.xlu0 %2942
        %v2944 = vsel %vm2940, %v1465, -inf
        %2945 = vmax.xlane.f32.xlu0 %v2944
        %v2946 = vpop.xlane.xlu0 %2945
        %v2947 = vsel %vm2940, %v1514, -inf
        %2948 = vmax.xlane.f32.xlu0 %v2947
        %v2949 = vpop.xlane.xlu0 %2948
        %v2950 = vsel %vm2940, %v1563, -inf
        %2951 = vmax.xlane.f32.xlu0 %v2950
        %v2952 = vpop.xlane.xlu0 %2951
        %v2953 = vsel %vm2940, %v1612, -inf
        %2954 = vmax.xlane.f32.xlu0 %v2953
        %v2955 = vpop.xlane.xlu0 %2954
        %v2956 = vsel %vm2940, %v1661, -inf
        %2957 = vmax.xlane.f32.xlu0 %v2956
        %v2958 = vpop.xlane.xlu0 %2957
        %v2959 = vsel %vm2940, %v1710, -inf
        %2960 = vmax.xlane.f32.xlu0 %v2959
        %v2961 = vpop.xlane.xlu0 %2960
        %v2962 = vsel %vm2940, %v1759, -inf
        %2963 = vmax.xlane.f32.xlu0 %v2962
        %v2964 = vpop.xlane.xlu0 %2963
        %v2965 = vsel %vm2940, %v1808, -inf
        %2966 = vmax.xlane.f32.xlu0 %v2965
        %v2967 = vpop.xlane.xlu0 %2966
        %v2968 = vsel %vm2940, %v1857, -inf
        %2969 = vmax.xlane.f32.xlu0 %v2968
        %v2970 = vpop.xlane.xlu0 %2969
        %v2971 = vsel %vm2940, %v1906, -inf
        %2972 = vmax.xlane.f32.xlu0 %v2971
        %v2973 = vpop.xlane.xlu0 %2972
        %v2974 = vsel %vm2940, %v1955, -inf
        %2975 = vmax.xlane.f32.xlu0 %v2974
        %v2976 = vpop.xlane.xlu0 %2975
        %v2977 = vsel %vm2940, %v2004, -inf
        %2978 = vmax.xlane.f32.xlu0 %v2977
        %v2979 = vpop.xlane.xlu0 %2978
        %v2980 = vsel %vm2940, %v2053, -inf
        %2981 = vmax.xlane.f32.xlu0 %v2980
        %v2982 = vpop.xlane.xlu0 %2981
        %v2983 = vsel %vm2940, %v2102, -inf
        %2984 = vmax.xlane.f32.xlu0 %v2983
        %v2985 = vpop.xlane.xlu0 %2984
        %v2986 = vsel %vm2940, %v2151, -inf
        %2987 = vmax.xlane.f32.xlu0 %v2986
        %v2988 = vpop.xlane.xlu0 %2987
        %v2989 = vsel %vm2940, %v2200, -inf
        %2990 = vmax.xlane.f32.xlu0 %v2989
        %v2991 = vpop.xlane.xlu0 %2990
        %v2992 = vsel %vm2940, %v2249, -inf
        %2993 = vmax.xlane.f32.xlu0 %v2992
        %v2994 = vpop.xlane.xlu0 %2993
        %v2995 = vsel %vm2940, %v2298, -inf
        %2996 = vmax.xlane.f32.xlu0 %v2995
        %v2997 = vpop.xlane.xlu0 %2996
        %v2998 = vsel %vm2940, %v2347, -inf
        %2999 = vmax.xlane.f32.xlu0 %v2998
        %v3000 = vpop.xlane.xlu0 %2999
        %v3001 = vsel %vm2940, %v2396, -inf
        %3002 = vmax.xlane.f32.xlu0 %v3001
        %v3003 = vpop.xlane.xlu0 %3002
        %v3004 = vsel %vm2940, %v2445, -inf
        %3005 = vmax.xlane.f32.xlu0 %v3004
        %v3006 = vpop.xlane.xlu0 %3005
        %v3007 = vsel %vm2940, %v2494, -inf
        %3008 = vmax.xlane.f32.xlu0 %v3007
        %v3009 = vpop.xlane.xlu0 %3008
        %v3010 = vsel %vm2940, %v2543, -inf
        %3011 = vmax.xlane.f32.xlu0 %v3010
        %v3012 = vpop.xlane.xlu0 %3011
        %v3013 = vsel %vm2940, %v2592, -inf
        %3014 = vmax.xlane.f32.xlu0 %v3013
        %v3015 = vpop.xlane.xlu0 %3014
        %v3016 = vsel %vm2940, %v2641, -inf
        %3017 = vmax.xlane.f32.xlu0 %v3016
        %v3018 = vpop.xlane.xlu0 %3017
        %v3019 = vsel %vm2940, %v2690, -inf
        %3020 = vmax.xlane.f32.xlu0 %v3019
        %v3021 = vpop.xlane.xlu0 %3020
        %v3022 = vsel %vm2940, %v2739, -inf
        %3023 = vmax.xlane.f32.xlu0 %v3022
        %v3024 = vpop.xlane.xlu0 %3023
        %v3025 = vsel %vm2940, %v2788, -inf
        %3026 = vmax.xlane.f32.xlu0 %v3025
        %v3027 = vpop.xlane.xlu0 %3026
        %v3028 = vsel %vm2940, %v2837, -inf
        %3029 = vmax.xlane.f32.xlu0 %v3028
        %v3030 = vpop.xlane.xlu0 %3029
        %v3031 = vsel %vm2940, %v2886, -inf
        %3032 = vmax.xlane.f32.xlu0 %v3031
        %v3033 = vpop.xlane.xlu0 %3032
        %v3034 = vsel %vm2940, %v2935, -inf
        %3035 = vmax.xlane.f32.xlu0 %v3034
        %v3036 = vpop.xlane.xlu0 %3035
        %v3037 = vsub.f32 %v1416, %v2943
        %v3038 = vsub.f32 %v1465, %v2946
        %v3039 = vsub.f32 %v1514, %v2949
        %v3040 = vsub.f32 %v1563, %v2952
        %v3041 = vsub.f32 %v1612, %v2955
        %v3042 = vsub.f32 %v1661, %v2958
        %v3043 = vsub.f32 %v1710, %v2961
        %v3044 = vsub.f32 %v1759, %v2964
        %v3045 = vsub.f32 %v1808, %v2967
        %v3046 = vsub.f32 %v1857, %v2970
        %v3047 = vsub.f32 %v1906, %v2973
        %v3048 = vsub.f32 %v1955, %v2976
        %v3049 = vsub.f32 %v2004, %v2979
        %v3050 = vsub.f32 %v2053, %v2982
        %v3051 = vsub.f32 %v2102, %v2985
        %v3052 = vsub.f32 %v2151, %v2988
        %v3053 = vsub.f32 %v2200, %v2991
        %v3054 = vsub.f32 %v2249, %v2994
        %v3055 = vsub.f32 %v2298, %v2997
        %v3056 = vsub.f32 %v2347, %v3000
        %v3057 = vsub.f32 %v2396, %v3003
        %v3058 = vsub.f32 %v2445, %v3006
        %v3059 = vsub.f32 %v2494, %v3009
        %v3060 = vsub.f32 %v2543, %v3012
        %v3061 = vsub.f32 %v2592, %v3015
        %v3062 = vsub.f32 %v2641, %v3018
        %v3063 = vsub.f32 %v2690, %v3021
        %v3064 = vsub.f32 %v2739, %v3024
        %v3065 = vsub.f32 %v2788, %v3027
        %v3066 = vsub.f32 %v2837, %v3030
        %v3067 = vsub.f32 %v2886, %v3033
        %v3068 = vsub.f32 %v2935, %v3036
        %v3069 = vmul.f32 %v3037, 1.442695
        %v3070 = vpow.pop %v3069
        %v3071 = vmul.f32 %v3038, 1.442695
        %v3072 = vpow.pop %v3071
        %v3073 = vmul.f32 %v3039, 1.442695
        %v3074 = vpow.pop %v3073
        %v3075 = vmul.f32 %v3040, 1.442695
        %v3076 = vpow.pop %v3075
        %v3077 = vmul.f32 %v3041, 1.442695
        %v3078 = vpow.pop %v3077
        %v3079 = vmul.f32 %v3042, 1.442695
        %v3080 = vpow.pop %v3079
        %v3081 = vmul.f32 %v3043, 1.442695
        %v3082 = vpow.pop %v3081
        %v3083 = vmul.f32 %v3044, 1.442695
        %v3084 = vpow.pop %v3083
        %v3085 = vmul.f32 %v3045, 1.442695
        %v3086 = vpow.pop %v3085
        %v3087 = vmul.f32 %v3046, 1.442695
        %v3088 = vpow.pop %v3087
        %v3089 = vmul.f32 %v3047, 1.442695
        %v3090 = vpow.pop %v3089
        %v3091 = vmul.f32 %v3048, 1.442695
        %v3092 = vpow.pop %v3091
        %v3093 = vmul.f32 %v3049, 1.442695
        %v3094 = vpow.pop %v3093
        %v3095 = vmul.f32 %v3050, 1.442695
        %v3096 = vpow.pop %v3095
        %v3097 = vmul.f32 %v3051, 1.442695
        %v3098 = vpow.pop %v3097
        %v3099 = vmul.f32 %v3052, 1.442695
        %v3100 = vpow.pop %v3099
        %v3101 = vmul.f32 %v3053, 1.442695
        %v3102 = vpow.pop %v3101
        %v3103 = vmul.f32 %v3054, 1.442695
        %v3104 = vpow.pop %v3103
        %v3105 = vmul.f32 %v3055, 1.442695
        %v3106 = vpow.pop %v3105
        %v3107 = vmul.f32 %v3056, 1.442695
        %v3108 = vpow.pop %v3107
        %v3109 = vmul.f32 %v3057, 1.442695
        %v3110 = vpow.pop %v3109
        %v3111 = vmul.f32 %v3058, 1.442695
        %v3112 = vpow.pop %v3111
        %v3113 = vmul.f32 %v3059, 1.442695
        %v3114 = vpow.pop %v3113
        %v3115 = vmul.f32 %v3060, 1.442695
        %v3116 = vpow.pop %v3115
        %v3117 = vmul.f32 %v3061, 1.442695
        %v3118 = vpow.pop %v3117
        %v3119 = vmul.f32 %v3062, 1.442695
        %v3120 = vpow.pop %v3119
        %v3121 = vmul.f32 %v3063, 1.442695
        %v3122 = vpow.pop %v3121
        %v3123 = vmul.f32 %v3064, 1.442695
        %v3124 = vpow.pop %v3123
        %v3125 = vmul.f32 %v3065, 1.442695
        %v3126 = vpow.pop %v3125
        %v3127 = vmul.f32 %v3066, 1.442695
        %v3128 = vpow.pop %v3127
        %v3129 = vmul.f32 %v3067, 1.442695
        %v3130 = vpow.pop %v3129
        %v3131 = vmul.f32 %v3068, 1.442695
        %v3132 = vpow.pop %v3131
        %v3133 = vsel %vm2940, %v3070, 0.0
        %3134 = vadd.xlane.f32.xlu0 %v3133
        %v3135 = vpop.xlane.xlu0 %3134
        %v3136 = vsel %vm2940, %v3072, 0.0
        %3137 = vadd.xlane.f32.xlu0 %v3136
        %v3138 = vpop.xlane.xlu0 %3137
        %v3139 = vsel %vm2940, %v3074, 0.0
        %3140 = vadd.xlane.f32.xlu0 %v3139
        %v3141 = vpop.xlane.xlu0 %3140
        %v3142 = vsel %vm2940, %v3076, 0.0
        %3143 = vadd.xlane.f32.xlu0 %v3142
        %v3144 = vpop.xlane.xlu0 %3143
        %v3145 = vsel %vm2940, %v3078, 0.0
        %3146 = vadd.xlane.f32.xlu0 %v3145
        %v3147 = vpop.xlane.xlu0 %3146
        %v3148 = vsel %vm2940, %v3080, 0.0
        %3149 = vadd.xlane.f32.xlu0 %v3148
        %v3150 = vpop.xlane.xlu0 %3149
        %v3151 = vsel %vm2940, %v3082, 0.0
        %3152 = vadd.xlane.f32.xlu0 %v3151
        %v3153 = vpop.xlane.xlu0 %3152
        %v3154 = vsel %vm2940, %v3084, 0.0
        %3155 = vadd.xlane.f32.xlu0 %v3154
        %v3156 = vpop.xlane.xlu0 %3155
        %v3157 = vsel %vm2940, %v3086, 0.0
        %3158 = vadd.xlane.f32.xlu0 %v3157
        %v3159 = vpop.xlane.xlu0 %3158
        %v3160 = vsel %vm2940, %v3088, 0.0
        %3161 = vadd.xlane.f32.xlu0 %v3160
        %v3162 = vpop.xlane.xlu0 %3161
        %v3163 = vsel %vm2940, %v3090, 0.0
        %3164 = vadd.xlane.f32.xlu0 %v3163
        %v3165 = vpop.xlane.xlu0 %3164
        %v3166 = vsel %vm2940, %v3092, 0.0
        %3167 = vadd.xlane.f32.xlu0 %v3166
        %v3168 = vpop.xlane.xlu0 %3167
        %v3169 = vsel %vm2940, %v3094, 0.0
        %3170 = vadd.xlane.f32.xlu0 %v3169
        %v3171 = vpop.xlane.xlu0 %3170
        %v3172 = vsel %vm2940, %v3096, 0.0
        %3173 = vadd.xlane.f32.xlu0 %v3172
        %v3174 = vpop.xlane.xlu0 %3173
        %v3175 = vsel %vm2940, %v3098, 0.0
        %3176 = vadd.xlane.f32.xlu0 %v3175
        %v3177 = vpop.xlane.xlu0 %3176
        %v3178 = vsel %vm2940, %v3100, 0.0
        %3179 = vadd.xlane.f32.xlu0 %v3178
        %v3180 = vpop.xlane.xlu0 %3179
        %v3181 = vsel %vm2940, %v3102, 0.0
        %3182 = vadd.xlane.f32.xlu0 %v3181
        %v3183 = vpop.xlane.xlu0 %3182
        %v3184 = vsel %vm2940, %v3104, 0.0
        %3185 = vadd.xlane.f32.xlu0 %v3184
        %v3186 = vpop.xlane.xlu0 %3185
        %v3187 = vsel %vm2940, %v3106, 0.0
        %3188 = vadd.xlane.f32.xlu0 %v3187
        %v3189 = vpop.xlane.xlu0 %3188
        %v3190 = vsel %vm2940, %v3108, 0.0
        %3191 = vadd.xlane.f32.xlu0 %v3190
        %v3192 = vpop.xlane.xlu0 %3191
        %v3193 = vsel %vm2940, %v3110, 0.0
        %3194 = vadd.xlane.f32.xlu0 %v3193
        %v3195 = vpop.xlane.xlu0 %3194
        %v3196 = vsel %vm2940, %v3112, 0.0
        %3197 = vadd.xlane.f32.xlu0 %v3196
        %v3198 = vpop.xlane.xlu0 %3197
        %v3199 = vsel %vm2940, %v3114, 0.0
        %3200 = vadd.xlane.f32.xlu0 %v3199
        %v3201 = vpop.xlane.xlu0 %3200
        %v3202 = vsel %vm2940, %v3116, 0.0
        %3203 = vadd.xlane.f32.xlu0 %v3202
        %v3204 = vpop.xlane.xlu0 %3203
        %v3205 = vsel %vm2940, %v3118, 0.0
        %3206 = vadd.xlane.f32.xlu0 %v3205
        %v3207 = vpop.xlane.xlu0 %3206
        %v3208 = vsel %vm2940, %v3120, 0.0
        %3209 = vadd.xlane.f32.xlu0 %v3208
        %v3210 = vpop.xlane.xlu0 %3209
        %v3211 = vsel %vm2940, %v3122, 0.0
        %3212 = vadd.xlane.f32.xlu0 %v3211
        %v3213 = vpop.xlane.xlu0 %3212
        %v3214 = vsel %vm2940, %v3124, 0.0
        %3215 = vadd.xlane.f32.xlu0 %v3214
        %v3216 = vpop.xlane.xlu0 %3215
        %v3217 = vsel %vm2940, %v3126, 0.0
        %3218 = vadd.xlane.f32.xlu0 %v3217
        %v3219 = vpop.xlane.xlu0 %3218
        %v3220 = vsel %vm2940, %v3128, 0.0
        %3221 = vadd.xlane.f32.xlu0 %v3220
        %v3222 = vpop.xlane.xlu0 %3221
        %v3223 = vsel %vm2940, %v3130, 0.0
        %3224 = vadd.xlane.f32.xlu0 %v3223
        %v3225 = vpop.xlane.xlu0 %3224
        %v3226 = vsel %vm2940, %v3132, 0.0
        %3227 = vadd.xlane.f32.xlu0 %v3226
        %v3228 = vpop.xlane.xlu0 %3227
        %v3229 = vrcp.pop %v3135
        %v3230 = vrcp.pop %v3138
        %v3231 = vrcp.pop %v3141
        %v3232 = vrcp.pop %v3144
        %v3233 = vrcp.pop %v3147
        %v3234 = vrcp.pop %v3150
        %v3235 = vrcp.pop %v3153
        %v3236 = vrcp.pop %v3156
        %v3237 = vrcp.pop %v3159
        %v3238 = vrcp.pop %v3162
        %v3239 = vrcp.pop %v3165
        %v3240 = vrcp.pop %v3168
        %v3241 = vrcp.pop %v3171
        %v3242 = vrcp.pop %v3174
        %v3243 = vrcp.pop %v3177
        %v3244 = vrcp.pop %v3180
        %v3245 = vrcp.pop %v3183
        %v3246 = vrcp.pop %v3186
        %v3247 = vrcp.pop %v3189
        %v3248 = vrcp.pop %v3192
        %v3249 = vrcp.pop %v3195
        %v3250 = vrcp.pop %v3198
        %v3251 = vrcp.pop %v3201
        %v3252 = vrcp.pop %v3204
        %v3253 = vrcp.pop %v3207
        %v3254 = vrcp.pop %v3210
        %v3255 = vrcp.pop %v3213
        %v3256 = vrcp.pop %v3216
        %v3257 = vrcp.pop %v3219
        %v3258 = vrcp.pop %v3222
        %v3259 = vrcp.pop %v3225
        %v3260 = vrcp.pop %v3228
        %v3261 = vmul.f32 %v3070, %v3229
        %v3262 = vmul.f32 %v3072, %v3230
        %v3263 = vmul.f32 %v3074, %v3231
        %v3264 = vmul.f32 %v3076, %v3232
        %v3265 = vmul.f32 %v3078, %v3233
        %v3266 = vmul.f32 %v3080, %v3234
        %v3267 = vmul.f32 %v3082, %v3235
        %v3268 = vmul.f32 %v3084, %v3236
        %v3269 = vmul.f32 %v3086, %v3237
        %v3270 = vmul.f32 %v3088, %v3238
        %v3271 = vmul.f32 %v3090, %v3239
        %v3272 = vmul.f32 %v3092, %v3240
        %v3273 = vmul.f32 %v3094, %v3241
        %v3274 = vmul.f32 %v3096, %v3242
        %v3275 = vmul.f32 %v3098, %v3243
        %v3276 = vmul.f32 %v3100, %v3244
        %v3277 = vmul.f32 %v3102, %v3245
        %v3278 = vmul.f32 %v3104, %v3246
        %v3279 = vmul.f32 %v3106, %v3247
        %v3280 = vmul.f32 %v3108, %v3248
        %v3281 = vmul.f32 %v3110, %v3249
        %v3282 = vmul.f32 %v3112, %v3250
        %v3283 = vmul.f32 %v3114, %v3251
        %v3284 = vmul.f32 %v3116, %v3252
        %v3285 = vmul.f32 %v3118, %v3253
        %v3286 = vmul.f32 %v3120, %v3254
        %v3287 = vmul.f32 %v3122, %v3255
        %v3288 = vmul.f32 %v3124, %v3256
        %v3289 = vmul.f32 %v3126, %v3257
        %v3290 = vmul.f32 %v3128, %v3258
        %v3291 = vmul.f32 %v3130, %v3259
        %v3292 = vmul.f32 %v3132, %v3260
        %v3293 = vpack.c.bf16 %v3261, %v3261
        %v3294 = vpack.c.bf16 %v3262, %v3262
        %v3295 = vpack.c.bf16 %v3263, %v3263
        %v3296 = vpack.c.bf16 %v3264, %v3264
        %v3297 = vpack.c.bf16 %v3265, %v3265
        %v3298 = vpack.c.bf16 %v3266, %v3266
        %v3299 = vpack.c.bf16 %v3267, %v3267
        %v3300 = vpack.c.bf16 %v3268, %v3268
        %v3301 = vpack.c.bf16 %v3269, %v3269
        %v3302 = vpack.c.bf16 %v3270, %v3270
        %v3303 = vpack.c.bf16 %v3271, %v3271
        %v3304 = vpack.c.bf16 %v3272, %v3272
        %v3305 = vpack.c.bf16 %v3273, %v3273
        %v3306 = vpack.c.bf16 %v3274, %v3274
        %v3307 = vpack.c.bf16 %v3275, %v3275
        %v3308 = vpack.c.bf16 %v3276, %v3276
        %v3309 = vpack.c.bf16 %v3277, %v3277
        %v3310 = vpack.c.bf16 %v3278, %v3278
        %v3311 = vpack.c.bf16 %v3279, %v3279
        %v3312 = vpack.c.bf16 %v3280, %v3280
        %v3313 = vpack.c.bf16 %v3281, %v3281
        %v3314 = vpack.c.bf16 %v3282, %v3282
        %v3315 = vpack.c.bf16 %v3283, %v3283
        %v3316 = vpack.c.bf16 %v3284, %v3284
        %v3317 = vpack.c.bf16 %v3285, %v3285
        %v3318 = vpack.c.bf16 %v3286, %v3286
        %v3319 = vpack.c.bf16 %v3287, %v3287
        %v3320 = vpack.c.bf16 %v3288, %v3288
        %v3321 = vpack.c.bf16 %v3289, %v3289
        %v3322 = vpack.c.bf16 %v3290, %v3290
        %v3323 = vpack.c.bf16 %v3291, %v3291
        %v3324 = vpack.c.bf16 %v3292, %v3292
        %3325 = vrot.lane.b32.xlu0 %v1339, 64
        %v3326 = vpop.permute.xlu0 %3325
        %vm3327 = vcmask 15360
        %v3329 = vsel %vm3327, %v3293, 0
        %vm3331 = vcmask 1040384
        %v3333 = vsel %vm3331, %v3326, 0
        %3335 = vmatprep.subr.bf16.mxu0 0
        %3336 = vmatpush1.bf16.msra.mxu0 0
        %3337 = vmatprep.subr.bf16.mxu0 0
        %3338 = vmatpush1.bf16.msra.mxu0 0
        %3339 = vmatprep.subr.bf16.mxu0 0
        %3340 = vmatpush1.bf16.msra.mxu0 0
        %3341 = vmatprep.subr.bf16.mxu0 0
        %3342 = vmatpush1.bf16.msra.mxu0 0
        %3343 = vmatprep.subr.bf16.mxu0 0
        %3344 = vmatpush1.bf16.msra.mxu0 0
        %3345 = vmatprep.subr.bf16.mxu0 0
        %3346 = vmatpush1.bf16.msra.mxu0 0
        %3347 = vmatprep.subr.bf16.mxu0 0
        %3348 = vmatpush1.bf16.msra.mxu0 0
        %3349 = vmatprep.subr.bf16.mxu0 0
        %3350 = vmatpush1.bf16.msra.mxu0 %v3333
        %3351 = vmatprep.subr.bf16.mxu0 0
        %3352 = vmatpush2.bf16.msra.mxu0 0
        %3353 = vmatprep.subr.bf16.mxu0 0
        %3354 = vmatpush2.bf16.msra.mxu0 0
        %3355 = vmatprep.subr.bf16.mxu0 0
        %3356 = vmatpush2.bf16.msra.mxu0 0
        %3357 = vmatprep.subr.bf16.mxu0 0
        %3358 = vmatpush2.bf16.msra.mxu0 0
        %3359 = vmatprep.subr.bf16.mxu0 0
        %3360 = vmatpush2.bf16.msra.mxu0 0
        %3361 = vmatprep.subr.bf16.mxu0 0
        %3362 = vmatpush2.bf16.msra.mxu0 0
        %3363 = vmatprep.subr.bf16.mxu0 0
        %3364 = vmatpush2.bf16.msra.mxu0 0
        %3365 = vmatprep.subr.bf16.mxu0 0
        %3366 = vmatpush2.bf16.msra.mxu0 0
        %3367 = vmatprep.mubr.bf16.mxu0 0
        %3368 = vmatmul.mubr.bf16.gmra.mxu0 %v3329
        %v3369 = vpop.f32.mrf.mxu0
        %v3370 = vadd.f32 0.0, %v3369
        %v3371 = vpop.f32.mrf.mxu0
        %v3372 = vpop.f32.mrf.mxu0
        %v3373 = vpop.f32.mrf.mxu0
        %3374 = vdwg.mxu0
        %3375 = vrot.lane.b32.xlu0 %v1340, 64
        %v3376 = vpop.permute.xlu0 %3375
        %v3378 = vsel %vm3327, %v3294, 0
        %v3381 = vsel %vm3331, %v3376, 0
        %3383 = vmatprep.subr.bf16.mxu0 0
        %3384 = vmatpush1.bf16.msra.mxu0 0
        %3385 = vmatprep.subr.bf16.mxu0 0
        %3386 = vmatpush1.bf16.msra.mxu0 0
        %3387 = vmatprep.subr.bf16.mxu0 0
        %3388 = vmatpush1.bf16.msra.mxu0 0
        %3389 = vmatprep.subr.bf16.mxu0 0
        %3390 = vmatpush1.bf16.msra.mxu0 0
        %3391 = vmatprep.subr.bf16.mxu0 0
        %3392 = vmatpush1.bf16.msra.mxu0 0
        %3393 = vmatprep.subr.bf16.mxu0 0
        %3394 = vmatpush1.bf16.msra.mxu0 0
        %3395 = vmatprep.subr.bf16.mxu0 0
        %3396 = vmatpush1.bf16.msra.mxu0 0
        %3397 = vmatprep.subr.bf16.mxu0 0
        %3398 = vmatpush1.bf16.msra.mxu0 %v3381
        %3399 = vmatprep.subr.bf16.mxu0 0
        %3400 = vmatpush2.bf16.msra.mxu0 0
        %3401 = vmatprep.subr.bf16.mxu0 0
        %3402 = vmatpush2.bf16.msra.mxu0 0
        %3403 = vmatprep.subr.bf16.mxu0 0
        %3404 = vmatpush2.bf16.msra.mxu0 0
        %3405 = vmatprep.subr.bf16.mxu0 0
        %3406 = vmatpush2.bf16.msra.mxu0 0
        %3407 = vmatprep.subr.bf16.mxu0 0
        %3408 = vmatpush2.bf16.msra.mxu0 0
        %3409 = vmatprep.subr.bf16.mxu0 0
        %3410 = vmatpush2.bf16.msra.mxu0 0
        %3411 = vmatprep.subr.bf16.mxu0 0
        %3412 = vmatpush2.bf16.msra.mxu0 0
        %3413 = vmatprep.subr.bf16.mxu0 0
        %3414 = vmatpush2.bf16.msra.mxu0 0
        %3415 = vmatprep.mubr.bf16.mxu0 0
        %3416 = vmatmul.mubr.bf16.gmra.mxu0 %v3378
        %v3417 = vpop.f32.mrf.mxu0
        %v3418 = vadd.f32 0.0, %v3417
        %v3419 = vpop.f32.mrf.mxu0
        %v3420 = vpop.f32.mrf.mxu0
        %v3421 = vpop.f32.mrf.mxu0
        %3422 = vdwg.mxu0
        %3423 = vrot.lane.b32.xlu0 %v1341, 64
        %v3424 = vpop.permute.xlu0 %3423
        %v3426 = vsel %vm3327, %v3295, 0
        %v3429 = vsel %vm3331, %v3424, 0
        %3431 = vmatprep.subr.bf16.mxu0 0
        %3432 = vmatpush1.bf16.msra.mxu0 0
        %3433 = vmatprep.subr.bf16.mxu0 0
        %3434 = vmatpush1.bf16.msra.mxu0 0
        %3435 = vmatprep.subr.bf16.mxu0 0
        %3436 = vmatpush1.bf16.msra.mxu0 0
        %3437 = vmatprep.subr.bf16.mxu0 0
        %3438 = vmatpush1.bf16.msra.mxu0 0
        %3439 = vmatprep.subr.bf16.mxu0 0
        %3440 = vmatpush1.bf16.msra.mxu0 0
        %3441 = vmatprep.subr.bf16.mxu0 0
        %3442 = vmatpush1.bf16.msra.mxu0 0
        %3443 = vmatprep.subr.bf16.mxu0 0
        %3444 = vmatpush1.bf16.msra.mxu0 0
        %3445 = vmatprep.subr.bf16.mxu0 0
        %3446 = vmatpush1.bf16.msra.mxu0 %v3429
        %3447 = vmatprep.subr.bf16.mxu0 0
        %3448 = vmatpush2.bf16.msra.mxu0 0
        %3449 = vmatprep.subr.bf16.mxu0 0
        %3450 = vmatpush2.bf16.msra.mxu0 0
        %3451 = vmatprep.subr.bf16.mxu0 0
        %3452 = vmatpush2.bf16.msra.mxu0 0
        %3453 = vmatprep.subr.bf16.mxu0 0
        %3454 = vmatpush2.bf16.msra.mxu0 0
        %3455 = vmatprep.subr.bf16.mxu0 0
        %3456 = vmatpush2.bf16.msra.mxu0 0
        %3457 = vmatprep.subr.bf16.mxu0 0
        %3458 = vmatpush2.bf16.msra.mxu0 0
        %3459 = vmatprep.subr.bf16.mxu0 0
        %3460 = vmatpush2.bf16.msra.mxu0 0
        %3461 = vmatprep.subr.bf16.mxu0 0
        %3462 = vmatpush2.bf16.msra.mxu0 0
        %3463 = vmatprep.mubr.bf16.mxu0 0
        %3464 = vmatmul.mubr.bf16.gmra.mxu0 %v3426
        %v3465 = vpop.f32.mrf.mxu0
        %v3466 = vadd.f32 0.0, %v3465
        %v3467 = vpop.f32.mrf.mxu0
        %v3468 = vpop.f32.mrf.mxu0
        %v3469 = vpop.f32.mrf.mxu0
        %3470 = vdwg.mxu0
        %3471 = vrot.lane.b32.xlu0 %v1342, 64
        %v3472 = vpop.permute.xlu0 %3471
        %v3474 = vsel %vm3327, %v3296, 0
        %v3477 = vsel %vm3331, %v3472, 0
        %3479 = vmatprep.subr.bf16.mxu0 0
        %3480 = vmatpush1.bf16.msra.mxu0 0
        %3481 = vmatprep.subr.bf16.mxu0 0
        %3482 = vmatpush1.bf16.msra.mxu0 0
        %3483 = vmatprep.subr.bf16.mxu0 0
        %3484 = vmatpush1.bf16.msra.mxu0 0
        %3485 = vmatprep.subr.bf16.mxu0 0
        %3486 = vmatpush1.bf16.msra.mxu0 0
        %3487 = vmatprep.subr.bf16.mxu0 0
        %3488 = vmatpush1.bf16.msra.mxu0 0
        %3489 = vmatprep.subr.bf16.mxu0 0
        %3490 = vmatpush1.bf16.msra.mxu0 0
        %3491 = vmatprep.subr.bf16.mxu0 0
        %3492 = vmatpush1.bf16.msra.mxu0 0
        %3493 = vmatprep.subr.bf16.mxu0 0
        %3494 = vmatpush1.bf16.msra.mxu0 %v3477
        %3495 = vmatprep.subr.bf16.mxu0 0
        %3496 = vmatpush2.bf16.msra.mxu0 0
        %3497 = vmatprep.subr.bf16.mxu0 0
        %3498 = vmatpush2.bf16.msra.mxu0 0
        %3499 = vmatprep.subr.bf16.mxu0 0
        %3500 = vmatpush2.bf16.msra.mxu0 0
        %3501 = vmatprep.subr.bf16.mxu0 0
        %3502 = vmatpush2.bf16.msra.mxu0 0
        %3503 = vmatprep.subr.bf16.mxu0 0
        %3504 = vmatpush2.bf16.msra.mxu0 0
        %3505 = vmatprep.subr.bf16.mxu0 0
        %3506 = vmatpush2.bf16.msra.mxu0 0
        %3507 = vmatprep.subr.bf16.mxu0 0
        %3508 = vmatpush2.bf16.msra.mxu0 0
        %3509 = vmatprep.subr.bf16.mxu0 0
        %3510 = vmatpush2.bf16.msra.mxu0 0
        %3511 = vmatprep.mubr.bf16.mxu0 0
        %3512 = vmatmul.mubr.bf16.gmra.mxu0 %v3474
        %v3513 = vpop.f32.mrf.mxu0
        %v3514 = vadd.f32 0.0, %v3513
        %v3515 = vpop.f32.mrf.mxu0
        %v3516 = vpop.f32.mrf.mxu0
        %v3517 = vpop.f32.mrf.mxu0
        %3518 = vdwg.mxu0
        %3519 = vrot.lane.b32.xlu0 %v1343, 64
        %v3520 = vpop.permute.xlu0 %3519
        %v3522 = vsel %vm3327, %v3297, 0
        %v3525 = vsel %vm3331, %v3520, 0
        %3527 = vmatprep.subr.bf16.mxu0 0
        %3528 = vmatpush1.bf16.msra.mxu0 0
        %3529 = vmatprep.subr.bf16.mxu0 0
        %3530 = vmatpush1.bf16.msra.mxu0 0
        %3531 = vmatprep.subr.bf16.mxu0 0
        %3532 = vmatpush1.bf16.msra.mxu0 0
        %3533 = vmatprep.subr.bf16.mxu0 0
        %3534 = vmatpush1.bf16.msra.mxu0 0
        %3535 = vmatprep.subr.bf16.mxu0 0
        %3536 = vmatpush1.bf16.msra.mxu0 0
        %3537 = vmatprep.subr.bf16.mxu0 0
        %3538 = vmatpush1.bf16.msra.mxu0 0
        %3539 = vmatprep.subr.bf16.mxu0 0
        %3540 = vmatpush1.bf16.msra.mxu0 0
        %3541 = vmatprep.subr.bf16.mxu0 0
        %3542 = vmatpush1.bf16.msra.mxu0 %v3525
        %3543 = vmatprep.subr.bf16.mxu0 0
        %3544 = vmatpush2.bf16.msra.mxu0 0
        %3545 = vmatprep.subr.bf16.mxu0 0
        %3546 = vmatpush2.bf16.msra.mxu0 0
        %3547 = vmatprep.subr.bf16.mxu0 0
        %3548 = vmatpush2.bf16.msra.mxu0 0
        %3549 = vmatprep.subr.bf16.mxu0 0
        %3550 = vmatpush2.bf16.msra.mxu0 0
        %3551 = vmatprep.subr.bf16.mxu0 0
        %3552 = vmatpush2.bf16.msra.mxu0 0
        %3553 = vmatprep.subr.bf16.mxu0 0
        %3554 = vmatpush2.bf16.msra.mxu0 0
        %3555 = vmatprep.subr.bf16.mxu0 0
        %3556 = vmatpush2.bf16.msra.mxu0 0
        %3557 = vmatprep.subr.bf16.mxu0 0
        %3558 = vmatpush2.bf16.msra.mxu0 0
        %3559 = vmatprep.mubr.bf16.mxu0 0
        %3560 = vmatmul.mubr.bf16.gmra.mxu0 %v3522
        %v3561 = vpop.f32.mrf.mxu0
        %v3562 = vadd.f32 0.0, %v3561
        %v3563 = vpop.f32.mrf.mxu0
        %v3564 = vpop.f32.mrf.mxu0
        %v3565 = vpop.f32.mrf.mxu0
        %3566 = vdwg.mxu0
        %3567 = vrot.lane.b32.xlu0 %v1344, 64
        %v3568 = vpop.permute.xlu0 %3567
        %v3570 = vsel %vm3327, %v3298, 0
        %v3573 = vsel %vm3331, %v3568, 0
        %3575 = vmatprep.subr.bf16.mxu0 0
        %3576 = vmatpush1.bf16.msra.mxu0 0
        %3577 = vmatprep.subr.bf16.mxu0 0
        %3578 = vmatpush1.bf16.msra.mxu0 0
        %3579 = vmatprep.subr.bf16.mxu0 0
        %3580 = vmatpush1.bf16.msra.mxu0 0
        %3581 = vmatprep.subr.bf16.mxu0 0
        %3582 = vmatpush1.bf16.msra.mxu0 0
        %3583 = vmatprep.subr.bf16.mxu0 0
        %3584 = vmatpush1.bf16.msra.mxu0 0
        %3585 = vmatprep.subr.bf16.mxu0 0
        %3586 = vmatpush1.bf16.msra.mxu0 0
        %3587 = vmatprep.subr.bf16.mxu0 0
        %3588 = vmatpush1.bf16.msra.mxu0 0
        %3589 = vmatprep.subr.bf16.mxu0 0
        %3590 = vmatpush1.bf16.msra.mxu0 %v3573
        %3591 = vmatprep.subr.bf16.mxu0 0
        %3592 = vmatpush2.bf16.msra.mxu0 0
        %3593 = vmatprep.subr.bf16.mxu0 0
        %3594 = vmatpush2.bf16.msra.mxu0 0
        %3595 = vmatprep.subr.bf16.mxu0 0
        %3596 = vmatpush2.bf16.msra.mxu0 0
        %3597 = vmatprep.subr.bf16.mxu0 0
        %3598 = vmatpush2.bf16.msra.mxu0 0
        %3599 = vmatprep.subr.bf16.mxu0 0
        %3600 = vmatpush2.bf16.msra.mxu0 0
        %3601 = vmatprep.subr.bf16.mxu0 0
        %3602 = vmatpush2.bf16.msra.mxu0 0
        %3603 = vmatprep.subr.bf16.mxu0 0
        %3604 = vmatpush2.bf16.msra.mxu0 0
        %3605 = vmatprep.subr.bf16.mxu0 0
        %3606 = vmatpush2.bf16.msra.mxu0 0
        %3607 = vmatprep.mubr.bf16.mxu0 0
        %3608 = vmatmul.mubr.bf16.gmra.mxu0 %v3570
        %v3609 = vpop.f32.mrf.mxu0
        %v3610 = vadd.f32 0.0, %v3609
        %v3611 = vpop.f32.mrf.mxu0
        %v3612 = vpop.f32.mrf.mxu0
        %v3613 = vpop.f32.mrf.mxu0
        %3614 = vdwg.mxu0
        %3615 = vrot.lane.b32.xlu0 %v1345, 64
        %v3616 = vpop.permute.xlu0 %3615
        %v3618 = vsel %vm3327, %v3299, 0
        %v3621 = vsel %vm3331, %v3616, 0
        %3623 = vmatprep.subr.bf16.mxu0 0
        %3624 = vmatpush1.bf16.msra.mxu0 0
        %3625 = vmatprep.subr.bf16.mxu0 0
        %3626 = vmatpush1.bf16.msra.mxu0 0
        %3627 = vmatprep.subr.bf16.mxu0 0
        %3628 = vmatpush1.bf16.msra.mxu0 0
        %3629 = vmatprep.subr.bf16.mxu0 0
        %3630 = vmatpush1.bf16.msra.mxu0 0
        %3631 = vmatprep.subr.bf16.mxu0 0
        %3632 = vmatpush1.bf16.msra.mxu0 0
        %3633 = vmatprep.subr.bf16.mxu0 0
        %3634 = vmatpush1.bf16.msra.mxu0 0
        %3635 = vmatprep.subr.bf16.mxu0 0
        %3636 = vmatpush1.bf16.msra.mxu0 0
        %3637 = vmatprep.subr.bf16.mxu0 0
        %3638 = vmatpush1.bf16.msra.mxu0 %v3621
        %3639 = vmatprep.subr.bf16.mxu0 0
        %3640 = vmatpush2.bf16.msra.mxu0 0
        %3641 = vmatprep.subr.bf16.mxu0 0
        %3642 = vmatpush2.bf16.msra.mxu0 0
        %3643 = vmatprep.subr.bf16.mxu0 0
        %3644 = vmatpush2.bf16.msra.mxu0 0
        %3645 = vmatprep.subr.bf16.mxu0 0
        %3646 = vmatpush2.bf16.msra.mxu0 0
        %3647 = vmatprep.subr.bf16.mxu0 0
        %3648 = vmatpush2.bf16.msra.mxu0 0
        %3649 = vmatprep.subr.bf16.mxu0 0
        %3650 = vmatpush2.bf16.msra.mxu0 0
        %3651 = vmatprep.subr.bf16.mxu0 0
        %3652 = vmatpush2.bf16.msra.mxu0 0
        %3653 = vmatprep.subr.bf16.mxu0 0
        %3654 = vmatpush2.bf16.msra.mxu0 0
        %3655 = vmatprep.mubr.bf16.mxu0 0
        %3656 = vmatmul.mubr.bf16.gmra.mxu0 %v3618
        %v3657 = vpop.f32.mrf.mxu0
        %v3658 = vadd.f32 0.0, %v3657
        %v3659 = vpop.f32.mrf.mxu0
        %v3660 = vpop.f32.mrf.mxu0
        %v3661 = vpop.f32.mrf.mxu0
        %3662 = vdwg.mxu0
        %3663 = vrot.lane.b32.xlu0 %v1346, 64
        %v3664 = vpop.permute.xlu0 %3663
        %v3666 = vsel %vm3327, %v3300, 0
        %v3669 = vsel %vm3331, %v3664, 0
        %3671 = vmatprep.subr.bf16.mxu0 0
        %3672 = vmatpush1.bf16.msra.mxu0 0
        %3673 = vmatprep.subr.bf16.mxu0 0
        %3674 = vmatpush1.bf16.msra.mxu0 0
        %3675 = vmatprep.subr.bf16.mxu0 0
        %3676 = vmatpush1.bf16.msra.mxu0 0
        %3677 = vmatprep.subr.bf16.mxu0 0
        %3678 = vmatpush1.bf16.msra.mxu0 0
        %3679 = vmatprep.subr.bf16.mxu0 0
        %3680 = vmatpush1.bf16.msra.mxu0 0
        %3681 = vmatprep.subr.bf16.mxu0 0
        %3682 = vmatpush1.bf16.msra.mxu0 0
        %3683 = vmatprep.subr.bf16.mxu0 0
        %3684 = vmatpush1.bf16.msra.mxu0 0
        %3685 = vmatprep.subr.bf16.mxu0 0
        %3686 = vmatpush1.bf16.msra.mxu0 %v3669
        %3687 = vmatprep.subr.bf16.mxu0 0
        %3688 = vmatpush2.bf16.msra.mxu0 0
        %3689 = vmatprep.subr.bf16.mxu0 0
        %3690 = vmatpush2.bf16.msra.mxu0 0
        %3691 = vmatprep.subr.bf16.mxu0 0
        %3692 = vmatpush2.bf16.msra.mxu0 0
        %3693 = vmatprep.subr.bf16.mxu0 0
        %3694 = vmatpush2.bf16.msra.mxu0 0
        %3695 = vmatprep.subr.bf16.mxu0 0
        %3696 = vmatpush2.bf16.msra.mxu0 0
        %3697 = vmatprep.subr.bf16.mxu0 0
        %3698 = vmatpush2.bf16.msra.mxu0 0
        %3699 = vmatprep.subr.bf16.mxu0 0
        %3700 = vmatpush2.bf16.msra.mxu0 0
        %3701 = vmatprep.subr.bf16.mxu0 0
        %3702 = vmatpush2.bf16.msra.mxu0 0
        %3703 = vmatprep.mubr.bf16.mxu0 0
        %3704 = vmatmul.mubr.bf16.gmra.mxu0 %v3666
        %v3705 = vpop.f32.mrf.mxu0
        %v3706 = vadd.f32 0.0, %v3705
        %v3707 = vpop.f32.mrf.mxu0
        %v3708 = vpop.f32.mrf.mxu0
        %v3709 = vpop.f32.mrf.mxu0
        %3710 = vdwg.mxu0
        %3711 = vrot.lane.b32.xlu0 %v1347, 64
        %v3712 = vpop.permute.xlu0 %3711
        %v3714 = vsel %vm3327, %v3301, 0
        %v3717 = vsel %vm3331, %v3712, 0
        %3719 = vmatprep.subr.bf16.mxu0 0
        %3720 = vmatpush1.bf16.msra.mxu0 0
        %3721 = vmatprep.subr.bf16.mxu0 0
        %3722 = vmatpush1.bf16.msra.mxu0 0
        %3723 = vmatprep.subr.bf16.mxu0 0
        %3724 = vmatpush1.bf16.msra.mxu0 0
        %3725 = vmatprep.subr.bf16.mxu0 0
        %3726 = vmatpush1.bf16.msra.mxu0 0
        %3727 = vmatprep.subr.bf16.mxu0 0
        %3728 = vmatpush1.bf16.msra.mxu0 0
        %3729 = vmatprep.subr.bf16.mxu0 0
        %3730 = vmatpush1.bf16.msra.mxu0 0
        %3731 = vmatprep.subr.bf16.mxu0 0
        %3732 = vmatpush1.bf16.msra.mxu0 0
        %3733 = vmatprep.subr.bf16.mxu0 0
        %3734 = vmatpush1.bf16.msra.mxu0 %v3717
        %3735 = vmatprep.subr.bf16.mxu0 0
        %3736 = vmatpush2.bf16.msra.mxu0 0
        %3737 = vmatprep.subr.bf16.mxu0 0
        %3738 = vmatpush2.bf16.msra.mxu0 0
        %3739 = vmatprep.subr.bf16.mxu0 0
        %3740 = vmatpush2.bf16.msra.mxu0 0
        %3741 = vmatprep.subr.bf16.mxu0 0
        %3742 = vmatpush2.bf16.msra.mxu0 0
        %3743 = vmatprep.subr.bf16.mxu0 0
        %3744 = vmatpush2.bf16.msra.mxu0 0
        %3745 = vmatprep.subr.bf16.mxu0 0
        %3746 = vmatpush2.bf16.msra.mxu0 0
        %3747 = vmatprep.subr.bf16.mxu0 0
        %3748 = vmatpush2.bf16.msra.mxu0 0
        %3749 = vmatprep.subr.bf16.mxu0 0
        %3750 = vmatpush2.bf16.msra.mxu0 0
        %3751 = vmatprep.mubr.bf16.mxu0 0
        %3752 = vmatmul.mubr.bf16.gmra.mxu0 %v3714
        %v3753 = vpop.f32.mrf.mxu0
        %v3754 = vadd.f32 0.0, %v3753
        %v3755 = vpop.f32.mrf.mxu0
        %v3756 = vpop.f32.mrf.mxu0
        %v3757 = vpop.f32.mrf.mxu0
        %3758 = vdwg.mxu0
        %3759 = vrot.lane.b32.xlu0 %v1348, 64
        %v3760 = vpop.permute.xlu0 %3759
        %v3762 = vsel %vm3327, %v3302, 0
        %v3765 = vsel %vm3331, %v3760, 0
        %3767 = vmatprep.subr.bf16.mxu0 0
        %3768 = vmatpush1.bf16.msra.mxu0 0
        %3769 = vmatprep.subr.bf16.mxu0 0
        %3770 = vmatpush1.bf16.msra.mxu0 0
        %3771 = vmatprep.subr.bf16.mxu0 0
        %3772 = vmatpush1.bf16.msra.mxu0 0
        %3773 = vmatprep.subr.bf16.mxu0 0
        %3774 = vmatpush1.bf16.msra.mxu0 0
        %3775 = vmatprep.subr.bf16.mxu0 0
        %3776 = vmatpush1.bf16.msra.mxu0 0
        %3777 = vmatprep.subr.bf16.mxu0 0
        %3778 = vmatpush1.bf16.msra.mxu0 0
        %3779 = vmatprep.subr.bf16.mxu0 0
        %3780 = vmatpush1.bf16.msra.mxu0 0
        %3781 = vmatprep.subr.bf16.mxu0 0
        %3782 = vmatpush1.bf16.msra.mxu0 %v3765
        %3783 = vmatprep.subr.bf16.mxu0 0
        %3784 = vmatpush2.bf16.msra.mxu0 0
        %3785 = vmatprep.subr.bf16.mxu0 0
        %3786 = vmatpush2.bf16.msra.mxu0 0
        %3787 = vmatprep.subr.bf16.mxu0 0
        %3788 = vmatpush2.bf16.msra.mxu0 0
        %3789 = vmatprep.subr.bf16.mxu0 0
        %3790 = vmatpush2.bf16.msra.mxu0 0
        %3791 = vmatprep.subr.bf16.mxu0 0
        %3792 = vmatpush2.bf16.msra.mxu0 0
        %3793 = vmatprep.subr.bf16.mxu0 0
        %3794 = vmatpush2.bf16.msra.mxu0 0
        %3795 = vmatprep.subr.bf16.mxu0 0
        %3796 = vmatpush2.bf16.msra.mxu0 0
        %3797 = vmatprep.subr.bf16.mxu0 0
        %3798 = vmatpush2.bf16.msra.mxu0 0
        %3799 = vmatprep.mubr.bf16.mxu0 0
        %3800 = vmatmul.mubr.bf16.gmra.mxu0 %v3762
        %v3801 = vpop.f32.mrf.mxu0
        %v3802 = vadd.f32 0.0, %v3801
        %v3803 = vpop.f32.mrf.mxu0
        %v3804 = vpop.f32.mrf.mxu0
        %v3805 = vpop.f32.mrf.mxu0
        %3806 = vdwg.mxu0
        %3807 = vrot.lane.b32.xlu0 %v1349, 64
        %v3808 = vpop.permute.xlu0 %3807
        %v3810 = vsel %vm3327, %v3303, 0
        %v3813 = vsel %vm3331, %v3808, 0
        %3815 = vmatprep.subr.bf16.mxu0 0
        %3816 = vmatpush1.bf16.msra.mxu0 0
        %3817 = vmatprep.subr.bf16.mxu0 0
        %3818 = vmatpush1.bf16.msra.mxu0 0
        %3819 = vmatprep.subr.bf16.mxu0 0
        %3820 = vmatpush1.bf16.msra.mxu0 0
        %3821 = vmatprep.subr.bf16.mxu0 0
        %3822 = vmatpush1.bf16.msra.mxu0 0
        %3823 = vmatprep.subr.bf16.mxu0 0
        %3824 = vmatpush1.bf16.msra.mxu0 0
        %3825 = vmatprep.subr.bf16.mxu0 0
        %3826 = vmatpush1.bf16.msra.mxu0 0
        %3827 = vmatprep.subr.bf16.mxu0 0
        %3828 = vmatpush1.bf16.msra.mxu0 0
        %3829 = vmatprep.subr.bf16.mxu0 0
        %3830 = vmatpush1.bf16.msra.mxu0 %v3813
        %3831 = vmatprep.subr.bf16.mxu0 0
        %3832 = vmatpush2.bf16.msra.mxu0 0
        %3833 = vmatprep.subr.bf16.mxu0 0
        %3834 = vmatpush2.bf16.msra.mxu0 0
        %3835 = vmatprep.subr.bf16.mxu0 0
        %3836 = vmatpush2.bf16.msra.mxu0 0
        %3837 = vmatprep.subr.bf16.mxu0 0
        %3838 = vmatpush2.bf16.msra.mxu0 0
        %3839 = vmatprep.subr.bf16.mxu0 0
        %3840 = vmatpush2.bf16.msra.mxu0 0
        %3841 = vmatprep.subr.bf16.mxu0 0
        %3842 = vmatpush2.bf16.msra.mxu0 0
        %3843 = vmatprep.subr.bf16.mxu0 0
        %3844 = vmatpush2.bf16.msra.mxu0 0
        %3845 = vmatprep.subr.bf16.mxu0 0
        %3846 = vmatpush2.bf16.msra.mxu0 0
        %3847 = vmatprep.mubr.bf16.mxu0 0
        %3848 = vmatmul.mubr.bf16.gmra.mxu0 %v3810
        %v3849 = vpop.f32.mrf.mxu0
        %v3850 = vadd.f32 0.0, %v3849
        %v3851 = vpop.f32.mrf.mxu0
        %v3852 = vpop.f32.mrf.mxu0
        %v3853 = vpop.f32.mrf.mxu0
        %3854 = vdwg.mxu0
        %3855 = vrot.lane.b32.xlu0 %v1350, 64
        %v3856 = vpop.permute.xlu0 %3855
        %v3858 = vsel %vm3327, %v3304, 0
        %v3861 = vsel %vm3331, %v3856, 0
        %3863 = vmatprep.subr.bf16.mxu0 0
        %3864 = vmatpush1.bf16.msra.mxu0 0
        %3865 = vmatprep.subr.bf16.mxu0 0
        %3866 = vmatpush1.bf16.msra.mxu0 0
        %3867 = vmatprep.subr.bf16.mxu0 0
        %3868 = vmatpush1.bf16.msra.mxu0 0
        %3869 = vmatprep.subr.bf16.mxu0 0
        %3870 = vmatpush1.bf16.msra.mxu0 0
        %3871 = vmatprep.subr.bf16.mxu0 0
        %3872 = vmatpush1.bf16.msra.mxu0 0
        %3873 = vmatprep.subr.bf16.mxu0 0
        %3874 = vmatpush1.bf16.msra.mxu0 0
        %3875 = vmatprep.subr.bf16.mxu0 0
        %3876 = vmatpush1.bf16.msra.mxu0 0
        %3877 = vmatprep.subr.bf16.mxu0 0
        %3878 = vmatpush1.bf16.msra.mxu0 %v3861
        %3879 = vmatprep.subr.bf16.mxu0 0
        %3880 = vmatpush2.bf16.msra.mxu0 0
        %3881 = vmatprep.subr.bf16.mxu0 0
        %3882 = vmatpush2.bf16.msra.mxu0 0
        %3883 = vmatprep.subr.bf16.mxu0 0
        %3884 = vmatpush2.bf16.msra.mxu0 0
        %3885 = vmatprep.subr.bf16.mxu0 0
        %3886 = vmatpush2.bf16.msra.mxu0 0
        %3887 = vmatprep.subr.bf16.mxu0 0
        %3888 = vmatpush2.bf16.msra.mxu0 0
        %3889 = vmatprep.subr.bf16.mxu0 0
        %3890 = vmatpush2.bf16.msra.mxu0 0
        %3891 = vmatprep.subr.bf16.mxu0 0
        %3892 = vmatpush2.bf16.msra.mxu0 0
        %3893 = vmatprep.subr.bf16.mxu0 0
        %3894 = vmatpush2.bf16.msra.mxu0 0
        %3895 = vmatprep.mubr.bf16.mxu0 0
        %3896 = vmatmul.mubr.bf16.gmra.mxu0 %v3858
        %v3897 = vpop.f32.mrf.mxu0
        %v3898 = vadd.f32 0.0, %v3897
        %v3899 = vpop.f32.mrf.mxu0
        %v3900 = vpop.f32.mrf.mxu0
        %v3901 = vpop.f32.mrf.mxu0
        %3902 = vdwg.mxu0
        %3903 = vrot.lane.b32.xlu0 %v1351, 64
        %v3904 = vpop.permute.xlu0 %3903
        %v3906 = vsel %vm3327, %v3305, 0
        %v3909 = vsel %vm3331, %v3904, 0
        %3911 = vmatprep.subr.bf16.mxu0 0
        %3912 = vmatpush1.bf16.msra.mxu0 0
        %3913 = vmatprep.subr.bf16.mxu0 0
        %3914 = vmatpush1.bf16.msra.mxu0 0
        %3915 = vmatprep.subr.bf16.mxu0 0
        %3916 = vmatpush1.bf16.msra.mxu0 0
        %3917 = vmatprep.subr.bf16.mxu0 0
        %3918 = vmatpush1.bf16.msra.mxu0 0
        %3919 = vmatprep.subr.bf16.mxu0 0
        %3920 = vmatpush1.bf16.msra.mxu0 0
        %3921 = vmatprep.subr.bf16.mxu0 0
        %3922 = vmatpush1.bf16.msra.mxu0 0
        %3923 = vmatprep.subr.bf16.mxu0 0
        %3924 = vmatpush1.bf16.msra.mxu0 0
        %3925 = vmatprep.subr.bf16.mxu0 0
        %3926 = vmatpush1.bf16.msra.mxu0 %v3909
        %3927 = vmatprep.subr.bf16.mxu0 0
        %3928 = vmatpush2.bf16.msra.mxu0 0
        %3929 = vmatprep.subr.bf16.mxu0 0
        %3930 = vmatpush2.bf16.msra.mxu0 0
        %3931 = vmatprep.subr.bf16.mxu0 0
        %3932 = vmatpush2.bf16.msra.mxu0 0
        %3933 = vmatprep.subr.bf16.mxu0 0
        %3934 = vmatpush2.bf16.msra.mxu0 0
        %3935 = vmatprep.subr.bf16.mxu0 0
        %3936 = vmatpush2.bf16.msra.mxu0 0
        %3937 = vmatprep.subr.bf16.mxu0 0
        %3938 = vmatpush2.bf16.msra.mxu0 0
        %3939 = vmatprep.subr.bf16.mxu0 0
        %3940 = vmatpush2.bf16.msra.mxu0 0
        %3941 = vmatprep.subr.bf16.mxu0 0
        %3942 = vmatpush2.bf16.msra.mxu0 0
        %3943 = vmatprep.mubr.bf16.mxu0 0
        %3944 = vmatmul.mubr.bf16.gmra.mxu0 %v3906
        %v3945 = vpop.f32.mrf.mxu0
        %v3946 = vadd.f32 0.0, %v3945
        %v3947 = vpop.f32.mrf.mxu0
        %v3948 = vpop.f32.mrf.mxu0
        %v3949 = vpop.f32.mrf.mxu0
        %3950 = vdwg.mxu0
        %3951 = vrot.lane.b32.xlu0 %v1352, 64
        %v3952 = vpop.permute.xlu0 %3951
        %v3954 = vsel %vm3327, %v3306, 0
        %v3957 = vsel %vm3331, %v3952, 0
        %3959 = vmatprep.subr.bf16.mxu0 0
        %3960 = vmatpush1.bf16.msra.mxu0 0
        %3961 = vmatprep.subr.bf16.mxu0 0
        %3962 = vmatpush1.bf16.msra.mxu0 0
        %3963 = vmatprep.subr.bf16.mxu0 0
        %3964 = vmatpush1.bf16.msra.mxu0 0
        %3965 = vmatprep.subr.bf16.mxu0 0
        %3966 = vmatpush1.bf16.msra.mxu0 0
        %3967 = vmatprep.subr.bf16.mxu0 0
        %3968 = vmatpush1.bf16.msra.mxu0 0
        %3969 = vmatprep.subr.bf16.mxu0 0
        %3970 = vmatpush1.bf16.msra.mxu0 0
        %3971 = vmatprep.subr.bf16.mxu0 0
        %3972 = vmatpush1.bf16.msra.mxu0 0
        %3973 = vmatprep.subr.bf16.mxu0 0
        %3974 = vmatpush1.bf16.msra.mxu0 %v3957
        %3975 = vmatprep.subr.bf16.mxu0 0
        %3976 = vmatpush2.bf16.msra.mxu0 0
        %3977 = vmatprep.subr.bf16.mxu0 0
        %3978 = vmatpush2.bf16.msra.mxu0 0
        %3979 = vmatprep.subr.bf16.mxu0 0
        %3980 = vmatpush2.bf16.msra.mxu0 0
        %3981 = vmatprep.subr.bf16.mxu0 0
        %3982 = vmatpush2.bf16.msra.mxu0 0
        %3983 = vmatprep.subr.bf16.mxu0 0
        %3984 = vmatpush2.bf16.msra.mxu0 0
        %3985 = vmatprep.subr.bf16.mxu0 0
        %3986 = vmatpush2.bf16.msra.mxu0 0
        %3987 = vmatprep.subr.bf16.mxu0 0
        %3988 = vmatpush2.bf16.msra.mxu0 0
        %3989 = vmatprep.subr.bf16.mxu0 0
        %3990 = vmatpush2.bf16.msra.mxu0 0
        %3991 = vmatprep.mubr.bf16.mxu0 0
        %3992 = vmatmul.mubr.bf16.gmra.mxu0 %v3954
        %v3993 = vpop.f32.mrf.mxu0
        %v3994 = vadd.f32 0.0, %v3993
        %v3995 = vpop.f32.mrf.mxu0
        %v3996 = vpop.f32.mrf.mxu0
        %v3997 = vpop.f32.mrf.mxu0
        %3998 = vdwg.mxu0
        %3999 = vrot.lane.b32.xlu0 %v1353, 64
        %v4000 = vpop.permute.xlu0 %3999
        %v4002 = vsel %vm3327, %v3307, 0
        %v4005 = vsel %vm3331, %v4000, 0
        %4007 = vmatprep.subr.bf16.mxu0 0
        %4008 = vmatpush1.bf16.msra.mxu0 0
        %4009 = vmatprep.subr.bf16.mxu0 0
        %4010 = vmatpush1.bf16.msra.mxu0 0
        %4011 = vmatprep.subr.bf16.mxu0 0
        %4012 = vmatpush1.bf16.msra.mxu0 0
        %4013 = vmatprep.subr.bf16.mxu0 0
        %4014 = vmatpush1.bf16.msra.mxu0 0
        %4015 = vmatprep.subr.bf16.mxu0 0
        %4016 = vmatpush1.bf16.msra.mxu0 0
        %4017 = vmatprep.subr.bf16.mxu0 0
        %4018 = vmatpush1.bf16.msra.mxu0 0
        %4019 = vmatprep.subr.bf16.mxu0 0
        %4020 = vmatpush1.bf16.msra.mxu0 0
        %4021 = vmatprep.subr.bf16.mxu0 0
        %4022 = vmatpush1.bf16.msra.mxu0 %v4005
        %4023 = vmatprep.subr.bf16.mxu0 0
        %4024 = vmatpush2.bf16.msra.mxu0 0
        %4025 = vmatprep.subr.bf16.mxu0 0
        %4026 = vmatpush2.bf16.msra.mxu0 0
        %4027 = vmatprep.subr.bf16.mxu0 0
        %4028 = vmatpush2.bf16.msra.mxu0 0
        %4029 = vmatprep.subr.bf16.mxu0 0
        %4030 = vmatpush2.bf16.msra.mxu0 0
        %4031 = vmatprep.subr.bf16.mxu0 0
        %4032 = vmatpush2.bf16.msra.mxu0 0
        %4033 = vmatprep.subr.bf16.mxu0 0
        %4034 = vmatpush2.bf16.msra.mxu0 0
        %4035 = vmatprep.subr.bf16.mxu0 0
        %4036 = vmatpush2.bf16.msra.mxu0 0
        %4037 = vmatprep.subr.bf16.mxu0 0
        %4038 = vmatpush2.bf16.msra.mxu0 0
        %4039 = vmatprep.mubr.bf16.mxu0 0
        %4040 = vmatmul.mubr.bf16.gmra.mxu0 %v4002
        %v4041 = vpop.f32.mrf.mxu0
        %v4042 = vadd.f32 0.0, %v4041
        %v4043 = vpop.f32.mrf.mxu0
        %v4044 = vpop.f32.mrf.mxu0
        %v4045 = vpop.f32.mrf.mxu0
        %4046 = vdwg.mxu0
        %4047 = vrot.lane.b32.xlu0 %v1354, 64
        %v4048 = vpop.permute.xlu0 %4047
        %v4050 = vsel %vm3327, %v3308, 0
        %v4053 = vsel %vm3331, %v4048, 0
        %4055 = vmatprep.subr.bf16.mxu0 0
        %4056 = vmatpush1.bf16.msra.mxu0 0
        %4057 = vmatprep.subr.bf16.mxu0 0
        %4058 = vmatpush1.bf16.msra.mxu0 0
        %4059 = vmatprep.subr.bf16.mxu0 0
        %4060 = vmatpush1.bf16.msra.mxu0 0
        %4061 = vmatprep.subr.bf16.mxu0 0
        %4062 = vmatpush1.bf16.msra.mxu0 0
        %4063 = vmatprep.subr.bf16.mxu0 0
        %4064 = vmatpush1.bf16.msra.mxu0 0
        %4065 = vmatprep.subr.bf16.mxu0 0
        %4066 = vmatpush1.bf16.msra.mxu0 0
        %4067 = vmatprep.subr.bf16.mxu0 0
        %4068 = vmatpush1.bf16.msra.mxu0 0
        %4069 = vmatprep.subr.bf16.mxu0 0
        %4070 = vmatpush1.bf16.msra.mxu0 %v4053
        %4071 = vmatprep.subr.bf16.mxu0 0
        %4072 = vmatpush2.bf16.msra.mxu0 0
        %4073 = vmatprep.subr.bf16.mxu0 0
        %4074 = vmatpush2.bf16.msra.mxu0 0
        %4075 = vmatprep.subr.bf16.mxu0 0
        %4076 = vmatpush2.bf16.msra.mxu0 0
        %4077 = vmatprep.subr.bf16.mxu0 0
        %4078 = vmatpush2.bf16.msra.mxu0 0
        %4079 = vmatprep.subr.bf16.mxu0 0
        %4080 = vmatpush2.bf16.msra.mxu0 0
        %4081 = vmatprep.subr.bf16.mxu0 0
        %4082 = vmatpush2.bf16.msra.mxu0 0
        %4083 = vmatprep.subr.bf16.mxu0 0
        %4084 = vmatpush2.bf16.msra.mxu0 0
        %4085 = vmatprep.subr.bf16.mxu0 0
        %4086 = vmatpush2.bf16.msra.mxu0 0
        %4087 = vmatprep.mubr.bf16.mxu0 0
        %4088 = vmatmul.mubr.bf16.gmra.mxu0 %v4050
        %v4089 = vpop.f32.mrf.mxu0
        %v4090 = vadd.f32 0.0, %v4089
        %v4091 = vpop.f32.mrf.mxu0
        %v4092 = vpop.f32.mrf.mxu0
        %v4093 = vpop.f32.mrf.mxu0
        %4094 = vdwg.mxu0
        %4095 = vrot.lane.b32.xlu0 %v1355, 64
        %v4096 = vpop.permute.xlu0 %4095
        %v4098 = vsel %vm3327, %v3309, 0
        %v4101 = vsel %vm3331, %v4096, 0
        %4103 = vmatprep.subr.bf16.mxu0 0
        %4104 = vmatpush1.bf16.msra.mxu0 0
        %4105 = vmatprep.subr.bf16.mxu0 0
        %4106 = vmatpush1.bf16.msra.mxu0 0
        %4107 = vmatprep.subr.bf16.mxu0 0
        %4108 = vmatpush1.bf16.msra.mxu0 0
        %4109 = vmatprep.subr.bf16.mxu0 0
        %4110 = vmatpush1.bf16.msra.mxu0 0
        %4111 = vmatprep.subr.bf16.mxu0 0
        %4112 = vmatpush1.bf16.msra.mxu0 0
        %4113 = vmatprep.subr.bf16.mxu0 0
        %4114 = vmatpush1.bf16.msra.mxu0 0
        %4115 = vmatprep.subr.bf16.mxu0 0
        %4116 = vmatpush1.bf16.msra.mxu0 0
        %4117 = vmatprep.subr.bf16.mxu0 0
        %4118 = vmatpush1.bf16.msra.mxu0 %v4101
        %4119 = vmatprep.subr.bf16.mxu0 0
        %4120 = vmatpush2.bf16.msra.mxu0 0
        %4121 = vmatprep.subr.bf16.mxu0 0
        %4122 = vmatpush2.bf16.msra.mxu0 0
        %4123 = vmatprep.subr.bf16.mxu0 0
        %4124 = vmatpush2.bf16.msra.mxu0 0
        %4125 = vmatprep.subr.bf16.mxu0 0
        %4126 = vmatpush2.bf16.msra.mxu0 0
        %4127 = vmatprep.subr.bf16.mxu0 0
        %4128 = vmatpush2.bf16.msra.mxu0 0
        %4129 = vmatprep.subr.bf16.mxu0 0
        %4130 = vmatpush2.bf16.msra.mxu0 0
        %4131 = vmatprep.subr.bf16.mxu0 0
        %4132 = vmatpush2.bf16.msra.mxu0 0
        %4133 = vmatprep.subr.bf16.mxu0 0
        %4134 = vmatpush2.bf16.msra.mxu0 0
        %4135 = vmatprep.mubr.bf16.mxu0 0
        %4136 = vmatmul.mubr.bf16.gmra.mxu0 %v4098
        %v4137 = vpop.f32.mrf.mxu0
        %v4138 = vadd.f32 0.0, %v4137
        %v4139 = vpop.f32.mrf.mxu0
        %v4140 = vpop.f32.mrf.mxu0
        %v4141 = vpop.f32.mrf.mxu0
        %4142 = vdwg.mxu0
        %4143 = vrot.lane.b32.xlu0 %v1356, 64
        %v4144 = vpop.permute.xlu0 %4143
        %v4146 = vsel %vm3327, %v3310, 0
        %v4149 = vsel %vm3331, %v4144, 0
        %4151 = vmatprep.subr.bf16.mxu0 0
        %4152 = vmatpush1.bf16.msra.mxu0 0
        %4153 = vmatprep.subr.bf16.mxu0 0
        %4154 = vmatpush1.bf16.msra.mxu0 0
        %4155 = vmatprep.subr.bf16.mxu0 0
        %4156 = vmatpush1.bf16.msra.mxu0 0
        %4157 = vmatprep.subr.bf16.mxu0 0
        %4158 = vmatpush1.bf16.msra.mxu0 0
        %4159 = vmatprep.subr.bf16.mxu0 0
        %4160 = vmatpush1.bf16.msra.mxu0 0
        %4161 = vmatprep.subr.bf16.mxu0 0
        %4162 = vmatpush1.bf16.msra.mxu0 0
        %4163 = vmatprep.subr.bf16.mxu0 0
        %4164 = vmatpush1.bf16.msra.mxu0 0
        %4165 = vmatprep.subr.bf16.mxu0 0
        %4166 = vmatpush1.bf16.msra.mxu0 %v4149
        %4167 = vmatprep.subr.bf16.mxu0 0
        %4168 = vmatpush2.bf16.msra.mxu0 0
        %4169 = vmatprep.subr.bf16.mxu0 0
        %4170 = vmatpush2.bf16.msra.mxu0 0
        %4171 = vmatprep.subr.bf16.mxu0 0
        %4172 = vmatpush2.bf16.msra.mxu0 0
        %4173 = vmatprep.subr.bf16.mxu0 0
        %4174 = vmatpush2.bf16.msra.mxu0 0
        %4175 = vmatprep.subr.bf16.mxu0 0
        %4176 = vmatpush2.bf16.msra.mxu0 0
        %4177 = vmatprep.subr.bf16.mxu0 0
        %4178 = vmatpush2.bf16.msra.mxu0 0
        %4179 = vmatprep.subr.bf16.mxu0 0
        %4180 = vmatpush2.bf16.msra.mxu0 0
        %4181 = vmatprep.subr.bf16.mxu0 0
        %4182 = vmatpush2.bf16.msra.mxu0 0
        %4183 = vmatprep.mubr.bf16.mxu0 0
        %4184 = vmatmul.mubr.bf16.gmra.mxu0 %v4146
        %v4185 = vpop.f32.mrf.mxu0
        %v4186 = vadd.f32 0.0, %v4185
        %v4187 = vpop.f32.mrf.mxu0
        %v4188 = vpop.f32.mrf.mxu0
        %v4189 = vpop.f32.mrf.mxu0
        %4190 = vdwg.mxu0
        %4191 = vrot.lane.b32.xlu0 %v1357, 64
        %v4192 = vpop.permute.xlu0 %4191
        %v4194 = vsel %vm3327, %v3311, 0
        %v4197 = vsel %vm3331, %v4192, 0
        %4199 = vmatprep.subr.bf16.mxu0 0
        %4200 = vmatpush1.bf16.msra.mxu0 0
        %4201 = vmatprep.subr.bf16.mxu0 0
        %4202 = vmatpush1.bf16.msra.mxu0 0
        %4203 = vmatprep.subr.bf16.mxu0 0
        %4204 = vmatpush1.bf16.msra.mxu0 0
        %4205 = vmatprep.subr.bf16.mxu0 0
        %4206 = vmatpush1.bf16.msra.mxu0 0
        %4207 = vmatprep.subr.bf16.mxu0 0
        %4208 = vmatpush1.bf16.msra.mxu0 0
        %4209 = vmatprep.subr.bf16.mxu0 0
        %4210 = vmatpush1.bf16.msra.mxu0 0
        %4211 = vmatprep.subr.bf16.mxu0 0
        %4212 = vmatpush1.bf16.msra.mxu0 0
        %4213 = vmatprep.subr.bf16.mxu0 0
        %4214 = vmatpush1.bf16.msra.mxu0 %v4197
        %4215 = vmatprep.subr.bf16.mxu0 0
        %4216 = vmatpush2.bf16.msra.mxu0 0
        %4217 = vmatprep.subr.bf16.mxu0 0
        %4218 = vmatpush2.bf16.msra.mxu0 0
        %4219 = vmatprep.subr.bf16.mxu0 0
        %4220 = vmatpush2.bf16.msra.mxu0 0
        %4221 = vmatprep.subr.bf16.mxu0 0
        %4222 = vmatpush2.bf16.msra.mxu0 0
        %4223 = vmatprep.subr.bf16.mxu0 0
        %4224 = vmatpush2.bf16.msra.mxu0 0
        %4225 = vmatprep.subr.bf16.mxu0 0
        %4226 = vmatpush2.bf16.msra.mxu0 0
        %4227 = vmatprep.subr.bf16.mxu0 0
        %4228 = vmatpush2.bf16.msra.mxu0 0
        %4229 = vmatprep.subr.bf16.mxu0 0
        %4230 = vmatpush2.bf16.msra.mxu0 0
        %4231 = vmatprep.mubr.bf16.mxu0 0
        %4232 = vmatmul.mubr.bf16.gmra.mxu0 %v4194
        %v4233 = vpop.f32.mrf.mxu0
        %v4234 = vadd.f32 0.0, %v4233
        %v4235 = vpop.f32.mrf.mxu0
        %v4236 = vpop.f32.mrf.mxu0
        %v4237 = vpop.f32.mrf.mxu0
        %4238 = vdwg.mxu0
        %4239 = vrot.lane.b32.xlu0 %v1358, 64
        %v4240 = vpop.permute.xlu0 %4239
        %v4242 = vsel %vm3327, %v3312, 0
        %v4245 = vsel %vm3331, %v4240, 0
        %4247 = vmatprep.subr.bf16.mxu0 0
        %4248 = vmatpush1.bf16.msra.mxu0 0
        %4249 = vmatprep.subr.bf16.mxu0 0
        %4250 = vmatpush1.bf16.msra.mxu0 0
        %4251 = vmatprep.subr.bf16.mxu0 0
        %4252 = vmatpush1.bf16.msra.mxu0 0
        %4253 = vmatprep.subr.bf16.mxu0 0
        %4254 = vmatpush1.bf16.msra.mxu0 0
        %4255 = vmatprep.subr.bf16.mxu0 0
        %4256 = vmatpush1.bf16.msra.mxu0 0
        %4257 = vmatprep.subr.bf16.mxu0 0
        %4258 = vmatpush1.bf16.msra.mxu0 0
        %4259 = vmatprep.subr.bf16.mxu0 0
        %4260 = vmatpush1.bf16.msra.mxu0 0
        %4261 = vmatprep.subr.bf16.mxu0 0
        %4262 = vmatpush1.bf16.msra.mxu0 %v4245
        %4263 = vmatprep.subr.bf16.mxu0 0
        %4264 = vmatpush2.bf16.msra.mxu0 0
        %4265 = vmatprep.subr.bf16.mxu0 0
        %4266 = vmatpush2.bf16.msra.mxu0 0
        %4267 = vmatprep.subr.bf16.mxu0 0
        %4268 = vmatpush2.bf16.msra.mxu0 0
        %4269 = vmatprep.subr.bf16.mxu0 0
        %4270 = vmatpush2.bf16.msra.mxu0 0
        %4271 = vmatprep.subr.bf16.mxu0 0
        %4272 = vmatpush2.bf16.msra.mxu0 0
        %4273 = vmatprep.subr.bf16.mxu0 0
        %4274 = vmatpush2.bf16.msra.mxu0 0
        %4275 = vmatprep.subr.bf16.mxu0 0
        %4276 = vmatpush2.bf16.msra.mxu0 0
        %4277 = vmatprep.subr.bf16.mxu0 0
        %4278 = vmatpush2.bf16.msra.mxu0 0
        %4279 = vmatprep.mubr.bf16.mxu0 0
        %4280 = vmatmul.mubr.bf16.gmra.mxu0 %v4242
        %v4281 = vpop.f32.mrf.mxu0
        %v4282 = vadd.f32 0.0, %v4281
        %v4283 = vpop.f32.mrf.mxu0
        %v4284 = vpop.f32.mrf.mxu0
        %v4285 = vpop.f32.mrf.mxu0
        %4286 = vdwg.mxu0
        %4287 = vrot.lane.b32.xlu0 %v1359, 64
        %v4288 = vpop.permute.xlu0 %4287
        %v4290 = vsel %vm3327, %v3313, 0
        %v4293 = vsel %vm3331, %v4288, 0
        %4295 = vmatprep.subr.bf16.mxu0 0
        %4296 = vmatpush1.bf16.msra.mxu0 0
        %4297 = vmatprep.subr.bf16.mxu0 0
        %4298 = vmatpush1.bf16.msra.mxu0 0
        %4299 = vmatprep.subr.bf16.mxu0 0
        %4300 = vmatpush1.bf16.msra.mxu0 0
        %4301 = vmatprep.subr.bf16.mxu0 0
        %4302 = vmatpush1.bf16.msra.mxu0 0
        %4303 = vmatprep.subr.bf16.mxu0 0
        %4304 = vmatpush1.bf16.msra.mxu0 0
        %4305 = vmatprep.subr.bf16.mxu0 0
        %4306 = vmatpush1.bf16.msra.mxu0 0
        %4307 = vmatprep.subr.bf16.mxu0 0
        %4308 = vmatpush1.bf16.msra.mxu0 0
        %4309 = vmatprep.subr.bf16.mxu0 0
        %4310 = vmatpush1.bf16.msra.mxu0 %v4293
        %4311 = vmatprep.subr.bf16.mxu0 0
        %4312 = vmatpush2.bf16.msra.mxu0 0
        %4313 = vmatprep.subr.bf16.mxu0 0
        %4314 = vmatpush2.bf16.msra.mxu0 0
        %4315 = vmatprep.subr.bf16.mxu0 0
        %4316 = vmatpush2.bf16.msra.mxu0 0
        %4317 = vmatprep.subr.bf16.mxu0 0
        %4318 = vmatpush2.bf16.msra.mxu0 0
        %4319 = vmatprep.subr.bf16.mxu0 0
        %4320 = vmatpush2.bf16.msra.mxu0 0
        %4321 = vmatprep.subr.bf16.mxu0 0
        %4322 = vmatpush2.bf16.msra.mxu0 0
        %4323 = vmatprep.subr.bf16.mxu0 0
        %4324 = vmatpush2.bf16.msra.mxu0 0
        %4325 = vmatprep.subr.bf16.mxu0 0
        %4326 = vmatpush2.bf16.msra.mxu0 0
        %4327 = vmatprep.mubr.bf16.mxu0 0
        %4328 = vmatmul.mubr.bf16.gmra.mxu0 %v4290
        %v4329 = vpop.f32.mrf.mxu0
        %v4330 = vadd.f32 0.0, %v4329
        %v4331 = vpop.f32.mrf.mxu0
        %v4332 = vpop.f32.mrf.mxu0
        %v4333 = vpop.f32.mrf.mxu0
        %4334 = vdwg.mxu0
        %4335 = vrot.lane.b32.xlu0 %v1360, 64
        %v4336 = vpop.permute.xlu0 %4335
        %v4338 = vsel %vm3327, %v3314, 0
        %v4341 = vsel %vm3331, %v4336, 0
        %4343 = vmatprep.subr.bf16.mxu0 0
        %4344 = vmatpush1.bf16.msra.mxu0 0
        %4345 = vmatprep.subr.bf16.mxu0 0
        %4346 = vmatpush1.bf16.msra.mxu0 0
        %4347 = vmatprep.subr.bf16.mxu0 0
        %4348 = vmatpush1.bf16.msra.mxu0 0
        %4349 = vmatprep.subr.bf16.mxu0 0
        %4350 = vmatpush1.bf16.msra.mxu0 0
        %4351 = vmatprep.subr.bf16.mxu0 0
        %4352 = vmatpush1.bf16.msra.mxu0 0
        %4353 = vmatprep.subr.bf16.mxu0 0
        %4354 = vmatpush1.bf16.msra.mxu0 0
        %4355 = vmatprep.subr.bf16.mxu0 0
        %4356 = vmatpush1.bf16.msra.mxu0 0
        %4357 = vmatprep.subr.bf16.mxu0 0
        %4358 = vmatpush1.bf16.msra.mxu0 %v4341
        %4359 = vmatprep.subr.bf16.mxu0 0
        %4360 = vmatpush2.bf16.msra.mxu0 0
        %4361 = vmatprep.subr.bf16.mxu0 0
        %4362 = vmatpush2.bf16.msra.mxu0 0
        %4363 = vmatprep.subr.bf16.mxu0 0
        %4364 = vmatpush2.bf16.msra.mxu0 0
        %4365 = vmatprep.subr.bf16.mxu0 0
        %4366 = vmatpush2.bf16.msra.mxu0 0
        %4367 = vmatprep.subr.bf16.mxu0 0
        %4368 = vmatpush2.bf16.msra.mxu0 0
        %4369 = vmatprep.subr.bf16.mxu0 0
        %4370 = vmatpush2.bf16.msra.mxu0 0
        %4371 = vmatprep.subr.bf16.mxu0 0
        %4372 = vmatpush2.bf16.msra.mxu0 0
        %4373 = vmatprep.subr.bf16.mxu0 0
        %4374 = vmatpush2.bf16.msra.mxu0 0
        %4375 = vmatprep.mubr.bf16.mxu0 0
        %4376 = vmatmul.mubr.bf16.gmra.mxu0 %v4338
        %v4377 = vpop.f32.mrf.mxu0
        %v4378 = vadd.f32 0.0, %v4377
        %v4379 = vpop.f32.mrf.mxu0
        %v4380 = vpop.f32.mrf.mxu0
        %v4381 = vpop.f32.mrf.mxu0
        %4382 = vdwg.mxu0
        %4383 = vrot.lane.b32.xlu0 %v1361, 64
        %v4384 = vpop.permute.xlu0 %4383
        %v4386 = vsel %vm3327, %v3315, 0
        %v4389 = vsel %vm3331, %v4384, 0
        %4391 = vmatprep.subr.bf16.mxu0 0
        %4392 = vmatpush1.bf16.msra.mxu0 0
        %4393 = vmatprep.subr.bf16.mxu0 0
        %4394 = vmatpush1.bf16.msra.mxu0 0
        %4395 = vmatprep.subr.bf16.mxu0 0
        %4396 = vmatpush1.bf16.msra.mxu0 0
        %4397 = vmatprep.subr.bf16.mxu0 0
        %4398 = vmatpush1.bf16.msra.mxu0 0
        %4399 = vmatprep.subr.bf16.mxu0 0
        %4400 = vmatpush1.bf16.msra.mxu0 0
        %4401 = vmatprep.subr.bf16.mxu0 0
        %4402 = vmatpush1.bf16.msra.mxu0 0
        %4403 = vmatprep.subr.bf16.mxu0 0
        %4404 = vmatpush1.bf16.msra.mxu0 0
        %4405 = vmatprep.subr.bf16.mxu0 0
        %4406 = vmatpush1.bf16.msra.mxu0 %v4389
        %4407 = vmatprep.subr.bf16.mxu0 0
        %4408 = vmatpush2.bf16.msra.mxu0 0
        %4409 = vmatprep.subr.bf16.mxu0 0
        %4410 = vmatpush2.bf16.msra.mxu0 0
        %4411 = vmatprep.subr.bf16.mxu0 0
        %4412 = vmatpush2.bf16.msra.mxu0 0
        %4413 = vmatprep.subr.bf16.mxu0 0
        %4414 = vmatpush2.bf16.msra.mxu0 0
        %4415 = vmatprep.subr.bf16.mxu0 0
        %4416 = vmatpush2.bf16.msra.mxu0 0
        %4417 = vmatprep.subr.bf16.mxu0 0
        %4418 = vmatpush2.bf16.msra.mxu0 0
        %4419 = vmatprep.subr.bf16.mxu0 0
        %4420 = vmatpush2.bf16.msra.mxu0 0
        %4421 = vmatprep.subr.bf16.mxu0 0
        %4422 = vmatpush2.bf16.msra.mxu0 0
        %4423 = vmatprep.mubr.bf16.mxu0 0
        %4424 = vmatmul.mubr.bf16.gmra.mxu0 %v4386
        %v4425 = vpop.f32.mrf.mxu0
        %v4426 = vadd.f32 0.0, %v4425
        %v4427 = vpop.f32.mrf.mxu0
        %v4428 = vpop.f32.mrf.mxu0
        %v4429 = vpop.f32.mrf.mxu0
        %4430 = vdwg.mxu0
        %4431 = vrot.lane.b32.xlu0 %v1362, 64
        %v4432 = vpop.permute.xlu0 %4431
        %v4434 = vsel %vm3327, %v3316, 0
        %v4437 = vsel %vm3331, %v4432, 0
        %4439 = vmatprep.subr.bf16.mxu0 0
        %4440 = vmatpush1.bf16.msra.mxu0 0
        %4441 = vmatprep.subr.bf16.mxu0 0
        %4442 = vmatpush1.bf16.msra.mxu0 0
        %4443 = vmatprep.subr.bf16.mxu0 0
        %4444 = vmatpush1.bf16.msra.mxu0 0
        %4445 = vmatprep.subr.bf16.mxu0 0
        %4446 = vmatpush1.bf16.msra.mxu0 0
        %4447 = vmatprep.subr.bf16.mxu0 0
        %4448 = vmatpush1.bf16.msra.mxu0 0
        %4449 = vmatprep.subr.bf16.mxu0 0
        %4450 = vmatpush1.bf16.msra.mxu0 0
        %4451 = vmatprep.subr.bf16.mxu0 0
        %4452 = vmatpush1.bf16.msra.mxu0 0
        %4453 = vmatprep.subr.bf16.mxu0 0
        %4454 = vmatpush1.bf16.msra.mxu0 %v4437
        %4455 = vmatprep.subr.bf16.mxu0 0
        %4456 = vmatpush2.bf16.msra.mxu0 0
        %4457 = vmatprep.subr.bf16.mxu0 0
        %4458 = vmatpush2.bf16.msra.mxu0 0
        %4459 = vmatprep.subr.bf16.mxu0 0
        %4460 = vmatpush2.bf16.msra.mxu0 0
        %4461 = vmatprep.subr.bf16.mxu0 0
        %4462 = vmatpush2.bf16.msra.mxu0 0
        %4463 = vmatprep.subr.bf16.mxu0 0
        %4464 = vmatpush2.bf16.msra.mxu0 0
        %4465 = vmatprep.subr.bf16.mxu0 0
        %4466 = vmatpush2.bf16.msra.mxu0 0
        %4467 = vmatprep.subr.bf16.mxu0 0
        %4468 = vmatpush2.bf16.msra.mxu0 0
        %4469 = vmatprep.subr.bf16.mxu0 0
        %4470 = vmatpush2.bf16.msra.mxu0 0
        %4471 = vmatprep.mubr.bf16.mxu0 0
        %4472 = vmatmul.mubr.bf16.gmra.mxu0 %v4434
        %v4473 = vpop.f32.mrf.mxu0
        %v4474 = vadd.f32 0.0, %v4473
        %v4475 = vpop.f32.mrf.mxu0
        %v4476 = vpop.f32.mrf.mxu0
        %v4477 = vpop.f32.mrf.mxu0
        %4478 = vdwg.mxu0
        %4479 = vrot.lane.b32.xlu0 %v1363, 64
        %v4480 = vpop.permute.xlu0 %4479
        %v4482 = vsel %vm3327, %v3317, 0
        %v4485 = vsel %vm3331, %v4480, 0
        %4487 = vmatprep.subr.bf16.mxu0 0
        %4488 = vmatpush1.bf16.msra.mxu0 0
        %4489 = vmatprep.subr.bf16.mxu0 0
        %4490 = vmatpush1.bf16.msra.mxu0 0
        %4491 = vmatprep.subr.bf16.mxu0 0
        %4492 = vmatpush1.bf16.msra.mxu0 0
        %4493 = vmatprep.subr.bf16.mxu0 0
        %4494 = vmatpush1.bf16.msra.mxu0 0
        %4495 = vmatprep.subr.bf16.mxu0 0
        %4496 = vmatpush1.bf16.msra.mxu0 0
        %4497 = vmatprep.subr.bf16.mxu0 0
        %4498 = vmatpush1.bf16.msra.mxu0 0
        %4499 = vmatprep.subr.bf16.mxu0 0
        %4500 = vmatpush1.bf16.msra.mxu0 0
        %4501 = vmatprep.subr.bf16.mxu0 0
        %4502 = vmatpush1.bf16.msra.mxu0 %v4485
        %4503 = vmatprep.subr.bf16.mxu0 0
        %4504 = vmatpush2.bf16.msra.mxu0 0
        %4505 = vmatprep.subr.bf16.mxu0 0
        %4506 = vmatpush2.bf16.msra.mxu0 0
        %4507 = vmatprep.subr.bf16.mxu0 0
        %4508 = vmatpush2.bf16.msra.mxu0 0
        %4509 = vmatprep.subr.bf16.mxu0 0
        %4510 = vmatpush2.bf16.msra.mxu0 0
        %4511 = vmatprep.subr.bf16.mxu0 0
        %4512 = vmatpush2.bf16.msra.mxu0 0
        %4513 = vmatprep.subr.bf16.mxu0 0
        %4514 = vmatpush2.bf16.msra.mxu0 0
        %4515 = vmatprep.subr.bf16.mxu0 0
        %4516 = vmatpush2.bf16.msra.mxu0 0
        %4517 = vmatprep.subr.bf16.mxu0 0
        %4518 = vmatpush2.bf16.msra.mxu0 0
        %4519 = vmatprep.mubr.bf16.mxu0 0
        %4520 = vmatmul.mubr.bf16.gmra.mxu0 %v4482
        %v4521 = vpop.f32.mrf.mxu0
        %v4522 = vadd.f32 0.0, %v4521
        %v4523 = vpop.f32.mrf.mxu0
        %v4524 = vpop.f32.mrf.mxu0
        %v4525 = vpop.f32.mrf.mxu0
        %4526 = vdwg.mxu0
        %4527 = vrot.lane.b32.xlu0 %v1364, 64
        %v4528 = vpop.permute.xlu0 %4527
        %v4530 = vsel %vm3327, %v3318, 0
        %v4533 = vsel %vm3331, %v4528, 0
        %4535 = vmatprep.subr.bf16.mxu0 0
        %4536 = vmatpush1.bf16.msra.mxu0 0
        %4537 = vmatprep.subr.bf16.mxu0 0
        %4538 = vmatpush1.bf16.msra.mxu0 0
        %4539 = vmatprep.subr.bf16.mxu0 0
        %4540 = vmatpush1.bf16.msra.mxu0 0
        %4541 = vmatprep.subr.bf16.mxu0 0
        %4542 = vmatpush1.bf16.msra.mxu0 0
        %4543 = vmatprep.subr.bf16.mxu0 0
        %4544 = vmatpush1.bf16.msra.mxu0 0
        %4545 = vmatprep.subr.bf16.mxu0 0
        %4546 = vmatpush1.bf16.msra.mxu0 0
        %4547 = vmatprep.subr.bf16.mxu0 0
        %4548 = vmatpush1.bf16.msra.mxu0 0
        %4549 = vmatprep.subr.bf16.mxu0 0
        %4550 = vmatpush1.bf16.msra.mxu0 %v4533
        %4551 = vmatprep.subr.bf16.mxu0 0
        %4552 = vmatpush2.bf16.msra.mxu0 0
        %4553 = vmatprep.subr.bf16.mxu0 0
        %4554 = vmatpush2.bf16.msra.mxu0 0
        %4555 = vmatprep.subr.bf16.mxu0 0
        %4556 = vmatpush2.bf16.msra.mxu0 0
        %4557 = vmatprep.subr.bf16.mxu0 0
        %4558 = vmatpush2.bf16.msra.mxu0 0
        %4559 = vmatprep.subr.bf16.mxu0 0
        %4560 = vmatpush2.bf16.msra.mxu0 0
        %4561 = vmatprep.subr.bf16.mxu0 0
        %4562 = vmatpush2.bf16.msra.mxu0 0
        %4563 = vmatprep.subr.bf16.mxu0 0
        %4564 = vmatpush2.bf16.msra.mxu0 0
        %4565 = vmatprep.subr.bf16.mxu0 0
        %4566 = vmatpush2.bf16.msra.mxu0 0
        %4567 = vmatprep.mubr.bf16.mxu0 0
        %4568 = vmatmul.mubr.bf16.gmra.mxu0 %v4530
        %v4569 = vpop.f32.mrf.mxu0
        %v4570 = vadd.f32 0.0, %v4569
        %v4571 = vpop.f32.mrf.mxu0
        %v4572 = vpop.f32.mrf.mxu0
        %v4573 = vpop.f32.mrf.mxu0
        %4574 = vdwg.mxu0
        %4575 = vrot.lane.b32.xlu0 %v1365, 64
        %v4576 = vpop.permute.xlu0 %4575
        %v4578 = vsel %vm3327, %v3319, 0
        %v4581 = vsel %vm3331, %v4576, 0
        %4583 = vmatprep.subr.bf16.mxu0 0
        %4584 = vmatpush1.bf16.msra.mxu0 0
        %4585 = vmatprep.subr.bf16.mxu0 0
        %4586 = vmatpush1.bf16.msra.mxu0 0
        %4587 = vmatprep.subr.bf16.mxu0 0
        %4588 = vmatpush1.bf16.msra.mxu0 0
        %4589 = vmatprep.subr.bf16.mxu0 0
        %4590 = vmatpush1.bf16.msra.mxu0 0
        %4591 = vmatprep.subr.bf16.mxu0 0
        %4592 = vmatpush1.bf16.msra.mxu0 0
        %4593 = vmatprep.subr.bf16.mxu0 0
        %4594 = vmatpush1.bf16.msra.mxu0 0
        %4595 = vmatprep.subr.bf16.mxu0 0
        %4596 = vmatpush1.bf16.msra.mxu0 0
        %4597 = vmatprep.subr.bf16.mxu0 0
        %4598 = vmatpush1.bf16.msra.mxu0 %v4581
        %4599 = vmatprep.subr.bf16.mxu0 0
        %4600 = vmatpush2.bf16.msra.mxu0 0
        %4601 = vmatprep.subr.bf16.mxu0 0
        %4602 = vmatpush2.bf16.msra.mxu0 0
        %4603 = vmatprep.subr.bf16.mxu0 0
        %4604 = vmatpush2.bf16.msra.mxu0 0
        %4605 = vmatprep.subr.bf16.mxu0 0
        %4606 = vmatpush2.bf16.msra.mxu0 0
        %4607 = vmatprep.subr.bf16.mxu0 0
        %4608 = vmatpush2.bf16.msra.mxu0 0
        %4609 = vmatprep.subr.bf16.mxu0 0
        %4610 = vmatpush2.bf16.msra.mxu0 0
        %4611 = vmatprep.subr.bf16.mxu0 0
        %4612 = vmatpush2.bf16.msra.mxu0 0
        %4613 = vmatprep.subr.bf16.mxu0 0
        %4614 = vmatpush2.bf16.msra.mxu0 0
        %4615 = vmatprep.mubr.bf16.mxu0 0
        %4616 = vmatmul.mubr.bf16.gmra.mxu0 %v4578
        %v4617 = vpop.f32.mrf.mxu0
        %v4618 = vadd.f32 0.0, %v4617
        %v4619 = vpop.f32.mrf.mxu0
        %v4620 = vpop.f32.mrf.mxu0
        %v4621 = vpop.f32.mrf.mxu0
        %4622 = vdwg.mxu0
        %4623 = vrot.lane.b32.xlu0 %v1366, 64
        %v4624 = vpop.permute.xlu0 %4623
        %v4626 = vsel %vm3327, %v3320, 0
        %v4629 = vsel %vm3331, %v4624, 0
        %4631 = vmatprep.subr.bf16.mxu0 0
        %4632 = vmatpush1.bf16.msra.mxu0 0
        %4633 = vmatprep.subr.bf16.mxu0 0
        %4634 = vmatpush1.bf16.msra.mxu0 0
        %4635 = vmatprep.subr.bf16.mxu0 0
        %4636 = vmatpush1.bf16.msra.mxu0 0
        %4637 = vmatprep.subr.bf16.mxu0 0
        %4638 = vmatpush1.bf16.msra.mxu0 0
        %4639 = vmatprep.subr.bf16.mxu0 0
        %4640 = vmatpush1.bf16.msra.mxu0 0
        %4641 = vmatprep.subr.bf16.mxu0 0
        %4642 = vmatpush1.bf16.msra.mxu0 0
        %4643 = vmatprep.subr.bf16.mxu0 0
        %4644 = vmatpush1.bf16.msra.mxu0 0
        %4645 = vmatprep.subr.bf16.mxu0 0
        %4646 = vmatpush1.bf16.msra.mxu0 %v4629
        %4647 = vmatprep.subr.bf16.mxu0 0
        %4648 = vmatpush2.bf16.msra.mxu0 0
        %4649 = vmatprep.subr.bf16.mxu0 0
        %4650 = vmatpush2.bf16.msra.mxu0 0
        %4651 = vmatprep.subr.bf16.mxu0 0
        %4652 = vmatpush2.bf16.msra.mxu0 0
        %4653 = vmatprep.subr.bf16.mxu0 0
        %4654 = vmatpush2.bf16.msra.mxu0 0
        %4655 = vmatprep.subr.bf16.mxu0 0
        %4656 = vmatpush2.bf16.msra.mxu0 0
        %4657 = vmatprep.subr.bf16.mxu0 0
        %4658 = vmatpush2.bf16.msra.mxu0 0
        %4659 = vmatprep.subr.bf16.mxu0 0
        %4660 = vmatpush2.bf16.msra.mxu0 0
        %4661 = vmatprep.subr.bf16.mxu0 0
        %4662 = vmatpush2.bf16.msra.mxu0 0
        %4663 = vmatprep.mubr.bf16.mxu0 0
        %4664 = vmatmul.mubr.bf16.gmra.mxu0 %v4626
        %v4665 = vpop.f32.mrf.mxu0
        %v4666 = vadd.f32 0.0, %v4665
        %v4667 = vpop.f32.mrf.mxu0
        %v4668 = vpop.f32.mrf.mxu0
        %v4669 = vpop.f32.mrf.mxu0
        %4670 = vdwg.mxu0
        %4671 = vrot.lane.b32.xlu0 %v1367, 64
        %v4672 = vpop.permute.xlu0 %4671
        %v4674 = vsel %vm3327, %v3321, 0
        %v4677 = vsel %vm3331, %v4672, 0
        %4679 = vmatprep.subr.bf16.mxu0 0
        %4680 = vmatpush1.bf16.msra.mxu0 0
        %4681 = vmatprep.subr.bf16.mxu0 0
        %4682 = vmatpush1.bf16.msra.mxu0 0
        %4683 = vmatprep.subr.bf16.mxu0 0
        %4684 = vmatpush1.bf16.msra.mxu0 0
        %4685 = vmatprep.subr.bf16.mxu0 0
        %4686 = vmatpush1.bf16.msra.mxu0 0
        %4687 = vmatprep.subr.bf16.mxu0 0
        %4688 = vmatpush1.bf16.msra.mxu0 0
        %4689 = vmatprep.subr.bf16.mxu0 0
        %4690 = vmatpush1.bf16.msra.mxu0 0
        %4691 = vmatprep.subr.bf16.mxu0 0
        %4692 = vmatpush1.bf16.msra.mxu0 0
        %4693 = vmatprep.subr.bf16.mxu0 0
        %4694 = vmatpush1.bf16.msra.mxu0 %v4677
        %4695 = vmatprep.subr.bf16.mxu0 0
        %4696 = vmatpush2.bf16.msra.mxu0 0
        %4697 = vmatprep.subr.bf16.mxu0 0
        %4698 = vmatpush2.bf16.msra.mxu0 0
        %4699 = vmatprep.subr.bf16.mxu0 0
        %4700 = vmatpush2.bf16.msra.mxu0 0
        %4701 = vmatprep.subr.bf16.mxu0 0
        %4702 = vmatpush2.bf16.msra.mxu0 0
        %4703 = vmatprep.subr.bf16.mxu0 0
        %4704 = vmatpush2.bf16.msra.mxu0 0
        %4705 = vmatprep.subr.bf16.mxu0 0
        %4706 = vmatpush2.bf16.msra.mxu0 0
        %4707 = vmatprep.subr.bf16.mxu0 0
        %4708 = vmatpush2.bf16.msra.mxu0 0
        %4709 = vmatprep.subr.bf16.mxu0 0
        %4710 = vmatpush2.bf16.msra.mxu0 0
        %4711 = vmatprep.mubr.bf16.mxu0 0
        %4712 = vmatmul.mubr.bf16.gmra.mxu0 %v4674
        %v4713 = vpop.f32.mrf.mxu0
        %v4714 = vadd.f32 0.0, %v4713
        %v4715 = vpop.f32.mrf.mxu0
        %v4716 = vpop.f32.mrf.mxu0
        %v4717 = vpop.f32.mrf.mxu0
        %4718 = vdwg.mxu0
        %4719 = vrot.lane.b32.xlu0 %v1368, 64
        %v4720 = vpop.permute.xlu0 %4719
        %v4722 = vsel %vm3327, %v3322, 0
        %v4725 = vsel %vm3331, %v4720, 0
        %4727 = vmatprep.subr.bf16.mxu0 0
        %4728 = vmatpush1.bf16.msra.mxu0 0
        %4729 = vmatprep.subr.bf16.mxu0 0
        %4730 = vmatpush1.bf16.msra.mxu0 0
        %4731 = vmatprep.subr.bf16.mxu0 0
        %4732 = vmatpush1.bf16.msra.mxu0 0
        %4733 = vmatprep.subr.bf16.mxu0 0
        %4734 = vmatpush1.bf16.msra.mxu0 0
        %4735 = vmatprep.subr.bf16.mxu0 0
        %4736 = vmatpush1.bf16.msra.mxu0 0
        %4737 = vmatprep.subr.bf16.mxu0 0
        %4738 = vmatpush1.bf16.msra.mxu0 0
        %4739 = vmatprep.subr.bf16.mxu0 0
        %4740 = vmatpush1.bf16.msra.mxu0 0
        %4741 = vmatprep.subr.bf16.mxu0 0
        %4742 = vmatpush1.bf16.msra.mxu0 %v4725
        %4743 = vmatprep.subr.bf16.mxu0 0
        %4744 = vmatpush2.bf16.msra.mxu0 0
        %4745 = vmatprep.subr.bf16.mxu0 0
        %4746 = vmatpush2.bf16.msra.mxu0 0
        %4747 = vmatprep.subr.bf16.mxu0 0
        %4748 = vmatpush2.bf16.msra.mxu0 0
        %4749 = vmatprep.subr.bf16.mxu0 0
        %4750 = vmatpush2.bf16.msra.mxu0 0
        %4751 = vmatprep.subr.bf16.mxu0 0
        %4752 = vmatpush2.bf16.msra.mxu0 0
        %4753 = vmatprep.subr.bf16.mxu0 0
        %4754 = vmatpush2.bf16.msra.mxu0 0
        %4755 = vmatprep.subr.bf16.mxu0 0
        %4756 = vmatpush2.bf16.msra.mxu0 0
        %4757 = vmatprep.subr.bf16.mxu0 0
        %4758 = vmatpush2.bf16.msra.mxu0 0
        %4759 = vmatprep.mubr.bf16.mxu0 0
        %4760 = vmatmul.mubr.bf16.gmra.mxu0 %v4722
        %v4761 = vpop.f32.mrf.mxu0
        %v4762 = vadd.f32 0.0, %v4761
        %v4763 = vpop.f32.mrf.mxu0
        %v4764 = vpop.f32.mrf.mxu0
        %v4765 = vpop.f32.mrf.mxu0
        %4766 = vdwg.mxu0
        %4767 = vrot.lane.b32.xlu0 %v1369, 64
        %v4768 = vpop.permute.xlu0 %4767
        %v4770 = vsel %vm3327, %v3323, 0
        %v4773 = vsel %vm3331, %v4768, 0
        %4775 = vmatprep.subr.bf16.mxu0 0
        %4776 = vmatpush1.bf16.msra.mxu0 0
        %4777 = vmatprep.subr.bf16.mxu0 0
        %4778 = vmatpush1.bf16.msra.mxu0 0
        %4779 = vmatprep.subr.bf16.mxu0 0
        %4780 = vmatpush1.bf16.msra.mxu0 0
        %4781 = vmatprep.subr.bf16.mxu0 0
        %4782 = vmatpush1.bf16.msra.mxu0 0
        %4783 = vmatprep.subr.bf16.mxu0 0
        %4784 = vmatpush1.bf16.msra.mxu0 0
        %4785 = vmatprep.subr.bf16.mxu0 0
        %4786 = vmatpush1.bf16.msra.mxu0 0
        %4787 = vmatprep.subr.bf16.mxu0 0
        %4788 = vmatpush1.bf16.msra.mxu0 0
        %4789 = vmatprep.subr.bf16.mxu0 0
        %4790 = vmatpush1.bf16.msra.mxu0 %v4773
        %4791 = vmatprep.subr.bf16.mxu0 0
        %4792 = vmatpush2.bf16.msra.mxu0 0
        %4793 = vmatprep.subr.bf16.mxu0 0
        %4794 = vmatpush2.bf16.msra.mxu0 0
        %4795 = vmatprep.subr.bf16.mxu0 0
        %4796 = vmatpush2.bf16.msra.mxu0 0
        %4797 = vmatprep.subr.bf16.mxu0 0
        %4798 = vmatpush2.bf16.msra.mxu0 0
        %4799 = vmatprep.subr.bf16.mxu0 0
        %4800 = vmatpush2.bf16.msra.mxu0 0
        %4801 = vmatprep.subr.bf16.mxu0 0
        %4802 = vmatpush2.bf16.msra.mxu0 0
        %4803 = vmatprep.subr.bf16.mxu0 0
        %4804 = vmatpush2.bf16.msra.mxu0 0
        %4805 = vmatprep.subr.bf16.mxu0 0
        %4806 = vmatpush2.bf16.msra.mxu0 0
        %4807 = vmatprep.mubr.bf16.mxu0 0
        %4808 = vmatmul.mubr.bf16.gmra.mxu0 %v4770
        %v4809 = vpop.f32.mrf.mxu0
        %v4810 = vadd.f32 0.0, %v4809
        %v4811 = vpop.f32.mrf.mxu0
        %v4812 = vpop.f32.mrf.mxu0
        %v4813 = vpop.f32.mrf.mxu0
        %4814 = vdwg.mxu0
        %4815 = vrot.lane.b32.xlu0 %v1370, 64
        %v4816 = vpop.permute.xlu0 %4815
        %v4818 = vsel %vm3327, %v3324, 0
        %v4821 = vsel %vm3331, %v4816, 0
        %4823 = vmatprep.subr.bf16.mxu0 0
        %4824 = vmatpush1.bf16.msra.mxu0 0
        %4825 = vmatprep.subr.bf16.mxu0 0
        %4826 = vmatpush1.bf16.msra.mxu0 0
        %4827 = vmatprep.subr.bf16.mxu0 0
        %4828 = vmatpush1.bf16.msra.mxu0 0
        %4829 = vmatprep.subr.bf16.mxu0 0
        %4830 = vmatpush1.bf16.msra.mxu0 0
        %4831 = vmatprep.subr.bf16.mxu0 0
        %4832 = vmatpush1.bf16.msra.mxu0 0
        %4833 = vmatprep.subr.bf16.mxu0 0
        %4834 = vmatpush1.bf16.msra.mxu0 0
        %4835 = vmatprep.subr.bf16.mxu0 0
        %4836 = vmatpush1.bf16.msra.mxu0 0
        %4837 = vmatprep.subr.bf16.mxu0 0
        %4838 = vmatpush1.bf16.msra.mxu0 %v4821
        %4839 = vmatprep.subr.bf16.mxu0 0
        %4840 = vmatpush2.bf16.msra.mxu0 0
        %4841 = vmatprep.subr.bf16.mxu0 0
        %4842 = vmatpush2.bf16.msra.mxu0 0
        %4843 = vmatprep.subr.bf16.mxu0 0
        %4844 = vmatpush2.bf16.msra.mxu0 0
        %4845 = vmatprep.subr.bf16.mxu0 0
        %4846 = vmatpush2.bf16.msra.mxu0 0
        %4847 = vmatprep.subr.bf16.mxu0 0
        %4848 = vmatpush2.bf16.msra.mxu0 0
        %4849 = vmatprep.subr.bf16.mxu0 0
        %4850 = vmatpush2.bf16.msra.mxu0 0
        %4851 = vmatprep.subr.bf16.mxu0 0
        %4852 = vmatpush2.bf16.msra.mxu0 0
        %4853 = vmatprep.subr.bf16.mxu0 0
        %4854 = vmatpush2.bf16.msra.mxu0 0
        %4855 = vmatprep.mubr.bf16.mxu0 0
        %4856 = vmatmul.mubr.bf16.gmra.mxu0 %v4818
        %v4857 = vpop.f32.mrf.mxu0
        %v4858 = vadd.f32 0.0, %v4857
        %v4859 = vpop.f32.mrf.mxu0
        %v4860 = vpop.f32.mrf.mxu0
        %v4861 = vpop.f32.mrf.mxu0
        %4862 = vdwg.mxu0
        %v4871 = vcombine.low %v3370, %v3418
        %v4872 = vcombine.low %v3466, %v3514
        %v4874 = vunpack.c.l.s4 1983009808
        %v4875 = vunpack.c.0.s8 %v4874
        %v4876 = vlaneseq
        %v4877 = vshrl.u32 %v4876, 7
        %v4878 = vsub.s32 %v4875, %v4877
        %v4879 = vrot.slane %v4871, %v4878
        %v4881 = vunpack.c.l.s4 1983009808
        %v4882 = vunpack.c.0.s8 %v4881
        %v4883 = vlaneseq
        %v4884 = vshrl.u32 %v4883, 7
        %v4885 = vsub.s32 %v4882, %v4884
        %v4886 = vrot.slane %v4872, %v4885
        %v4887 = vcombine.low %v4879, %v4886
        %v4888 = vcombine.low %v3562, %v3610
        %v4889 = vcombine.low %v3658, %v3706
        %v4891 = vunpack.c.l.s4 1983009808
        %v4892 = vunpack.c.0.s8 %v4891
        %v4893 = vlaneseq
        %v4894 = vshrl.u32 %v4893, 7
        %v4895 = vsub.s32 %v4892, %v4894
        %v4896 = vrot.slane %v4888, %v4895
        %v4898 = vunpack.c.l.s4 1983009808
        %v4899 = vunpack.c.0.s8 %v4898
        %v4900 = vlaneseq
        %v4901 = vshrl.u32 %v4900, 7
        %v4902 = vsub.s32 %v4899, %v4901
        %v4903 = vrot.slane %v4889, %v4902
        %v4904 = vcombine.low %v4896, %v4903
        %v4915 = vcombine.low %v3754, %v3802
        %v4916 = vcombine.low %v3850, %v3898
        %v4918 = vunpack.c.l.s4 1983009808
        %v4919 = vunpack.c.0.s8 %v4918
        %v4920 = vlaneseq
        %v4921 = vshrl.u32 %v4920, 7
        %v4922 = vsub.s32 %v4919, %v4921
        %v4923 = vrot.slane %v4915, %v4922
        %v4925 = vunpack.c.l.s4 1983009808
        %v4926 = vunpack.c.0.s8 %v4925
        %v4927 = vlaneseq
        %v4928 = vshrl.u32 %v4927, 7
        %v4929 = vsub.s32 %v4926, %v4928
        %v4930 = vrot.slane %v4916, %v4929
        %v4931 = vcombine.low %v4923, %v4930
        %v4932 = vcombine.low %v3946, %v3994
        %v4933 = vcombine.low %v4042, %v4090
        %v4935 = vunpack.c.l.s4 1983009808
        %v4936 = vunpack.c.0.s8 %v4935
        %v4937 = vlaneseq
        %v4938 = vshrl.u32 %v4937, 7
        %v4939 = vsub.s32 %v4936, %v4938
        %v4940 = vrot.slane %v4932, %v4939
        %v4942 = vunpack.c.l.s4 1983009808
        %v4943 = vunpack.c.0.s8 %v4942
        %v4944 = vlaneseq
        %v4945 = vshrl.u32 %v4944, 7
        %v4946 = vsub.s32 %v4943, %v4945
        %v4947 = vrot.slane %v4933, %v4946
        %v4948 = vcombine.low %v4940, %v4947
        %4949 = vrot.lane.b32.xlu0 %v4931, 8
        %v4950 = vpop.permute.xlu0 %4949
        %4951 = vrot.lane.b32.xlu0 %v4948, 8
        %v4952 = vpop.permute.xlu0 %4951
        %v4963 = vcombine.low %v4138, %v4186
        %v4964 = vcombine.low %v4234, %v4282
        %v4966 = vunpack.c.l.s4 1983009808
        %v4967 = vunpack.c.0.s8 %v4966
        %v4968 = vlaneseq
        %v4969 = vshrl.u32 %v4968, 7
        %v4970 = vsub.s32 %v4967, %v4969
        %v4971 = vrot.slane %v4963, %v4970
        %v4973 = vunpack.c.l.s4 1983009808
        %v4974 = vunpack.c.0.s8 %v4973
        %v4975 = vlaneseq
        %v4976 = vshrl.u32 %v4975, 7
        %v4977 = vsub.s32 %v4974, %v4976
        %v4978 = vrot.slane %v4964, %v4977
        %v4979 = vcombine.low %v4971, %v4978
        %v4980 = vcombine.low %v4330, %v4378
        %v4981 = vcombine.low %v4426, %v4474
        %v4983 = vunpack.c.l.s4 1983009808
        %v4984 = vunpack.c.0.s8 %v4983
        %v4985 = vlaneseq
        %v4986 = vshrl.u32 %v4985, 7
        %v4987 = vsub.s32 %v4984, %v4986
        %v4988 = vrot.slane %v4980, %v4987
        %v4990 = vunpack.c.l.s4 1983009808
        %v4991 = vunpack.c.0.s8 %v4990
        %v4992 = vlaneseq
        %v4993 = vshrl.u32 %v4992, 7
        %v4994 = vsub.s32 %v4991, %v4993
        %v4995 = vrot.slane %v4981, %v4994
        %v4996 = vcombine.low %v4988, %v4995
        %4997 = vrot.lane.b32.xlu0 %v4979, 16
        %v4998 = vpop.permute.xlu0 %4997
        %4999 = vrot.lane.b32.xlu0 %v4996, 16
        %v5000 = vpop.permute.xlu0 %4999
        %v5011 = vcombine.low %v4522, %v4570
        %v5012 = vcombine.low %v4618, %v4666
        %v5014 = vunpack.c.l.s4 1983009808
        %v5015 = vunpack.c.0.s8 %v5014
        %v5016 = vlaneseq
        %v5017 = vshrl.u32 %v5016, 7
        %v5018 = vsub.s32 %v5015, %v5017
        %v5019 = vrot.slane %v5011, %v5018
        %v5021 = vunpack.c.l.s4 1983009808
        %v5022 = vunpack.c.0.s8 %v5021
        %v5023 = vlaneseq
        %v5024 = vshrl.u32 %v5023, 7
        %v5025 = vsub.s32 %v5022, %v5024
        %v5026 = vrot.slane %v5012, %v5025
        %v5027 = vcombine.low %v5019, %v5026
        %v5028 = vcombine.low %v4714, %v4762
        %v5029 = vcombine.low %v4810, %v4858
        %v5031 = vunpack.c.l.s4 1983009808
        %v5032 = vunpack.c.0.s8 %v5031
        %v5033 = vlaneseq
        %v5034 = vshrl.u32 %v5033, 7
        %v5035 = vsub.s32 %v5032, %v5034
        %v5036 = vrot.slane %v5028, %v5035
        %v5038 = vunpack.c.l.s4 1983009808
        %v5039 = vunpack.c.0.s8 %v5038
        %v5040 = vlaneseq
        %v5041 = vshrl.u32 %v5040, 7
        %v5042 = vsub.s32 %v5039, %v5041
        %v5043 = vrot.slane %v5029, %v5042
        %v5044 = vcombine.low %v5036, %v5043
        %5045 = vrot.lane.b32.xlu0 %v5027, 24
        %v5046 = vpop.permute.xlu0 %5045
        %5047 = vrot.lane.b32.xlu0 %v5044, 24
        %v5048 = vpop.permute.xlu0 %5047
        %v5051 = vsel %vm1374, %v4887, %v4950
        %v5052 = vsel %vm1374, %v4904, %v4952
        %vm5053 = vcmask 130048
        %v5054 = vsel %vm5053, %v5051, %v4998
        %v5055 = vsel %vm5053, %v5052, %v5000
        %vm5056 = vcmask 195584
        %v5057 = vsel %vm5056, %v5054, %v5046
        %v5058 = vsel %vm5056, %v5055, %v5048
        %v5059 = vpack.c.bf16 %v5058, %v5057
        %v5060 = vld [vmem:[%s729] sm:$0xf]
        %v5061 = vld [vmem:[%s729 + $0x4] sm:$0xf]
        %v5062 = vld [vmem:[%s729 + $0x8] sm:$0xf]
        %v5063 = vld [vmem:[%s729 + $0xc] sm:$0xf]
        %v5064 = vld [vmem:[%s732] sm:$0x1]
        %v5066 = vlaneseq
        %v5067 = vshrl.u32 %v5066, 7
        %v5068 = vsub.s32 0, %v5067
        %v5069 = vrot.slane %v5064, %v5068
        %v5075 = vunpack.c.l.b16 %v5060
        %v5076 = vunpack.c.l.b16 %v5061
        %v5077 = vunpack.c.l.b16 %v5062
        %v5078 = vunpack.c.l.b16 %v5063
        %v5079 = vpack.c.b16 %v5076, %v5075
        %v5080 = vpack.c.b16 %v5078, %v5077
        %v5084 = vsel %vm1178, %v5059, 0
        %5086 = vmatprep.subr.bf16.mxu0 0
        %5087 = vmatpush1.bf16.msra.mxu0 0
        %5088 = vmatprep.subr.bf16.mxu0 0
        %5089 = vmatpush1.bf16.msra.mxu0 0
        %5090 = vmatprep.subr.bf16.mxu0 0
        %5091 = vmatpush1.bf16.msra.mxu0 0
        %5092 = vmatprep.subr.bf16.mxu0 0
        %5093 = vmatpush1.bf16.msra.mxu0 0
        %5094 = vmatprep.subr.bf16.mxu0 0
        %5095 = vmatpush1.bf16.msra.mxu0 0
        %5096 = vmatprep.subr.bf16.mxu0 0
        %5097 = vmatpush1.bf16.msra.mxu0 0
        %5098 = vmatprep.subr.bf16.mxu0 0
        %5099 = vmatpush1.bf16.msra.mxu0 %v5080
        %5100 = vmatprep.subr.bf16.mxu0 0
        %5101 = vmatpush1.bf16.msra.mxu0 %v5079
        %5102 = vmatprep.subr.bf16.mxu0 0
        %5103 = vmatpush2.bf16.msra.mxu0 0
        %5104 = vmatprep.subr.bf16.mxu0 0
        %5105 = vmatpush2.bf16.msra.mxu0 0
        %5106 = vmatprep.subr.bf16.mxu0 0
        %5107 = vmatpush2.bf16.msra.mxu0 0
        %5108 = vmatprep.subr.bf16.mxu0 0
        %5109 = vmatpush2.bf16.msra.mxu0 0
        %5110 = vmatprep.subr.bf16.mxu0 0
        %5111 = vmatpush2.bf16.msra.mxu0 0
        %5112 = vmatprep.subr.bf16.mxu0 0
        %5113 = vmatpush2.bf16.msra.mxu0 0
        %5114 = vmatprep.subr.bf16.mxu0 0
        %5115 = vmatpush2.bf16.msra.mxu0 0
        %5116 = vmatprep.subr.bf16.mxu0 0
        %5117 = vmatpush2.bf16.msra.mxu0 0
        %5118 = vmatprep.mubr.bf16.mxu0 0
        %5119 = vmatmul.mubr.bf16.gmra.mxu0 %v5084
        %v5120 = vpop.f32.mrf.mxu0
        %v5121 = vadd.f32 %v5069, %v5120
        %v5122 = vpop.f32.mrf.mxu0
        %v5123 = vpop.f32.mrf.mxu0
        %v5124 = vadd.f32 %v5069, %v5123
        %v5125 = vpop.f32.mrf.mxu0
        %5126 = vdwg.mxu0
        %v5127 = vadd.f32 %v5121, %v1152
        %v5128 = vadd.f32 %v5124, %v1153
        %v5129 = vld [vmem:[%s735] sm:$0x1]
        %v5130 = vld [vmem:[%s738] sm:$0x1]
        %v5131 = vsel %vm1178, %v5127, 0.0
        %5132 = vadd.xlane.f32.xlu0 %v5131
        %v5133 = vpop.xlane.xlu0 %5132
        %v5134 = vsel %vm1178, %v5128, 0.0
        %5135 = vadd.xlane.f32.xlu0 %v5134
        %v5136 = vpop.xlane.xlu0 %5135
        %v5137 = vrcp.pop 32.0
        %v5138 = vmul.f32 %v5133, %v5137
        %v5139 = vmul.f32 %v5136, %v5137
        %v5140 = vsub.f32 %v5127, %v5138
        %v5141 = vsub.f32 %v5128, %v5139
        %v5142 = vmul.f32 %v5140, %v5140
        %v5143 = vmul.f32 %v5141, %v5141
        %v5144 = vsel %vm1178, %v5142, 0.0
        %5145 = vadd.xlane.f32.xlu0 %v5144
        %v5146 = vpop.xlane.xlu0 %5145
        %v5147 = vsel %vm1178, %v5143, 0.0
        %5148 = vadd.xlane.f32.xlu0 %v5147
        %v5149 = vpop.xlane.xlu0 %5148
        %v5150 = vmul.f32 %v5146, %v5137
        %v5151 = vmul.f32 %v5149, %v5137
        %v5152 = vadd.f32 %v5150, 1e-05
        %v5153 = vadd.f32 %v5151, 1e-05
        %v5154 = vrsqrt.pop %v5152
        %v5155 = vrsqrt.pop %v5153
        %v5156 = vmul.f32 %v5140, %v5154
        %v5157 = vmul.f32 %v5141, %v5155
        %v5159 = vlaneseq
        %v5160 = vshrl.u32 %v5159, 7
        %v5161 = vsub.s32 0, %v5160
        %v5162 = vrot.slane %v5129, %v5161
        %v5164 = vmul.f32 %v5156, %v5162
        %v5165 = vmul.f32 %v5157, %v5162
        %v5167 = vlaneseq
        %v5168 = vshrl.u32 %v5167, 7
        %v5169 = vsub.s32 0, %v5168
        %v5170 = vrot.slane %v5130, %v5169
        %v5172 = vadd.f32 %v5164, %v5170
        %v5173 = vadd.f32 %v5165, %v5170
        %v5174 = vpack.c.bf16 %v5173, %v5172
        %v5175 = vld [vmem:[%s743] sm:$0xf]
        %v5176 = vld [vmem:[%s743 + $0x4] sm:$0xf]
        %v5177 = vld [vmem:[%s743 + $0x8] sm:$0xf]
        %v5178 = vld [vmem:[%s743 + $0xc] sm:$0xf]
        %v5179 = vld [vmem:[%s746] sm:$0x1]
        %v5181 = vlaneseq
        %v5182 = vshrl.u32 %v5181, 7
        %v5183 = vsub.s32 0, %v5182
        %v5184 = vrot.slane %v5179, %v5183
        %v5190 = vunpack.c.l.b16 %v5175
        %v5191 = vunpack.c.l.b16 %v5176
        %v5192 = vunpack.c.l.b16 %v5177
        %v5193 = vunpack.c.l.b16 %v5178
        %v5194 = vpack.c.b16 %v5191, %v5190
        %v5195 = vpack.c.b16 %v5193, %v5192
        %v5199 = vsel %vm1178, %v5174, 0
        %5201 = vmatprep.subr.bf16.mxu0 0
        %5202 = vmatpush1.bf16.msra.mxu0 0
        %5203 = vmatprep.subr.bf16.mxu0 0
        %5204 = vmatpush1.bf16.msra.mxu0 0
        %5205 = vmatprep.subr.bf16.mxu0 0
        %5206 = vmatpush1.bf16.msra.mxu0 0
        %5207 = vmatprep.subr.bf16.mxu0 0
        %5208 = vmatpush1.bf16.msra.mxu0 0
        %5209 = vmatprep.subr.bf16.mxu0 0
        %5210 = vmatpush1.bf16.msra.mxu0 0
        %5211 = vmatprep.subr.bf16.mxu0 0
        %5212 = vmatpush1.bf16.msra.mxu0 0
        %5213 = vmatprep.subr.bf16.mxu0 0
        %5214 = vmatpush1.bf16.msra.mxu0 %v5195
        %5215 = vmatprep.subr.bf16.mxu0 0
        %5216 = vmatpush1.bf16.msra.mxu0 %v5194
        %5217 = vmatprep.subr.bf16.mxu0 0
        %5218 = vmatpush2.bf16.msra.mxu0 0
        %5219 = vmatprep.subr.bf16.mxu0 0
        %5220 = vmatpush2.bf16.msra.mxu0 0
        %5221 = vmatprep.subr.bf16.mxu0 0
        %5222 = vmatpush2.bf16.msra.mxu0 0
        %5223 = vmatprep.subr.bf16.mxu0 0
        %5224 = vmatpush2.bf16.msra.mxu0 0
        %5225 = vmatprep.subr.bf16.mxu0 0
        %5226 = vmatpush2.bf16.msra.mxu0 0
        %5227 = vmatprep.subr.bf16.mxu0 0
        %5228 = vmatpush2.bf16.msra.mxu0 0
        %5229 = vmatprep.subr.bf16.mxu0 0
        %5230 = vmatpush2.bf16.msra.mxu0 0
        %5231 = vmatprep.subr.bf16.mxu0 0
        %5232 = vmatpush2.bf16.msra.mxu0 0
        %5233 = vmatprep.mubr.bf16.mxu0 0
        %5234 = vmatmul.mubr.bf16.gmra.mxu0 %v5199
        %v5235 = vpop.f32.mrf.mxu0
        %v5236 = vadd.f32 %v5184, %v5235
        %v5237 = vpop.f32.mrf.mxu0
        %v5238 = vpop.f32.mrf.mxu0
        %v5239 = vadd.f32 %v5184, %v5238
        %v5240 = vpop.f32.mrf.mxu0
        %5241 = vdwg.mxu0
        %v5242 = vmax.f32 %v5236, 0.0
        %v5243 = vmax.f32 %v5239, 0.0
        %v5244 = vpack.c.bf16 %v5243, %v5242
        %v5245 = vld [vmem:[%s751] sm:$0xf]
        %v5246 = vld [vmem:[%s751 + $0x4] sm:$0xf]
        %v5247 = vld [vmem:[%s751 + $0x8] sm:$0xf]
        %v5248 = vld [vmem:[%s751 + $0xc] sm:$0xf]
        %v5249 = vld [vmem:[%s751 + $0x10] sm:$0xf]
        %v5250 = vld [vmem:[%s751 + $0x14] sm:$0xf]
        %v5251 = vld [vmem:[%s751 + $0x18] sm:$0xf]
        %v5252 = vld [vmem:[%s751 + $0x1c] sm:$0xf]
        %v5253 = vld [vmem:[%s751 + $0x20] sm:$0xf]
        %v5254 = vld [vmem:[%s751 + $0x24] sm:$0xf]
        %v5255 = vld [vmem:[%s751 + $0x28] sm:$0xf]
        %v5256 = vld [vmem:[%s751 + $0x2c] sm:$0xf]
        %v5257 = vld [vmem:[%s751 + $0x30] sm:$0xf]
        %v5258 = vld [vmem:[%s751 + $0x34] sm:$0xf]
        %v5259 = vld [vmem:[%s751 + $0x38] sm:$0xf]
        %v5260 = vld [vmem:[%s751 + $0x3c] sm:$0xf]
        %v5261 = vld [vmem:[%s754] sm:$0x1]
        %v5263 = vlaneseq
        %v5264 = vshrl.u32 %v5263, 7
        %v5265 = vsub.s32 0, %v5264
        %v5266 = vrot.slane %v5261, %v5265
        %v5284 = vunpack.c.l.b16 %v5245
        %v5285 = vunpack.c.l.b16 %v5246
        %v5286 = vunpack.c.l.b16 %v5247
        %v5287 = vunpack.c.l.b16 %v5248
        %v5288 = vunpack.c.l.b16 %v5249
        %v5289 = vunpack.c.l.b16 %v5250
        %v5290 = vunpack.c.l.b16 %v5251
        %v5291 = vunpack.c.l.b16 %v5252
        %v5292 = vunpack.c.l.b16 %v5253
        %v5293 = vunpack.c.l.b16 %v5254
        %v5294 = vunpack.c.l.b16 %v5255
        %v5295 = vunpack.c.l.b16 %v5256
        %v5296 = vunpack.c.l.b16 %v5257
        %v5297 = vunpack.c.l.b16 %v5258
        %v5298 = vunpack.c.l.b16 %v5259
        %v5299 = vunpack.c.l.b16 %v5260
        %v5300 = vpack.c.b16 %v5285, %v5284
        %v5301 = vpack.c.b16 %v5287, %v5286
        %v5302 = vpack.c.b16 %v5289, %v5288
        %v5303 = vpack.c.b16 %v5291, %v5290
        %v5304 = vpack.c.b16 %v5293, %v5292
        %v5305 = vpack.c.b16 %v5295, %v5294
        %v5306 = vpack.c.b16 %v5297, %v5296
        %v5307 = vpack.c.b16 %v5299, %v5298
        %5316 = vmatprep.subr.bf16.mxu0 0
        %5317 = vmatpush1.bf16.msra.mxu0 %v5307
        %5318 = vmatprep.subr.bf16.mxu0 0
        %5319 = vmatpush1.bf16.msra.mxu0 %v5306
        %5320 = vmatprep.subr.bf16.mxu0 0
        %5321 = vmatpush1.bf16.msra.mxu0 %v5305
        %5322 = vmatprep.subr.bf16.mxu0 0
        %5323 = vmatpush1.bf16.msra.mxu0 %v5304
        %5324 = vmatprep.subr.bf16.mxu0 0
        %5325 = vmatpush1.bf16.msra.mxu0 %v5303
        %5326 = vmatprep.subr.bf16.mxu0 0
        %5327 = vmatpush1.bf16.msra.mxu0 %v5302
        %5328 = vmatprep.subr.bf16.mxu0 0
        %5329 = vmatpush1.bf16.msra.mxu0 %v5301
        %5330 = vmatprep.subr.bf16.mxu0 0
        %5331 = vmatpush1.bf16.msra.mxu0 %v5300
        %5332 = vmatprep.subr.bf16.mxu0 0
        %5333 = vmatpush2.bf16.msra.mxu0 0
        %5334 = vmatprep.subr.bf16.mxu0 0
        %5335 = vmatpush2.bf16.msra.mxu0 0
        %5336 = vmatprep.subr.bf16.mxu0 0
        %5337 = vmatpush2.bf16.msra.mxu0 0
        %5338 = vmatprep.subr.bf16.mxu0 0
        %5339 = vmatpush2.bf16.msra.mxu0 0
        %5340 = vmatprep.subr.bf16.mxu0 0
        %5341 = vmatpush2.bf16.msra.mxu0 0
        %5342 = vmatprep.subr.bf16.mxu0 0
        %5343 = vmatpush2.bf16.msra.mxu0 0
        %5344 = vmatprep.subr.bf16.mxu0 0
        %5345 = vmatpush2.bf16.msra.mxu0 0
        %5346 = vmatprep.subr.bf16.mxu0 0
        %5347 = vmatpush2.bf16.msra.mxu0 0
        %5348 = vmatprep.mubr.bf16.mxu0 0
        %5349 = vmatmul.mubr.bf16.gmra.mxu0 %v5244
        %v5350 = vpop.f32.mrf.mxu0
        %v5351 = vadd.f32 %v5266, %v5350
        %v5352 = vpop.f32.mrf.mxu0
        %v5353 = vpop.f32.mrf.mxu0
        %v5354 = vadd.f32 %v5266, %v5353
        %v5355 = vpop.f32.mrf.mxu0
        %5356 = vdwg.mxu0
        %v5357 = vadd.f32 %v5351, %v5172
        %v5358 = vadd.f32 %v5354, %v5173
        %v5359 = vld [vmem:[%s757] sm:$0x1]
        %v5360 = vld [vmem:[%s760] sm:$0x1]
        %v5361 = vsel %vm1178, %v5357, 0.0
        %5362 = vadd.xlane.f32.xlu0 %v5361
        %v5363 = vpop.xlane.xlu0 %5362
        %v5364 = vsel %vm1178, %v5358, 0.0
        %5365 = vadd.xlane.f32.xlu0 %v5364
        %v5366 = vpop.xlane.xlu0 %5365
        %v5367 = vmul.f32 %v5363, %v5137
        %v5368 = vmul.f32 %v5366, %v5137
        %v5369 = vsub.f32 %v5357, %v5367
        %v5370 = vsub.f32 %v5358, %v5368
        %v5371 = vmul.f32 %v5369, %v5369
        %v5372 = vmul.f32 %v5370, %v5370
        %v5373 = vsel %vm1178, %v5371, 0.0
        %5374 = vadd.xlane.f32.xlu0 %v5373
        %v5375 = vpop.xlane.xlu0 %5374
        %v5376 = vsel %vm1178, %v5372, 0.0
        %5377 = vadd.xlane.f32.xlu0 %v5376
        %v5378 = vpop.xlane.xlu0 %5377
        %v5379 = vmul.f32 %v5375, %v5137
        %v5380 = vmul.f32 %v5378, %v5137
        %v5381 = vadd.f32 %v5379, 1e-05
        %v5382 = vadd.f32 %v5380, 1e-05
        %v5383 = vrsqrt.pop %v5381
        %v5384 = vrsqrt.pop %v5382
        %v5385 = vmul.f32 %v5369, %v5383
        %v5386 = vmul.f32 %v5370, %v5384
        %v5388 = vlaneseq
        %v5389 = vshrl.u32 %v5388, 7
        %v5390 = vsub.s32 0, %v5389
        %v5391 = vrot.slane %v5359, %v5390
        %v5393 = vmul.f32 %v5385, %v5391
        %v5394 = vmul.f32 %v5386, %v5391
        %v5396 = vlaneseq
        %v5397 = vshrl.u32 %v5396, 7
        %v5398 = vsub.s32 0, %v5397
        %v5399 = vrot.slane %v5360, %v5398
        %v5401 = vadd.f32 %v5393, %v5399
        %v5402 = vadd.f32 %v5394, %v5399
        %5403 = vst.msk [vmem:[#allocation2] sm:$0xff] %vm1178, %v5401
        %5404 = vst.msk [vmem:[#allocation2 + $0x8] sm:$0xff] %vm1178, %v5402
        %p5405 = scmp.eq.s32.totalorder %s31, 1
        // Predicated region
        $region101: #{vit_forward.1} parent=95 // pred_check
          %p5406 = pneg %p5405
        $region102: #{vit_forward.1} parent=95 // pred_check_branch
          %5408 = sbr.rel (%p5406) target = $region104
        $region103: #{vit_forward.1} parent=95 // pred_region
          %v5409 = vpack.c.bf16 %v5401, %v5401
          %v5410 = vld [vmem:[%s17] sm:$0xf]
          %v5411 = vld [vmem:[%s17 + $0x4] sm:$0xf]
          %v5412 = vld [vmem:[%s17 + $0x8] sm:$0xf]
          %v5413 = vld [vmem:[%s17 + $0xc] sm:$0xf]
          %v5414 = vld [vmem:[%s18] sm:$0x1]
          %v5416 = vlaneseq
          %v5417 = vshrl.u32 %v5416, 7
          %v5418 = vsub.s32 0, %v5417
          %v5419 = vrot.slane %v5414, %v5418
          %v5425 = vunpack.c.l.b16 %v5410
          %v5426 = vunpack.c.l.b16 %v5411
          %v5427 = vunpack.c.l.b16 %v5412
          %v5428 = vunpack.c.l.b16 %v5413
          %v5429 = vpack.c.b16 %v5426, %v5425
          %v5430 = vpack.c.b16 %v5428, %v5427
          %v5434 = vsel %vm1178, %v5409, 0
          %5436 = vmatprep.subr.bf16.mxu0 0
          %5437 = vmatpush1.bf16.msra.mxu0 0
          %5438 = vmatprep.subr.bf16.mxu0 0
          %5439 = vmatpush1.bf16.msra.mxu0 0
          %5440 = vmatprep.subr.bf16.mxu0 0
          %5441 = vmatpush1.bf16.msra.mxu0 0
          %5442 = vmatprep.subr.bf16.mxu0 0
          %5443 = vmatpush1.bf16.msra.mxu0 0
          %5444 = vmatprep.subr.bf16.mxu0 0
          %5445 = vmatpush1.bf16.msra.mxu0 0
          %5446 = vmatprep.subr.bf16.mxu0 0
          %5447 = vmatpush1.bf16.msra.mxu0 0
          %5448 = vmatprep.subr.bf16.mxu0 0
          %5449 = vmatpush1.bf16.msra.mxu0 %v5430
          %5450 = vmatprep.subr.bf16.mxu0 0
          %5451 = vmatpush1.bf16.msra.mxu0 %v5429
          %5452 = vmatprep.subr.bf16.mxu0 0
          %5453 = vmatpush2.bf16.msra.mxu0 0
          %5454 = vmatprep.subr.bf16.mxu0 0
          %5455 = vmatpush2.bf16.msra.mxu0 0
          %5456 = vmatprep.subr.bf16.mxu0 0
          %5457 = vmatpush2.bf16.msra.mxu0 0
          %5458 = vmatprep.subr.bf16.mxu0 0
          %5459 = vmatpush2.bf16.msra.mxu0 0
          %5460 = vmatprep.subr.bf16.mxu0 0
          %5461 = vmatpush2.bf16.msra.mxu0 0
          %5462 = vmatprep.subr.bf16.mxu0 0
          %5463 = vmatpush2.bf16.msra.mxu0 0
          %5464 = vmatprep.subr.bf16.mxu0 0
          %5465 = vmatpush2.bf16.msra.mxu0 0
          %5466 = vmatprep.subr.bf16.mxu0 0
          %5467 = vmatpush2.bf16.msra.mxu0 0
          %5468 = vmatprep.mubr.bf16.mxu0 0
          %5469 = vmatmul.mubr.bf16.gmra.mxu0 %v5434
          %v5470 = vpop.f32.mrf.mxu0
          %v5471 = vadd.f32 %v5419, %v5470
          %v5472 = vpop.f32.mrf.mxu0
          %v5473 = vpop.f32.mrf.mxu0
          %v5474 = vpop.f32.mrf.mxu0
          %5475 = vdwg.mxu0
          %vm5476 = vcmask 74752
          %5477 = vst.msk [vmem:[#allocation3] sm:$0x3] %vm5476, %v5471
        $region104: #{vit_forward.1} parent=95 // pred_fallthru
          _
        // Predicated region
        $region105: #{vit_forward.1} parent=95 // pred_check
          %p5478 = pneg %p503
        $region106: #{vit_forward.1} parent=95 // pred_check_branch
          %5480 = sbr.rel (%p5478) target = $region108
        $region107: #{vit_forward.1} parent=95 // pred_region
          %s5482 = ssub.s32 32, 32
          %5483 = vsyncadd [#allocation4], %s5482
          %s5485 = sshll.u32 [#allocation3], 4
          %s5486 = int_to_ptr.vmem [resolvable:$true] %s5485
          %5488 = dma.vmem_to_hbm [thread:$0]  %s5486, 32, %s19, [#allocation4]
        $region108: #{vit_forward.1} parent=95 // pred_fallthru
          _
        // Predicated region
        $region109: #{vit_forward.1} parent=95 // pred_check
          %p5489 = pneg %p503
        $region110: #{vit_forward.1} parent=95 // pred_check_branch
          %5491 = sbr.rel (%p5489) target = $region112
        $region111: #{vit_forward.1} parent=95 // pred_region
          %5492 = dma.done [#allocation4], 32
        $region112: #{vit_forward.1} parent=95 // pred_fallthru
          _
      $region96: #{vit_forward.1} parent=5 // pred_fallthru
        _
      %p5493 = scmp.le.s32.totalorder 2, %s26
      // Predicated region
      $region113: #{vit_forward.1} parent=5 // pred_check
        %p5494 = pneg %p5493
      $region114: #{vit_forward.1} parent=5 // pred_check_branch
        %5496 = sbr.rel (%p5494) target = $region116
      $region115: #{vit_forward.1} parent=5 // pred_region
        %s5497 = ssub.s32 %s26, 2
      $region116: #{vit_forward.1} parent=5 // pred_fallthru
        _
    $region6: #{vit_forward.1} parent=1 // loop_footer
      %s30 = sadd.s32 1, %s26
    $region7: #{vit_forward.1} parent=1 // loop_footer_branch
      %25 = sbr.rel target = $region3
    $region8: #{vit_forward.1} parent=1 // loop_exit
      _
    %5498 = vsyncpa [#allocation4], 1
    %s5499 = scalar_lea.sflag [#allocation4], 1
    %5500 = vsyncpa %s5499, 1

</llo_original>
